<compile_context>
chip_gen: v6e
topology: v6e:2x2x1
jax: 0.10.0
libtpu: 0.0.40
codegen_flags: <defaults>
</compile_context>

<pallas_src>
import jax
import jax.numpy as jnp
from jax.experimental import pallas as pl
from jax.experimental.pallas import tpu as pltpu

LANE = 128
SUBLANE = 8


def _round_up(x, m):
    return (x + m - 1) // m * m


# ----------------------------- fused encoder kernel --------------------------

def _make_encoder_kernel(num_layers, T, B_pad, Hp):
    G = 3 * Hp

    def kernel(*refs):
        x_ref = refs[0]                              # (T, B_pad, E)  bf16
        w_refs = refs[1:1 + 3 * num_layers]          # per layer: wi, wh, b
        out_ref = refs[1 + 3 * num_layers]           # (T, B_pad, Hp) f32
        state_ref = refs[2 + 3 * num_layers]         # (L, B_pad, Hp) f32
        xp_scr = refs[3 + 3 * num_layers]            # (T, B_pad, 3Hp) f32
        seq_scr = refs[4 + 3 * num_layers]           # (T, B_pad, Hp) bf16

        for l in range(num_layers):
            wi_ref, wh_ref, b_ref = w_refs[3 * l:3 * l + 3]
            src_ref = x_ref if l == 0 else seq_scr
            dst_ref = out_ref if l == num_layers - 1 else seq_scr

            # Hoisted input projection for the whole sequence of this layer:
            #   (T*B_pad, in) @ (in, 3Hp) + [bir+bhr | biz+bhz | bin]
            # Reshape only merges leading dims (B_pad is a sublane multiple),
            # so it is layout-free.
            in_dim = src_ref.shape[-1]
            xv = src_ref[...].reshape(T * B_pad, in_dim)
            xp = jnp.dot(xv, wi_ref[...], preferred_element_type=jnp.float32)
            xp = xp + b_ref[0:1, :]
            xp_scr[...] = xp.reshape(T, B_pad, G)

            # Broadcast bhn ONCE outside the unrolled time loop (it must stay
            # inside the r*(...) term, so it cannot be folded into b_x).
            bhn_b = jnp.broadcast_to(b_ref[1:2, 2 * Hp:3 * Hp], (B_pad, Hp))

            def step(t, h, _dst=dst_ref, _wh=wh_ref, _bhn=bhn_b):
                # (B_pad, Hp) @ (Hp, 3Hp) on the MXU: bf16 operands, f32 acc.
                hp = jnp.dot(h.astype(jnp.bfloat16), _wh[...],
                             preferred_element_type=jnp.float32)
                xpt = xp_scr[t]                      # whole-index slice, aligned
                # Gate slices land on 128-lane boundaries (Hp multiple of 128).
                r = jax.nn.sigmoid(xpt[:, 0 * Hp:1 * Hp] + hp[:, 0 * Hp:1 * Hp])
                z = jax.nn.sigmoid(xpt[:, 1 * Hp:2 * Hp] + hp[:, 1 * Hp:2 * Hp])
                n = jnp.tanh(xpt[:, 2 * Hp:3 * Hp]
                             + r * (hp[:, 2 * Hp:3 * Hp] + _bhn))
                h_new = n + z * (h - n)
                _dst[t] = h_new.astype(_dst.dtype)   # aligned full-vreg store
                return h_new

            h0 = jnp.zeros((B_pad, Hp), jnp.float32)
            hT = jax.lax.fori_loop(0, T, step, h0, unroll=min(T, 8))
            state_ref[l] = hT.astype(state_ref.dtype)

    return kernel


# --------------------------- Encoder forward (wrapper) ------------------------

def attention_encoder_forward(source, emb_table, layer_params, pad_id):
    """source: (B, T) int32 token ids."""
    B, T = source.shape
    E = emb_table.shape[1]
    H = layer_params[0]["whr"].shape[0]
    L = len(layer_params)

    B_pad = _round_up(B, SUBLANE)
    Hp = _round_up(H, LANE)
    G = 3 * Hp

    # valid_lens: reproduce reference semantics exactly — the inner loop
    # overwrites valid_len at *every* pad position, so the result is the LAST
    # index where pad occurs (or T if no pad). Stored as float32 (B, 1).
    is_pad = (source == pad_id)
    idx = jnp.arange(T, dtype=jnp.int32)
    last_pad = jnp.max(jnp.where(is_pad, idx, -1), axis=1)
    valid_lens = jnp.where(last_pad >= 0, last_pad, T).astype(jnp.float32)[:, None]

    # Embedding gathered directly in time-major order (no transpose pass over
    # the (B,T,E) activations), batch padded to a sublane multiple, bf16 cast.
    ids_tm = source.T.reshape(-1)                                # (T*B,)
    embed = jnp.take(emb_table, ids_tm, axis=0).reshape(T, B, E)
    x = jnp.zeros((T, B_pad, E), jnp.bfloat16)
    x = x.at[:, :B, :].set(embed.astype(jnp.bfloat16))

    # Fuse gate weights at lane-aligned offsets / fold biases (wrapper one-off).
    # Padded rows/cols are zero so padded hidden lanes stay exactly zero.
    fused_args = []
    for li, p in enumerate(layer_params):
        in_size = E if li == 0 else H
        in_pad = E if li == 0 else Hp
        wi = jnp.zeros((in_pad, G), jnp.float32)
        wh = jnp.zeros((Hp, G), jnp.float32)
        b = jnp.zeros((2, G), jnp.float32)
        gates = [(p["wir"], p["whr"], p["bir"] + p["bhr"], None),
                 (p["wiz"], p["whz"], p["biz"] + p["bhz"], None),
                 (p["win"], p["whn"], p["bin"], p["bhn"])]
        for g, (wig, whg, bxg, bhg) in enumerate(gates):
            wi = wi.at[:in_size, g * Hp:g * Hp + H].set(wig)
            wh = wh.at[:H, g * Hp:g * Hp + H].set(whg)
            b = b.at[0:1, g * Hp:g * Hp + H].set(bxg)
            if bhg is not None:
                b = b.at[1:2, g * Hp:g * Hp + H].set(bhg)
        fused_args.extend([wi.astype(jnp.bfloat16),
                           wh.astype(jnp.bfloat16),
                           b])

    kernel = _make_encoder_kernel(L, T, B_pad, Hp)
    vmem = pl.BlockSpec(memory_space=pltpu.MemorySpace.VMEM)

    # Everything is VMEM-resident (no grid) at these shapes; size the scoped
    # VMEM limit from the actual slabs with 2x headroom.
    def _nbytes(shape, dtype):
        n = 1
        for s in shape:
            n *= s
        return n * jnp.dtype(dtype).itemsize

    total = (_nbytes((T, B_pad, E), jnp.bfloat16)
             + sum(int(a.size) * a.dtype.itemsize for a in fused_args)
             + _nbytes((T, B_pad, Hp), jnp.float32)     # out
             + _nbytes((L, B_pad, Hp), jnp.float32)     # state
             + _nbytes((T, B_pad, G), jnp.float32)      # xp scratch
             + _nbytes((T, B_pad, Hp), jnp.bfloat16))   # seq scratch
    vmem_limit = int(min(110 * (1 << 20), max(4 * (1 << 20), 2 * total)))

    out_pad, state_pad = pl.pallas_call(
        kernel,
        out_shape=(jax.ShapeDtypeStruct((T, B_pad, Hp), jnp.float32),
                   jax.ShapeDtypeStruct((L, B_pad, Hp), jnp.float32)),
        in_specs=[vmem] * (1 + 3 * L),
        out_specs=(vmem, vmem),
        scratch_shapes=[pltpu.VMEM((T, B_pad, G), jnp.float32),
                        pltpu.VMEM((T, B_pad, Hp), jnp.bfloat16)],
        compiler_params=pltpu.CompilerParams(vmem_limit_bytes=vmem_limit),
    )(x, *fused_args)

    output = out_pad[:, :B, :H]
    state = state_pad[:, :B, :H]
    return output, state, valid_lens


# ------------------------------ pure-JAX reference ---------------------------

def _gru_layer_ref(x, p):
    T, B, _ = x.shape
    H = p["whr"].shape[0]

    def step(h, x_t):
        r = jax.nn.sigmoid(x_t @ p["wir"] + p["bir"] + h @ p["whr"] + p["bhr"])
        z = jax.nn.sigmoid(x_t @ p["wiz"] + p["biz"] + h @ p["whz"] + p["bhz"])
        n = jnp.tanh(x_t @ p["win"] + p["bin"] + r * (h @ p["whn"] + p["bhn"]))
        h_new = (1.0 - z) * n + z * h
        return h_new, h_new

    h0 = jnp.zeros((B, H), jnp.float32)
    hT, out = jax.lax.scan(step, h0, x)
    return out, hT


def _encoder_ref(source, emb_table, layer_params, pad_id):
    B, T = source.shape
    is_pad = (source == pad_id)
    idx = jnp.arange(T, dtype=jnp.int32)
    last_pad = jnp.max(jnp.where(is_pad, idx, -1), axis=1)
    valid_lens = jnp.where(last_pad >= 0, last_pad, T).astype(jnp.float32)[:, None]
    embed = jnp.transpose(jnp.take(emb_table, source, axis=0), (1, 0, 2))
    h = embed
    finals = []
    for p in layer_params:
        h, hT = _gru_layer_ref(h, p)
        finals.append(hT)
    return h, jnp.stack(finals, axis=0), valid_lens


# ----------------------------------- main ------------------------------------

if __name__ == "__main__":
    # Small config implied by the module's __init__.
    vocab_size, embed_size, hidden_size, num_layers = 20, 16, 32, 2
    batch_size, num_seq = 2, 8
    pad_id = 0

    key = jax.random.PRNGKey(0)
    keys = jax.random.split(key, 1 + 12 * num_layers + 1)

    emb_table = 0.1 * jax.random.normal(keys[0], (vocab_size, embed_size), jnp.float32)

    layer_params = []
    kidx = 1
    for layer in range(num_layers):
        in_size = embed_size if layer == 0 else hidden_size
        p = {}
        for name, shape in [("wir", (in_size, hidden_size)),
                            ("wiz", (in_size, hidden_size)),
                            ("win", (in_size, hidden_size)),
                            ("whr", (hidden_size, hidden_size)),
                            ("whz", (hidden_size, hidden_size)),
                            ("whn", (hidden_size, hidden_size)),
                            ("bir", (1, hidden_size)),
                            ("biz", (1, hidden_size)),
                            ("bin", (1, hidden_size)),
                            ("bhr", (1, hidden_size)),
                            ("bhz", (1, hidden_size)),
                            ("bhn", (1, hidden_size))]:
            p[name] = 0.1 * jax.random.normal(keys[kidx], shape, jnp.float32)
            kidx += 1
        layer_params.append(p)

    # Deterministic token ids, with some pad tokens to exercise valid_lens.
    source = jax.random.randint(keys[kidx], (batch_size, num_seq), 1, vocab_size,
                                dtype=jnp.int32)
    source = source.at[0, 5].set(pad_id)   # pad in the middle of sequence 0
    source = source.at[0, 2].set(pad_id)

    output, state, valid_lens = attention_encoder_forward(
        source, emb_table, layer_params, pad_id)
    jax.block_until_ready((output, state, valid_lens))

    assert output.shape == (num_seq, batch_size, hidden_size)
    assert state.shape == (num_layers, batch_size, hidden_size)
    assert valid_lens.shape == (batch_size, 1)

    # Verify against a pure-f32 JAX reference (tolerance loosened for the bf16
    # MXU operands; accumulation and gate math stay f32).
    out_ref, state_ref, vl_ref = _encoder_ref(source, emb_table, layer_params, pad_id)
    assert jnp.allclose(output, out_ref, atol=2e-2, rtol=2e-2)
    assert jnp.allclose(state, state_ref, atol=2e-2, rtol=2e-2)
    assert jnp.allclose(valid_lens, vl_ref)

    print("KERNEL_OK")
</pallas_src>

<mosaic_0001>
module attributes {stable_mosaic.version = 11 : i64} {
  func.func @kernel(%arg0: memref<8x8x16xbf16, #tpu.memory_space<vmem>>, %arg1: memref<16x384xbf16, #tpu.memory_space<vmem>>, %arg2: memref<128x384xbf16, #tpu.memory_space<vmem>>, %arg3: memref<2x384xf32, #tpu.memory_space<vmem>>, %arg4: memref<128x384xbf16, #tpu.memory_space<vmem>>, %arg5: memref<128x384xbf16, #tpu.memory_space<vmem>>, %arg6: memref<2x384xf32, #tpu.memory_space<vmem>>, %arg7: memref<8x8x128xf32, #tpu.memory_space<vmem>>, %arg8: memref<2x8x128xf32, #tpu.memory_space<vmem>>, %arg9: memref<8x8x384xf32, #tpu.memory_space<vmem>>, %arg10: memref<8x8x128xbf16, #tpu.memory_space<vmem>>) attributes {dimension_semantics = [], scalar_prefetch = 0 : i64, scratch_operands = 2 : i64, tpu.core_type = #tpu.core_type<tc>} {
    %c0 = arith.constant 0 : index
    %c0_0 = arith.constant 0 : index
    %c0_1 = arith.constant 0 : index
    %0 = vector.load %arg0[%c0, %c0_0, %c0_1] : memref<8x8x16xbf16, #tpu.memory_space<vmem>>, vector<8x8x16xbf16>
    %1 = vector.shape_cast %0 : vector<8x8x16xbf16> to vector<64x16xbf16>
    %c0_2 = arith.constant 0 : index
    %c0_3 = arith.constant 0 : index
    %2 = vector.load %arg1[%c0_2, %c0_3] : memref<16x384xbf16, #tpu.memory_space<vmem>>, vector<16x384xbf16>
    %cst = arith.constant dense<0.000000e+00> : vector<64x384xf32>
    %3 = tpu.matmul %1, %2, %cst {dimension_numbers = #tpu.dot_dimension_numbers<[1], [0], [0], [1], [0, 0, 1, 1], [], []>} : vector<64x16xbf16>, vector<16x384xbf16>, vector<64x384xf32> -> vector<64x384xf32>
    %c0_4 = arith.constant 0 : index
    %c0_5 = arith.constant 0 : index
    %4 = vector.load %arg3[%c0_4, %c0_5] : memref<2x384xf32, #tpu.memory_space<vmem>>, vector<1x384xf32>
    %5 = vector.broadcast %4 : vector<1x384xf32> to vector<64x384xf32>
    %6 = arith.addf %3, %5 : vector<64x384xf32>
    %7 = vector.shape_cast %6 : vector<64x384xf32> to vector<8x8x384xf32>
    %c0_6 = arith.constant 0 : index
    %c0_7 = arith.constant 0 : index
    %c0_8 = arith.constant 0 : index
    %8 = vector.load %arg9[%c0_6, %c0_7, %c0_8] : memref<8x8x384xf32, #tpu.memory_space<vmem>>, vector<8x8x384xf32>
    tpu.vector_store %arg9[%c0_6, %c0_7, %c0_8], %7 {strides = array<i32>} : memref<8x8x384xf32, #tpu.memory_space<vmem>>, vector<8x8x384xf32>,
    %c1 = arith.constant 1 : index
    %c256 = arith.constant 256 : index
    %9 = vector.load %arg3[%c1, %c256] : memref<2x384xf32, #tpu.memory_space<vmem>>, vector<1x128xf32>
    %10 = vector.shape_cast %9 : vector<1x128xf32> to vector<1x128xf32>
    %11 = vector.broadcast %10 : vector<1x128xf32> to vector<8x128xf32>
    %cst_9 = arith.constant 0.000000e+00 : f32
    %12 = vector.broadcast %cst_9 : f32 to vector<8x128xf32>
    %c0_i32 = arith.constant 0 : i32
    %13 = arith.truncf %12 : vector<8x128xf32> to vector<8x128xbf16>
    %c0_10 = arith.constant 0 : index
    %c0_11 = arith.constant 0 : index
    %14 = vector.load %arg2[%c0_10, %c0_11] : memref<128x384xbf16, #tpu.memory_space<vmem>>, vector<128x384xbf16>
    %cst_12 = arith.constant dense<0.000000e+00> : vector<8x384xf32>
    %15 = tpu.matmul %13, %14, %cst_12 {dimension_numbers = #tpu.dot_dimension_numbers<[1], [0], [0], [1], [0, 0, 1, 1], [], []>} : vector<8x128xbf16>, vector<128x384xbf16>, vector<8x384xf32> -> vector<8x384xf32>
    %16 = arith.index_cast %c0_i32 : i32 to index
    %c0_13 = arith.constant 0 : index
    %c0_14 = arith.constant 0 : index
    %17 = vector.load %arg9[%16, %c0_13, %c0_14] : memref<8x8x384xf32, #tpu.memory_space<vmem>>, vector<1x8x384xf32>
    %18 = vector.shape_cast %17 : vector<1x8x384xf32> to vector<8x384xf32>
    %19 = vector.extract_strided_slice %18 {offsets = [0, 0], sizes = [8, 128], strides = [1, 1]} : vector<8x384xf32> to vector<8x128xf32>
    %20 = vector.extract_strided_slice %15 {offsets = [0, 0], sizes = [8, 128], strides = [1, 1]} : vector<8x384xf32> to vector<8x128xf32>
    %21 = arith.addf %19, %20 : vector<8x128xf32>
    %22 = arith.negf %21 : vector<8x128xf32>
    %23 = math.exp %22 : vector<8x128xf32>
    %cst_15 = arith.constant 1.000000e+00 : f32
    %24 = vector.broadcast %cst_15 : f32 to vector<8x128xf32>
    %25 = arith.addf %24, %23 : vector<8x128xf32>
    %26 = arith.divf %24, %25 : vector<8x128xf32>
    %27 = vector.extract_strided_slice %18 {offsets = [0, 128], sizes = [8, 128], strides = [1, 1]} : vector<8x384xf32> to vector<8x128xf32>
    %28 = vector.extract_strided_slice %15 {offsets = [0, 128], sizes = [8, 128], strides = [1, 1]} : vector<8x384xf32> to vector<8x128xf32>
    %29 = arith.addf %27, %28 : vector<8x128xf32>
    %30 = arith.negf %29 : vector<8x128xf32>
    %31 = math.exp %30 : vector<8x128xf32>
    %cst_16 = arith.constant 1.000000e+00 : f32
    %32 = vector.broadcast %cst_16 : f32 to vector<8x128xf32>
    %33 = arith.addf %32, %31 : vector<8x128xf32>
    %34 = arith.divf %32, %33 : vector<8x128xf32>
    %35 = vector.extract_strided_slice %18 {offsets = [0, 256], sizes = [8, 128], strides = [1, 1]} : vector<8x384xf32> to vector<8x128xf32>
    %36 = vector.extract_strided_slice %15 {offsets = [0, 256], sizes = [8, 128], strides = [1, 1]} : vector<8x384xf32> to vector<8x128xf32>
    %37 = arith.addf %36, %11 : vector<8x128xf32>
    %38 = arith.mulf %26, %37 : vector<8x128xf32>
    %39 = arith.addf %35, %38 : vector<8x128xf32>
    %40 = math.tanh %39 : vector<8x128xf32>
    %41 = arith.subf %12, %40 : vector<8x128xf32>
    %42 = arith.mulf %34, %41 : vector<8x128xf32>
    %43 = arith.addf %40, %42 : vector<8x128xf32>
    %44 = arith.truncf %43 : vector<8x128xf32> to vector<8x128xbf16>
    %45 = arith.index_cast %c0_i32 : i32 to index
    %c0_17 = arith.constant 0 : index
    %c0_18 = arith.constant 0 : index
    %46 = vector.load %arg10[%45, %c0_17, %c0_18] : memref<8x8x128xbf16, #tpu.memory_space<vmem>>, vector<1x8x128xbf16>
    %47 = vector.shape_cast %46 : vector<1x8x128xbf16> to vector<8x128xbf16>
    %48 = vector.shape_cast %44 : vector<8x128xbf16> to vector<1x8x128xbf16>
    tpu.vector_store %arg10[%45, %c0_17, %c0_18], %48 {strides = array<i32>} : memref<8x8x128xbf16, #tpu.memory_space<vmem>>, vector<1x8x128xbf16>,
    %c1_i32 = arith.constant 1 : i32
    %49 = arith.truncf %43 : vector<8x128xf32> to vector<8x128xbf16>
    %c0_19 = arith.constant 0 : index
    %c0_20 = arith.constant 0 : index
    %50 = vector.load %arg2[%c0_19, %c0_20] : memref<128x384xbf16, #tpu.memory_space<vmem>>, vector<128x384xbf16>
    %cst_21 = arith.constant dense<0.000000e+00> : vector<8x384xf32>
    %51 = tpu.matmul %49, %50, %cst_21 {dimension_numbers = #tpu.dot_dimension_numbers<[1], [0], [0], [1], [0, 0, 1, 1], [], []>} : vector<8x128xbf16>, vector<128x384xbf16>, vector<8x384xf32> -> vector<8x384xf32>
    %52 = arith.index_cast %c1_i32 : i32 to index
    %c0_22 = arith.constant 0 : index
    %c0_23 = arith.constant 0 : index
    %53 = vector.load %arg9[%52, %c0_22, %c0_23] : memref<8x8x384xf32, #tpu.memory_space<vmem>>, vector<1x8x384xf32>
    %54 = vector.shape_cast %53 : vector<1x8x384xf32> to vector<8x384xf32>
    %55 = vector.extract_strided_slice %54 {offsets = [0, 0], sizes = [8, 128], strides = [1, 1]} : vector<8x384xf32> to vector<8x128xf32>
    %56 = vector.extract_strided_slice %51 {offsets = [0, 0], sizes = [8, 128], strides = [1, 1]} : vector<8x384xf32> to vector<8x128xf32>
    %57 = arith.addf %55, %56 : vector<8x128xf32>
    %58 = arith.negf %57 : vector<8x128xf32>
    %59 = math.exp %58 : vector<8x128xf32>
    %cst_24 = arith.constant 1.000000e+00 : f32
    %60 = vector.broadcast %cst_24 : f32 to vector<8x128xf32>
    %61 = arith.addf %60, %59 : vector<8x128xf32>
    %62 = arith.divf %60, %61 : vector<8x128xf32>
    %63 = vector.extract_strided_slice %54 {offsets = [0, 128], sizes = [8, 128], strides = [1, 1]} : vector<8x384xf32> to vector<8x128xf32>
    %64 = vector.extract_strided_slice %51 {offsets = [0, 128], sizes = [8, 128], strides = [1, 1]} : vector<8x384xf32> to vector<8x128xf32>
    %65 = arith.addf %63, %64 : vector<8x128xf32>
    %66 = arith.negf %65 : vector<8x128xf32>
    %67 = math.exp %66 : vector<8x128xf32>
    %cst_25 = arith.constant 1.000000e+00 : f32
    %68 = vector.broadcast %cst_25 : f32 to vector<8x128xf32>
    %69 = arith.addf %68, %67 : vector<8x128xf32>
    %70 = arith.divf %68, %69 : vector<8x128xf32>
    %71 = vector.extract_strided_slice %54 {offsets = [0, 256], sizes = [8, 128], strides = [1, 1]} : vector<8x384xf32> to vector<8x128xf32>
    %72 = vector.extract_strided_slice %51 {offsets = [0, 256], sizes = [8, 128], strides = [1, 1]} : vector<8x384xf32> to vector<8x128xf32>
    %73 = arith.addf %72, %11 : vector<8x128xf32>
    %74 = arith.mulf %62, %73 : vector<8x128xf32>
    %75 = arith.addf %71, %74 : vector<8x128xf32>
    %76 = math.tanh %75 : vector<8x128xf32>
    %77 = arith.subf %43, %76 : vector<8x128xf32>
    %78 = arith.mulf %70, %77 : vector<8x128xf32>
    %79 = arith.addf %76, %78 : vector<8x128xf32>
    %80 = arith.truncf %79 : vector<8x128xf32> to vector<8x128xbf16>
    %81 = arith.index_cast %c1_i32 : i32 to index
    %c0_26 = arith.constant 0 : index
    %c0_27 = arith.constant 0 : index
    %82 = vector.load %arg10[%81, %c0_26, %c0_27] : memref<8x8x128xbf16, #tpu.memory_space<vmem>>, vector<1x8x128xbf16>
    %83 = vector.shape_cast %82 : vector<1x8x128xbf16> to vector<8x128xbf16>
    %84 = vector.shape_cast %80 : vector<8x128xbf16> to vector<1x8x128xbf16>
    tpu.vector_store %arg10[%81, %c0_26, %c0_27], %84 {strides = array<i32>} : memref<8x8x128xbf16, #tpu.memory_space<vmem>>, vector<1x8x128xbf16>,
    %c2_i32 = arith.constant 2 : i32
    %85 = arith.truncf %79 : vector<8x128xf32> to vector<8x128xbf16>
    %c0_28 = arith.constant 0 : index
    %c0_29 = arith.constant 0 : index
    %86 = vector.load %arg2[%c0_28, %c0_29] : memref<128x384xbf16, #tpu.memory_space<vmem>>, vector<128x384xbf16>
    %cst_30 = arith.constant dense<0.000000e+00> : vector<8x384xf32>
    %87 = tpu.matmul %85, %86, %cst_30 {dimension_numbers = #tpu.dot_dimension_numbers<[1], [0], [0], [1], [0, 0, 1, 1], [], []>} : vector<8x128xbf16>, vector<128x384xbf16>, vector<8x384xf32> -> vector<8x384xf32>
    %88 = arith.index_cast %c2_i32 : i32 to index
    %c0_31 = arith.constant 0 : index
    %c0_32 = arith.constant 0 : index
    %89 = vector.load %arg9[%88, %c0_31, %c0_32] : memref<8x8x384xf32, #tpu.memory_space<vmem>>, vector<1x8x384xf32>
    %90 = vector.shape_cast %89 : vector<1x8x384xf32> to vector<8x384xf32>
    %91 = vector.extract_strided_slice %90 {offsets = [0, 0], sizes = [8, 128], strides = [1, 1]} : vector<8x384xf32> to vector<8x128xf32>
    %92 = vector.extract_strided_slice %87 {offsets = [0, 0], sizes = [8, 128], strides = [1, 1]} : vector<8x384xf32> to vector<8x128xf32>
    %93 = arith.addf %91, %92 : vector<8x128xf32>
    %94 = arith.negf %93 : vector<8x128xf32>
    %95 = math.exp %94 : vector<8x128xf32>
    %cst_33 = arith.constant 1.000000e+00 : f32
    %96 = vector.broadcast %cst_33 : f32 to vector<8x128xf32>
    %97 = arith.addf %96, %95 : vector<8x128xf32>
    %98 = arith.divf %96, %97 : vector<8x128xf32>
    %99 = vector.extract_strided_slice %90 {offsets = [0, 128], sizes = [8, 128], strides = [1, 1]} : vector<8x384xf32> to vector<8x128xf32>
    %100 = vector.extract_strided_slice %87 {offsets = [0, 128], sizes = [8, 128], strides = [1, 1]} : vector<8x384xf32> to vector<8x128xf32>
    %101 = arith.addf %99, %100 : vector<8x128xf32>
    %102 = arith.negf %101 : vector<8x128xf32>
    %103 = math.exp %102 : vector<8x128xf32>
    %cst_34 = arith.constant 1.000000e+00 : f32
    %104 = vector.broadcast %cst_34 : f32 to vector<8x128xf32>
    %105 = arith.addf %104, %103 : vector<8x128xf32>
    %106 = arith.divf %104, %105 : vector<8x128xf32>
    %107 = vector.extract_strided_slice %90 {offsets = [0, 256], sizes = [8, 128], strides = [1, 1]} : vector<8x384xf32> to vector<8x128xf32>
    %108 = vector.extract_strided_slice %87 {offsets = [0, 256], sizes = [8, 128], strides = [1, 1]} : vector<8x384xf32> to vector<8x128xf32>
    %109 = arith.addf %108, %11 : vector<8x128xf32>
    %110 = arith.mulf %98, %109 : vector<8x128xf32>
    %111 = arith.addf %107, %110 : vector<8x128xf32>
    %112 = math.tanh %111 : vector<8x128xf32>
    %113 = arith.subf %79, %112 : vector<8x128xf32>
    %114 = arith.mulf %106, %113 : vector<8x128xf32>
    %115 = arith.addf %112, %114 : vector<8x128xf32>
    %116 = arith.truncf %115 : vector<8x128xf32> to vector<8x128xbf16>
    %117 = arith.index_cast %c2_i32 : i32 to index
    %c0_35 = arith.constant 0 : index
    %c0_36 = arith.constant 0 : index
    %118 = vector.load %arg10[%117, %c0_35, %c0_36] : memref<8x8x128xbf16, #tpu.memory_space<vmem>>, vector<1x8x128xbf16>
    %119 = vector.shape_cast %118 : vector<1x8x128xbf16> to vector<8x128xbf16>
    %120 = vector.shape_cast %116 : vector<8x128xbf16> to vector<1x8x128xbf16>
    tpu.vector_store %arg10[%117, %c0_35, %c0_36], %120 {strides = array<i32>} : memref<8x8x128xbf16, #tpu.memory_space<vmem>>, vector<1x8x128xbf16>,
    %c3_i32 = arith.constant 3 : i32
    %121 = arith.truncf %115 : vector<8x128xf32> to vector<8x128xbf16>
    %c0_37 = arith.constant 0 : index
    %c0_38 = arith.constant 0 : index
    %122 = vector.load %arg2[%c0_37, %c0_38] : memref<128x384xbf16, #tpu.memory_space<vmem>>, vector<128x384xbf16>
    %cst_39 = arith.constant dense<0.000000e+00> : vector<8x384xf32>
    %123 = tpu.matmul %121, %122, %cst_39 {dimension_numbers = #tpu.dot_dimension_numbers<[1], [0], [0], [1], [0, 0, 1, 1], [], []>} : vector<8x128xbf16>, vector<128x384xbf16>, vector<8x384xf32> -> vector<8x384xf32>
    %124 = arith.index_cast %c3_i32 : i32 to index
    %c0_40 = arith.constant 0 : index
    %c0_41 = arith.constant 0 : index
    %125 = vector.load %arg9[%124, %c0_40, %c0_41] : memref<8x8x384xf32, #tpu.memory_space<vmem>>, vector<1x8x384xf32>
    %126 = vector.shape_cast %125 : vector<1x8x384xf32> to vector<8x384xf32>
    %127 = vector.extract_strided_slice %126 {offsets = [0, 0], sizes = [8, 128], strides = [1, 1]} : vector<8x384xf32> to vector<8x128xf32>
    %128 = vector.extract_strided_slice %123 {offsets = [0, 0], sizes = [8, 128], strides = [1, 1]} : vector<8x384xf32> to vector<8x128xf32>
    %129 = arith.addf %127, %128 : vector<8x128xf32>
    %130 = arith.negf %129 : vector<8x128xf32>
    %131 = math.exp %130 : vector<8x128xf32>
    %cst_42 = arith.constant 1.000000e+00 : f32
    %132 = vector.broadcast %cst_42 : f32 to vector<8x128xf32>
    %133 = arith.addf %132, %131 : vector<8x128xf32>
    %134 = arith.divf %132, %133 : vector<8x128xf32>
    %135 = vector.extract_strided_slice %126 {offsets = [0, 128], sizes = [8, 128], strides = [1, 1]} : vector<8x384xf32> to vector<8x128xf32>
    %136 = vector.extract_strided_slice %123 {offsets = [0, 128], sizes = [8, 128], strides = [1, 1]} : vector<8x384xf32> to vector<8x128xf32>
    %137 = arith.addf %135, %136 : vector<8x128xf32>
    %138 = arith.negf %137 : vector<8x128xf32>
    %139 = math.exp %138 : vector<8x128xf32>
    %cst_43 = arith.constant 1.000000e+00 : f32
    %140 = vector.broadcast %cst_43 : f32 to vector<8x128xf32>
    %141 = arith.addf %140, %139 : vector<8x128xf32>
    %142 = arith.divf %140, %141 : vector<8x128xf32>
    %143 = vector.extract_strided_slice %126 {offsets = [0, 256], sizes = [8, 128], strides = [1, 1]} : vector<8x384xf32> to vector<8x128xf32>
    %144 = vector.extract_strided_slice %123 {offsets = [0, 256], sizes = [8, 128], strides = [1, 1]} : vector<8x384xf32> to vector<8x128xf32>
    %145 = arith.addf %144, %11 : vector<8x128xf32>
    %146 = arith.mulf %134, %145 : vector<8x128xf32>
    %147 = arith.addf %143, %146 : vector<8x128xf32>
    %148 = math.tanh %147 : vector<8x128xf32>
    %149 = arith.subf %115, %148 : vector<8x128xf32>
    %150 = arith.mulf %142, %149 : vector<8x128xf32>
    %151 = arith.addf %148, %150 : vector<8x128xf32>
    %152 = arith.truncf %151 : vector<8x128xf32> to vector<8x128xbf16>
    %153 = arith.index_cast %c3_i32 : i32 to index
    %c0_44 = arith.constant 0 : index
    %c0_45 = arith.constant 0 : index
    %154 = vector.load %arg10[%153, %c0_44, %c0_45] : memref<8x8x128xbf16, #tpu.memory_space<vmem>>, vector<1x8x128xbf16>
    %155 = vector.shape_cast %154 : vector<1x8x128xbf16> to vector<8x128xbf16>
    %156 = vector.shape_cast %152 : vector<8x128xbf16> to vector<1x8x128xbf16>
    tpu.vector_store %arg10[%153, %c0_44, %c0_45], %156 {strides = array<i32>} : memref<8x8x128xbf16, #tpu.memory_space<vmem>>, vector<1x8x128xbf16>,
    %c4_i32 = arith.constant 4 : i32
    %157 = arith.truncf %151 : vector<8x128xf32> to vector<8x128xbf16>
    %c0_46 = arith.constant 0 : index
    %c0_47 = arith.constant 0 : index
    %158 = vector.load %arg2[%c0_46, %c0_47] : memref<128x384xbf16, #tpu.memory_space<vmem>>, vector<128x384xbf16>
    %cst_48 = arith.constant dense<0.000000e+00> : vector<8x384xf32>
    %159 = tpu.matmul %157, %158, %cst_48 {dimension_numbers = #tpu.dot_dimension_numbers<[1], [0], [0], [1], [0, 0, 1, 1], [], []>} : vector<8x128xbf16>, vector<128x384xbf16>, vector<8x384xf32> -> vector<8x384xf32>
    %160 = arith.index_cast %c4_i32 : i32 to index
    %c0_49 = arith.constant 0 : index
    %c0_50 = arith.constant 0 : index
    %161 = vector.load %arg9[%160, %c0_49, %c0_50] : memref<8x8x384xf32, #tpu.memory_space<vmem>>, vector<1x8x384xf32>
    %162 = vector.shape_cast %161 : vector<1x8x384xf32> to vector<8x384xf32>
    %163 = vector.extract_strided_slice %162 {offsets = [0, 0], sizes = [8, 128], strides = [1, 1]} : vector<8x384xf32> to vector<8x128xf32>
    %164 = vector.extract_strided_slice %159 {offsets = [0, 0], sizes = [8, 128], strides = [1, 1]} : vector<8x384xf32> to vector<8x128xf32>
    %165 = arith.addf %163, %164 : vector<8x128xf32>
    %166 = arith.negf %165 : vector<8x128xf32>
    %167 = math.exp %166 : vector<8x128xf32>
    %cst_51 = arith.constant 1.000000e+00 : f32
    %168 = vector.broadcast %cst_51 : f32 to vector<8x128xf32>
    %169 = arith.addf %168, %167 : vector<8x128xf32>
    %170 = arith.divf %168, %169 : vector<8x128xf32>
    %171 = vector.extract_strided_slice %162 {offsets = [0, 128], sizes = [8, 128], strides = [1, 1]} : vector<8x384xf32> to vector<8x128xf32>
    %172 = vector.extract_strided_slice %159 {offsets = [0, 128], sizes = [8, 128], strides = [1, 1]} : vector<8x384xf32> to vector<8x128xf32>
    %173 = arith.addf %171, %172 : vector<8x128xf32>
    %174 = arith.negf %173 : vector<8x128xf32>
    %175 = math.exp %174 : vector<8x128xf32>
    %cst_52 = arith.constant 1.000000e+00 : f32
    %176 = vector.broadcast %cst_52 : f32 to vector<8x128xf32>
    %177 = arith.addf %176, %175 : vector<8x128xf32>
    %178 = arith.divf %176, %177 : vector<8x128xf32>
    %179 = vector.extract_strided_slice %162 {offsets = [0, 256], sizes = [8, 128], strides = [1, 1]} : vector<8x384xf32> to vector<8x128xf32>
    %180 = vector.extract_strided_slice %159 {offsets = [0, 256], sizes = [8, 128], strides = [1, 1]} : vector<8x384xf32> to vector<8x128xf32>
    %181 = arith.addf %180, %11 : vector<8x128xf32>
    %182 = arith.mulf %170, %181 : vector<8x128xf32>
    %183 = arith.addf %179, %182 : vector<8x128xf32>
    %184 = math.tanh %183 : vector<8x128xf32>
    %185 = arith.subf %151, %184 : vector<8x128xf32>
    %186 = arith.mulf %178, %185 : vector<8x128xf32>
    %187 = arith.addf %184, %186 : vector<8x128xf32>
    %188 = arith.truncf %187 : vector<8x128xf32> to vector<8x128xbf16>
    %189 = arith.index_cast %c4_i32 : i32 to index
    %c0_53 = arith.constant 0 : index
    %c0_54 = arith.constant 0 : index
    %190 = vector.load %arg10[%189, %c0_53, %c0_54] : memref<8x8x128xbf16, #tpu.memory_space<vmem>>, vector<1x8x128xbf16>
    %191 = vector.shape_cast %190 : vector<1x8x128xbf16> to vector<8x128xbf16>
    %192 = vector.shape_cast %188 : vector<8x128xbf16> to vector<1x8x128xbf16>
    tpu.vector_store %arg10[%189, %c0_53, %c0_54], %192 {strides = array<i32>} : memref<8x8x128xbf16, #tpu.memory_space<vmem>>, vector<1x8x128xbf16>,
    %c5_i32 = arith.constant 5 : i32
    %193 = arith.truncf %187 : vector<8x128xf32> to vector<8x128xbf16>
    %c0_55 = arith.constant 0 : index
    %c0_56 = arith.constant 0 : index
    %194 = vector.load %arg2[%c0_55, %c0_56] : memref<128x384xbf16, #tpu.memory_space<vmem>>, vector<128x384xbf16>
    %cst_57 = arith.constant dense<0.000000e+00> : vector<8x384xf32>
    %195 = tpu.matmul %193, %194, %cst_57 {dimension_numbers = #tpu.dot_dimension_numbers<[1], [0], [0], [1], [0, 0, 1, 1], [], []>} : vector<8x128xbf16>, vector<128x384xbf16>, vector<8x384xf32> -> vector<8x384xf32>
    %196 = arith.index_cast %c5_i32 : i32 to index
    %c0_58 = arith.constant 0 : index
    %c0_59 = arith.constant 0 : index
    %197 = vector.load %arg9[%196, %c0_58, %c0_59] : memref<8x8x384xf32, #tpu.memory_space<vmem>>, vector<1x8x384xf32>
    %198 = vector.shape_cast %197 : vector<1x8x384xf32> to vector<8x384xf32>
    %199 = vector.extract_strided_slice %198 {offsets = [0, 0], sizes = [8, 128], strides = [1, 1]} : vector<8x384xf32> to vector<8x128xf32>
    %200 = vector.extract_strided_slice %195 {offsets = [0, 0], sizes = [8, 128], strides = [1, 1]} : vector<8x384xf32> to vector<8x128xf32>
    %201 = arith.addf %199, %200 : vector<8x128xf32>
    %202 = arith.negf %201 : vector<8x128xf32>
    %203 = math.exp %202 : vector<8x128xf32>
    %cst_60 = arith.constant 1.000000e+00 : f32
    %204 = vector.broadcast %cst_60 : f32 to vector<8x128xf32>
    %205 = arith.addf %204, %203 : vector<8x128xf32>
    %206 = arith.divf %204, %205 : vector<8x128xf32>
    %207 = vector.extract_strided_slice %198 {offsets = [0, 128], sizes = [8, 128], strides = [1, 1]} : vector<8x384xf32> to vector<8x128xf32>
    %208 = vector.extract_strided_slice %195 {offsets = [0, 128], sizes = [8, 128], strides = [1, 1]} : vector<8x384xf32> to vector<8x128xf32>
    %209 = arith.addf %207, %208 : vector<8x128xf32>
    %210 = arith.negf %209 : vector<8x128xf32>
    %211 = math.exp %210 : vector<8x128xf32>
    %cst_61 = arith.constant 1.000000e+00 : f32
    %212 = vector.broadcast %cst_61 : f32 to vector<8x128xf32>
    %213 = arith.addf %212, %211 : vector<8x128xf32>
    %214 = arith.divf %212, %213 : vector<8x128xf32>
    %215 = vector.extract_strided_slice %198 {offsets = [0, 256], sizes = [8, 128], strides = [1, 1]} : vector<8x384xf32> to vector<8x128xf32>
    %216 = vector.extract_strided_slice %195 {offsets = [0, 256], sizes = [8, 128], strides = [1, 1]} : vector<8x384xf32> to vector<8x128xf32>
    %217 = arith.addf %216, %11 : vector<8x128xf32>
    %218 = arith.mulf %206, %217 : vector<8x128xf32>
    %219 = arith.addf %215, %218 : vector<8x128xf32>
    %220 = math.tanh %219 : vector<8x128xf32>
    %221 = arith.subf %187, %220 : vector<8x128xf32>
    %222 = arith.mulf %214, %221 : vector<8x128xf32>
    %223 = arith.addf %220, %222 : vector<8x128xf32>
    %224 = arith.truncf %223 : vector<8x128xf32> to vector<8x128xbf16>
    %225 = arith.index_cast %c5_i32 : i32 to index
    %c0_62 = arith.constant 0 : index
    %c0_63 = arith.constant 0 : index
    %226 = vector.load %arg10[%225, %c0_62, %c0_63] : memref<8x8x128xbf16, #tpu.memory_space<vmem>>, vector<1x8x128xbf16>
    %227 = vector.shape_cast %226 : vector<1x8x128xbf16> to vector<8x128xbf16>
    %228 = vector.shape_cast %224 : vector<8x128xbf16> to vector<1x8x128xbf16>
    tpu.vector_store %arg10[%225, %c0_62, %c0_63], %228 {strides = array<i32>} : memref<8x8x128xbf16, #tpu.memory_space<vmem>>, vector<1x8x128xbf16>,
    %c6_i32 = arith.constant 6 : i32
    %229 = arith.truncf %223 : vector<8x128xf32> to vector<8x128xbf16>
    %c0_64 = arith.constant 0 : index
    %c0_65 = arith.constant 0 : index
    %230 = vector.load %arg2[%c0_64, %c0_65] : memref<128x384xbf16, #tpu.memory_space<vmem>>, vector<128x384xbf16>
    %cst_66 = arith.constant dense<0.000000e+00> : vector<8x384xf32>
    %231 = tpu.matmul %229, %230, %cst_66 {dimension_numbers = #tpu.dot_dimension_numbers<[1], [0], [0], [1], [0, 0, 1, 1], [], []>} : vector<8x128xbf16>, vector<128x384xbf16>, vector<8x384xf32> -> vector<8x384xf32>
    %232 = arith.index_cast %c6_i32 : i32 to index
    %c0_67 = arith.constant 0 : index
    %c0_68 = arith.constant 0 : index
    %233 = vector.load %arg9[%232, %c0_67, %c0_68] : memref<8x8x384xf32, #tpu.memory_space<vmem>>, vector<1x8x384xf32>
    %234 = vector.shape_cast %233 : vector<1x8x384xf32> to vector<8x384xf32>
    %235 = vector.extract_strided_slice %234 {offsets = [0, 0], sizes = [8, 128], strides = [1, 1]} : vector<8x384xf32> to vector<8x128xf32>
    %236 = vector.extract_strided_slice %231 {offsets = [0, 0], sizes = [8, 128], strides = [1, 1]} : vector<8x384xf32> to vector<8x128xf32>
    %237 = arith.addf %235, %236 : vector<8x128xf32>
    %238 = arith.negf %237 : vector<8x128xf32>
    %239 = math.exp %238 : vector<8x128xf32>
    %cst_69 = arith.constant 1.000000e+00 : f32
    %240 = vector.broadcast %cst_69 : f32 to vector<8x128xf32>
    %241 = arith.addf %240, %239 : vector<8x128xf32>
    %242 = arith.divf %240, %241 : vector<8x128xf32>
    %243 = vector.extract_strided_slice %234 {offsets = [0, 128], sizes = [8, 128], strides = [1, 1]} : vector<8x384xf32> to vector<8x128xf32>
    %244 = vector.extract_strided_slice %231 {offsets = [0, 128], sizes = [8, 128], strides = [1, 1]} : vector<8x384xf32> to vector<8x128xf32>
    %245 = arith.addf %243, %244 : vector<8x128xf32>
    %246 = arith.negf %245 : vector<8x128xf32>
    %247 = math.exp %246 : vector<8x128xf32>
    %cst_70 = arith.constant 1.000000e+00 : f32
    %248 = vector.broadcast %cst_70 : f32 to vector<8x128xf32>
    %249 = arith.addf %248, %247 : vector<8x128xf32>
    %250 = arith.divf %248, %249 : vector<8x128xf32>
    %251 = vector.extract_strided_slice %234 {offsets = [0, 256], sizes = [8, 128], strides = [1, 1]} : vector<8x384xf32> to vector<8x128xf32>
    %252 = vector.extract_strided_slice %231 {offsets = [0, 256], sizes = [8, 128], strides = [1, 1]} : vector<8x384xf32> to vector<8x128xf32>
    %253 = arith.addf %252, %11 : vector<8x128xf32>
    %254 = arith.mulf %242, %253 : vector<8x128xf32>
    %255 = arith.addf %251, %254 : vector<8x128xf32>
    %256 = math.tanh %255 : vector<8x128xf32>
    %257 = arith.subf %223, %256 : vector<8x128xf32>
    %258 = arith.mulf %250, %257 : vector<8x128xf32>
    %259 = arith.addf %256, %258 : vector<8x128xf32>
    %260 = arith.truncf %259 : vector<8x128xf32> to vector<8x128xbf16>
    %261 = arith.index_cast %c6_i32 : i32 to index
    %c0_71 = arith.constant 0 : index
    %c0_72 = arith.constant 0 : index
    %262 = vector.load %arg10[%261, %c0_71, %c0_72] : memref<8x8x128xbf16, #tpu.memory_space<vmem>>, vector<1x8x128xbf16>
    %263 = vector.shape_cast %262 : vector<1x8x128xbf16> to vector<8x128xbf16>
    %264 = vector.shape_cast %260 : vector<8x128xbf16> to vector<1x8x128xbf16>
    tpu.vector_store %arg10[%261, %c0_71, %c0_72], %264 {strides = array<i32>} : memref<8x8x128xbf16, #tpu.memory_space<vmem>>, vector<1x8x128xbf16>,
    %c7_i32 = arith.constant 7 : i32
    %265 = arith.truncf %259 : vector<8x128xf32> to vector<8x128xbf16>
    %c0_73 = arith.constant 0 : index
    %c0_74 = arith.constant 0 : index
    %266 = vector.load %arg2[%c0_73, %c0_74] : memref<128x384xbf16, #tpu.memory_space<vmem>>, vector<128x384xbf16>
    %cst_75 = arith.constant dense<0.000000e+00> : vector<8x384xf32>
    %267 = tpu.matmul %265, %266, %cst_75 {dimension_numbers = #tpu.dot_dimension_numbers<[1], [0], [0], [1], [0, 0, 1, 1], [], []>} : vector<8x128xbf16>, vector<128x384xbf16>, vector<8x384xf32> -> vector<8x384xf32>
    %268 = arith.index_cast %c7_i32 : i32 to index
    %c0_76 = arith.constant 0 : index
    %c0_77 = arith.constant 0 : index
    %269 = vector.load %arg9[%268, %c0_76, %c0_77] : memref<8x8x384xf32, #tpu.memory_space<vmem>>, vector<1x8x384xf32>
    %270 = vector.shape_cast %269 : vector<1x8x384xf32> to vector<8x384xf32>
    %271 = vector.extract_strided_slice %270 {offsets = [0, 0], sizes = [8, 128], strides = [1, 1]} : vector<8x384xf32> to vector<8x128xf32>
    %272 = vector.extract_strided_slice %267 {offsets = [0, 0], sizes = [8, 128], strides = [1, 1]} : vector<8x384xf32> to vector<8x128xf32>
    %273 = arith.addf %271, %272 : vector<8x128xf32>
    %274 = arith.negf %273 : vector<8x128xf32>
    %275 = math.exp %274 : vector<8x128xf32>
    %cst_78 = arith.constant 1.000000e+00 : f32
    %276 = vector.broadcast %cst_78 : f32 to vector<8x128xf32>
    %277 = arith.addf %276, %275 : vector<8x128xf32>
    %278 = arith.divf %276, %277 : vector<8x128xf32>
    %279 = vector.extract_strided_slice %270 {offsets = [0, 128], sizes = [8, 128], strides = [1, 1]} : vector<8x384xf32> to vector<8x128xf32>
    %280 = vector.extract_strided_slice %267 {offsets = [0, 128], sizes = [8, 128], strides = [1, 1]} : vector<8x384xf32> to vector<8x128xf32>
    %281 = arith.addf %279, %280 : vector<8x128xf32>
    %282 = arith.negf %281 : vector<8x128xf32>
    %283 = math.exp %282 : vector<8x128xf32>
    %cst_79 = arith.constant 1.000000e+00 : f32
    %284 = vector.broadcast %cst_79 : f32 to vector<8x128xf32>
    %285 = arith.addf %284, %283 : vector<8x128xf32>
    %286 = arith.divf %284, %285 : vector<8x128xf32>
    %287 = vector.extract_strided_slice %270 {offsets = [0, 256], sizes = [8, 128], strides = [1, 1]} : vector<8x384xf32> to vector<8x128xf32>
    %288 = vector.extract_strided_slice %267 {offsets = [0, 256], sizes = [8, 128], strides = [1, 1]} : vector<8x384xf32> to vector<8x128xf32>
    %289 = arith.addf %288, %11 : vector<8x128xf32>
    %290 = arith.mulf %278, %289 : vector<8x128xf32>
    %291 = arith.addf %287, %290 : vector<8x128xf32>
    %292 = math.tanh %291 : vector<8x128xf32>
    %293 = arith.subf %259, %292 : vector<8x128xf32>
    %294 = arith.mulf %286, %293 : vector<8x128xf32>
    %295 = arith.addf %292, %294 : vector<8x128xf32>
    %296 = arith.truncf %295 : vector<8x128xf32> to vector<8x128xbf16>
    %297 = arith.index_cast %c7_i32 : i32 to index
    %c0_80 = arith.constant 0 : index
    %c0_81 = arith.constant 0 : index
    %298 = vector.load %arg10[%297, %c0_80, %c0_81] : memref<8x8x128xbf16, #tpu.memory_space<vmem>>, vector<1x8x128xbf16>
    %299 = vector.shape_cast %298 : vector<1x8x128xbf16> to vector<8x128xbf16>
    %300 = vector.shape_cast %296 : vector<8x128xbf16> to vector<1x8x128xbf16>
    tpu.vector_store %arg10[%297, %c0_80, %c0_81], %300 {strides = array<i32>} : memref<8x8x128xbf16, #tpu.memory_space<vmem>>, vector<1x8x128xbf16>,
    %c8_i32 = arith.constant 8 : i32
    %c0_82 = arith.constant 0 : index
    %c0_83 = arith.constant 0 : index
    %c0_84 = arith.constant 0 : index
    %301 = vector.load %arg8[%c0_82, %c0_83, %c0_84] : memref<2x8x128xf32, #tpu.memory_space<vmem>>, vector<1x8x128xf32>
    %302 = vector.shape_cast %301 : vector<1x8x128xf32> to vector<8x128xf32>
    %303 = vector.shape_cast %295 : vector<8x128xf32> to vector<1x8x128xf32>
    tpu.vector_store %arg8[%c0_82, %c0_83, %c0_84], %303 {strides = array<i32>} : memref<2x8x128xf32, #tpu.memory_space<vmem>>, vector<1x8x128xf32>,
    %c0_85 = arith.constant 0 : index
    %c0_86 = arith.constant 0 : index
    %c0_87 = arith.constant 0 : index
    %304 = vector.load %arg10[%c0_85, %c0_86, %c0_87] : memref<8x8x128xbf16, #tpu.memory_space<vmem>>, vector<8x8x128xbf16>
    %305 = vector.shape_cast %304 : vector<8x8x128xbf16> to vector<64x128xbf16>
    %c0_88 = arith.constant 0 : index
    %c0_89 = arith.constant 0 : index
    %306 = vector.load %arg4[%c0_88, %c0_89] : memref<128x384xbf16, #tpu.memory_space<vmem>>, vector<128x384xbf16>
    %cst_90 = arith.constant dense<0.000000e+00> : vector<64x384xf32>
    %307 = tpu.matmul %305, %306, %cst_90 {dimension_numbers = #tpu.dot_dimension_numbers<[1], [0], [0], [1], [0, 0, 1, 1], [], []>} : vector<64x128xbf16>, vector<128x384xbf16>, vector<64x384xf32> -> vector<64x384xf32>
    %c0_91 = arith.constant 0 : index
    %c0_92 = arith.constant 0 : index
    %308 = vector.load %arg6[%c0_91, %c0_92] : memref<2x384xf32, #tpu.memory_space<vmem>>, vector<1x384xf32>
    %309 = vector.broadcast %308 : vector<1x384xf32> to vector<64x384xf32>
    %310 = arith.addf %307, %309 : vector<64x384xf32>
    %311 = vector.shape_cast %310 : vector<64x384xf32> to vector<8x8x384xf32>
    %c0_93 = arith.constant 0 : index
    %c0_94 = arith.constant 0 : index
    %c0_95 = arith.constant 0 : index
    %312 = vector.load %arg9[%c0_93, %c0_94, %c0_95] : memref<8x8x384xf32, #tpu.memory_space<vmem>>, vector<8x8x384xf32>
    tpu.vector_store %arg9[%c0_93, %c0_94, %c0_95], %311 {strides = array<i32>} : memref<8x8x384xf32, #tpu.memory_space<vmem>>, vector<8x8x384xf32>,
    %c1_96 = arith.constant 1 : index
    %c256_97 = arith.constant 256 : index
    %313 = vector.load %arg6[%c1_96, %c256_97] : memref<2x384xf32, #tpu.memory_space<vmem>>, vector<1x128xf32>
    %314 = vector.shape_cast %313 : vector<1x128xf32> to vector<1x128xf32>
    %315 = vector.broadcast %314 : vector<1x128xf32> to vector<8x128xf32>
    %cst_98 = arith.constant 0.000000e+00 : f32
    %316 = vector.broadcast %cst_98 : f32 to vector<8x128xf32>
    %c0_i32_99 = arith.constant 0 : i32
    %317 = arith.truncf %316 : vector<8x128xf32> to vector<8x128xbf16>
    %c0_100 = arith.constant 0 : index
    %c0_101 = arith.constant 0 : index
    %318 = vector.load %arg5[%c0_100, %c0_101] : memref<128x384xbf16, #tpu.memory_space<vmem>>, vector<128x384xbf16>
    %cst_102 = arith.constant dense<0.000000e+00> : vector<8x384xf32>
    %319 = tpu.matmul %317, %318, %cst_102 {dimension_numbers = #tpu.dot_dimension_numbers<[1], [0], [0], [1], [0, 0, 1, 1], [], []>} : vector<8x128xbf16>, vector<128x384xbf16>, vector<8x384xf32> -> vector<8x384xf32>
    %320 = arith.index_cast %c0_i32_99 : i32 to index
    %c0_103 = arith.constant 0 : index
    %c0_104 = arith.constant 0 : index
    %321 = vector.load %arg9[%320, %c0_103, %c0_104] : memref<8x8x384xf32, #tpu.memory_space<vmem>>, vector<1x8x384xf32>
    %322 = vector.shape_cast %321 : vector<1x8x384xf32> to vector<8x384xf32>
    %323 = vector.extract_strided_slice %322 {offsets = [0, 0], sizes = [8, 128], strides = [1, 1]} : vector<8x384xf32> to vector<8x128xf32>
    %324 = vector.extract_strided_slice %319 {offsets = [0, 0], sizes = [8, 128], strides = [1, 1]} : vector<8x384xf32> to vector<8x128xf32>
    %325 = arith.addf %323, %324 : vector<8x128xf32>
    %326 = arith.negf %325 : vector<8x128xf32>
    %327 = math.exp %326 : vector<8x128xf32>
    %cst_105 = arith.constant 1.000000e+00 : f32
    %328 = vector.broadcast %cst_105 : f32 to vector<8x128xf32>
    %329 = arith.addf %328, %327 : vector<8x128xf32>
    %330 = arith.divf %328, %329 : vector<8x128xf32>
    %331 = vector.extract_strided_slice %322 {offsets = [0, 128], sizes = [8, 128], strides = [1, 1]} : vector<8x384xf32> to vector<8x128xf32>
    %332 = vector.extract_strided_slice %319 {offsets = [0, 128], sizes = [8, 128], strides = [1, 1]} : vector<8x384xf32> to vector<8x128xf32>
    %333 = arith.addf %331, %332 : vector<8x128xf32>
    %334 = arith.negf %333 : vector<8x128xf32>
    %335 = math.exp %334 : vector<8x128xf32>
    %cst_106 = arith.constant 1.000000e+00 : f32
    %336 = vector.broadcast %cst_106 : f32 to vector<8x128xf32>
    %337 = arith.addf %336, %335 : vector<8x128xf32>
    %338 = arith.divf %336, %337 : vector<8x128xf32>
    %339 = vector.extract_strided_slice %322 {offsets = [0, 256], sizes = [8, 128], strides = [1, 1]} : vector<8x384xf32> to vector<8x128xf32>
    %340 = vector.extract_strided_slice %319 {offsets = [0, 256], sizes = [8, 128], strides = [1, 1]} : vector<8x384xf32> to vector<8x128xf32>
    %341 = arith.addf %340, %315 : vector<8x128xf32>
    %342 = arith.mulf %330, %341 : vector<8x128xf32>
    %343 = arith.addf %339, %342 : vector<8x128xf32>
    %344 = math.tanh %343 : vector<8x128xf32>
    %345 = arith.subf %316, %344 : vector<8x128xf32>
    %346 = arith.mulf %338, %345 : vector<8x128xf32>
    %347 = arith.addf %344, %346 : vector<8x128xf32>
    %348 = arith.index_cast %c0_i32_99 : i32 to index
    %c0_107 = arith.constant 0 : index
    %c0_108 = arith.constant 0 : index
    %349 = vector.load %arg7[%348, %c0_107, %c0_108] : memref<8x8x128xf32, #tpu.memory_space<vmem>>, vector<1x8x128xf32>
    %350 = vector.shape_cast %349 : vector<1x8x128xf32> to vector<8x128xf32>
    %351 = vector.shape_cast %347 : vector<8x128xf32> to vector<1x8x128xf32>
    tpu.vector_store %arg7[%348, %c0_107, %c0_108], %351 {strides = array<i32>} : memref<8x8x128xf32, #tpu.memory_space<vmem>>, vector<1x8x128xf32>,
    %c1_i32_109 = arith.constant 1 : i32
    %352 = arith.truncf %347 : vector<8x128xf32> to vector<8x128xbf16>
    %c0_110 = arith.constant 0 : index
    %c0_111 = arith.constant 0 : index
    %353 = vector.load %arg5[%c0_110, %c0_111] : memref<128x384xbf16, #tpu.memory_space<vmem>>, vector<128x384xbf16>
    %cst_112 = arith.constant dense<0.000000e+00> : vector<8x384xf32>
    %354 = tpu.matmul %352, %353, %cst_112 {dimension_numbers = #tpu.dot_dimension_numbers<[1], [0], [0], [1], [0, 0, 1, 1], [], []>} : vector<8x128xbf16>, vector<128x384xbf16>, vector<8x384xf32> -> vector<8x384xf32>
    %355 = arith.index_cast %c1_i32_109 : i32 to index
    %c0_113 = arith.constant 0 : index
    %c0_114 = arith.constant 0 : index
    %356 = vector.load %arg9[%355, %c0_113, %c0_114] : memref<8x8x384xf32, #tpu.memory_space<vmem>>, vector<1x8x384xf32>
    %357 = vector.shape_cast %356 : vector<1x8x384xf32> to vector<8x384xf32>
    %358 = vector.extract_strided_slice %357 {offsets = [0, 0], sizes = [8, 128], strides = [1, 1]} : vector<8x384xf32> to vector<8x128xf32>
    %359 = vector.extract_strided_slice %354 {offsets = [0, 0], sizes = [8, 128], strides = [1, 1]} : vector<8x384xf32> to vector<8x128xf32>
    %360 = arith.addf %358, %359 : vector<8x128xf32>
    %361 = arith.negf %360 : vector<8x128xf32>
    %362 = math.exp %361 : vector<8x128xf32>
    %cst_115 = arith.constant 1.000000e+00 : f32
    %363 = vector.broadcast %cst_115 : f32 to vector<8x128xf32>
    %364 = arith.addf %363, %362 : vector<8x128xf32>
    %365 = arith.divf %363, %364 : vector<8x128xf32>
    %366 = vector.extract_strided_slice %357 {offsets = [0, 128], sizes = [8, 128], strides = [1, 1]} : vector<8x384xf32> to vector<8x128xf32>
    %367 = vector.extract_strided_slice %354 {offsets = [0, 128], sizes = [8, 128], strides = [1, 1]} : vector<8x384xf32> to vector<8x128xf32>
    %368 = arith.addf %366, %367 : vector<8x128xf32>
    %369 = arith.negf %368 : vector<8x128xf32>
    %370 = math.exp %369 : vector<8x128xf32>
    %cst_116 = arith.constant 1.000000e+00 : f32
    %371 = vector.broadcast %cst_116 : f32 to vector<8x128xf32>
    %372 = arith.addf %371, %370 : vector<8x128xf32>
    %373 = arith.divf %371, %372 : vector<8x128xf32>
    %374 = vector.extract_strided_slice %357 {offsets = [0, 256], sizes = [8, 128], strides = [1, 1]} : vector<8x384xf32> to vector<8x128xf32>
    %375 = vector.extract_strided_slice %354 {offsets = [0, 256], sizes = [8, 128], strides = [1, 1]} : vector<8x384xf32> to vector<8x128xf32>
    %376 = arith.addf %375, %315 : vector<8x128xf32>
    %377 = arith.mulf %365, %376 : vector<8x128xf32>
    %378 = arith.addf %374, %377 : vector<8x128xf32>
    %379 = math.tanh %378 : vector<8x128xf32>
    %380 = arith.subf %347, %379 : vector<8x128xf32>
    %381 = arith.mulf %373, %380 : vector<8x128xf32>
    %382 = arith.addf %379, %381 : vector<8x128xf32>
    %383 = arith.index_cast %c1_i32_109 : i32 to index
    %c0_117 = arith.constant 0 : index
    %c0_118 = arith.constant 0 : index
    %384 = vector.load %arg7[%383, %c0_117, %c0_118] : memref<8x8x128xf32, #tpu.memory_space<vmem>>, vector<1x8x128xf32>
    %385 = vector.shape_cast %384 : vector<1x8x128xf32> to vector<8x128xf32>
    %386 = vector.shape_cast %382 : vector<8x128xf32> to vector<1x8x128xf32>
    tpu.vector_store %arg7[%383, %c0_117, %c0_118], %386 {strides = array<i32>} : memref<8x8x128xf32, #tpu.memory_space<vmem>>, vector<1x8x128xf32>,
    %c2_i32_119 = arith.constant 2 : i32
    %387 = arith.truncf %382 : vector<8x128xf32> to vector<8x128xbf16>
    %c0_120 = arith.constant 0 : index
    %c0_121 = arith.constant 0 : index
    %388 = vector.load %arg5[%c0_120, %c0_121] : memref<128x384xbf16, #tpu.memory_space<vmem>>, vector<128x384xbf16>
    %cst_122 = arith.constant dense<0.000000e+00> : vector<8x384xf32>
    %389 = tpu.matmul %387, %388, %cst_122 {dimension_numbers = #tpu.dot_dimension_numbers<[1], [0], [0], [1], [0, 0, 1, 1], [], []>} : vector<8x128xbf16>, vector<128x384xbf16>, vector<8x384xf32> -> vector<8x384xf32>
    %390 = arith.index_cast %c2_i32_119 : i32 to index
    %c0_123 = arith.constant 0 : index
    %c0_124 = arith.constant 0 : index
    %391 = vector.load %arg9[%390, %c0_123, %c0_124] : memref<8x8x384xf32, #tpu.memory_space<vmem>>, vector<1x8x384xf32>
    %392 = vector.shape_cast %391 : vector<1x8x384xf32> to vector<8x384xf32>
    %393 = vector.extract_strided_slice %392 {offsets = [0, 0], sizes = [8, 128], strides = [1, 1]} : vector<8x384xf32> to vector<8x128xf32>
    %394 = vector.extract_strided_slice %389 {offsets = [0, 0], sizes = [8, 128], strides = [1, 1]} : vector<8x384xf32> to vector<8x128xf32>
    %395 = arith.addf %393, %394 : vector<8x128xf32>
    %396 = arith.negf %395 : vector<8x128xf32>
    %397 = math.exp %396 : vector<8x128xf32>
    %cst_125 = arith.constant 1.000000e+00 : f32
    %398 = vector.broadcast %cst_125 : f32 to vector<8x128xf32>
    %399 = arith.addf %398, %397 : vector<8x128xf32>
    %400 = arith.divf %398, %399 : vector<8x128xf32>
    %401 = vector.extract_strided_slice %392 {offsets = [0, 128], sizes = [8, 128], strides = [1, 1]} : vector<8x384xf32> to vector<8x128xf32>
    %402 = vector.extract_strided_slice %389 {offsets = [0, 128], sizes = [8, 128], strides = [1, 1]} : vector<8x384xf32> to vector<8x128xf32>
    %403 = arith.addf %401, %402 : vector<8x128xf32>
    %404 = arith.negf %403 : vector<8x128xf32>
    %405 = math.exp %404 : vector<8x128xf32>
    %cst_126 = arith.constant 1.000000e+00 : f32
    %406 = vector.broadcast %cst_126 : f32 to vector<8x128xf32>
    %407 = arith.addf %406, %405 : vector<8x128xf32>
    %408 = arith.divf %406, %407 : vector<8x128xf32>
    %409 = vector.extract_strided_slice %392 {offsets = [0, 256], sizes = [8, 128], strides = [1, 1]} : vector<8x384xf32> to vector<8x128xf32>
    %410 = vector.extract_strided_slice %389 {offsets = [0, 256], sizes = [8, 128], strides = [1, 1]} : vector<8x384xf32> to vector<8x128xf32>
    %411 = arith.addf %410, %315 : vector<8x128xf32>
    %412 = arith.mulf %400, %411 : vector<8x128xf32>
    %413 = arith.addf %409, %412 : vector<8x128xf32>
    %414 = math.tanh %413 : vector<8x128xf32>
    %415 = arith.subf %382, %414 : vector<8x128xf32>
    %416 = arith.mulf %408, %415 : vector<8x128xf32>
    %417 = arith.addf %414, %416 : vector<8x128xf32>
    %418 = arith.index_cast %c2_i32_119 : i32 to index
    %c0_127 = arith.constant 0 : index
    %c0_128 = arith.constant 0 : index
    %419 = vector.load %arg7[%418, %c0_127, %c0_128] : memref<8x8x128xf32, #tpu.memory_space<vmem>>, vector<1x8x128xf32>
    %420 = vector.shape_cast %419 : vector<1x8x128xf32> to vector<8x128xf32>
    %421 = vector.shape_cast %417 : vector<8x128xf32> to vector<1x8x128xf32>
    tpu.vector_store %arg7[%418, %c0_127, %c0_128], %421 {strides = array<i32>} : memref<8x8x128xf32, #tpu.memory_space<vmem>>, vector<1x8x128xf32>,
    %c3_i32_129 = arith.constant 3 : i32
    %422 = arith.truncf %417 : vector<8x128xf32> to vector<8x128xbf16>
    %c0_130 = arith.constant 0 : index
    %c0_131 = arith.constant 0 : index
    %423 = vector.load %arg5[%c0_130, %c0_131] : memref<128x384xbf16, #tpu.memory_space<vmem>>, vector<128x384xbf16>
    %cst_132 = arith.constant dense<0.000000e+00> : vector<8x384xf32>
    %424 = tpu.matmul %422, %423, %cst_132 {dimension_numbers = #tpu.dot_dimension_numbers<[1], [0], [0], [1], [0, 0, 1, 1], [], []>} : vector<8x128xbf16>, vector<128x384xbf16>, vector<8x384xf32> -> vector<8x384xf32>
    %425 = arith.index_cast %c3_i32_129 : i32 to index
    %c0_133 = arith.constant 0 : index
    %c0_134 = arith.constant 0 : index
    %426 = vector.load %arg9[%425, %c0_133, %c0_134] : memref<8x8x384xf32, #tpu.memory_space<vmem>>, vector<1x8x384xf32>
    %427 = vector.shape_cast %426 : vector<1x8x384xf32> to vector<8x384xf32>
    %428 = vector.extract_strided_slice %427 {offsets = [0, 0], sizes = [8, 128], strides = [1, 1]} : vector<8x384xf32> to vector<8x128xf32>
    %429 = vector.extract_strided_slice %424 {offsets = [0, 0], sizes = [8, 128], strides = [1, 1]} : vector<8x384xf32> to vector<8x128xf32>
    %430 = arith.addf %428, %429 : vector<8x128xf32>
    %431 = arith.negf %430 : vector<8x128xf32>
    %432 = math.exp %431 : vector<8x128xf32>
    %cst_135 = arith.constant 1.000000e+00 : f32
    %433 = vector.broadcast %cst_135 : f32 to vector<8x128xf32>
    %434 = arith.addf %433, %432 : vector<8x128xf32>
    %435 = arith.divf %433, %434 : vector<8x128xf32>
    %436 = vector.extract_strided_slice %427 {offsets = [0, 128], sizes = [8, 128], strides = [1, 1]} : vector<8x384xf32> to vector<8x128xf32>
    %437 = vector.extract_strided_slice %424 {offsets = [0, 128], sizes = [8, 128], strides = [1, 1]} : vector<8x384xf32> to vector<8x128xf32>
    %438 = arith.addf %436, %437 : vector<8x128xf32>
    %439 = arith.negf %438 : vector<8x128xf32>
    %440 = math.exp %439 : vector<8x128xf32>
    %cst_136 = arith.constant 1.000000e+00 : f32
    %441 = vector.broadcast %cst_136 : f32 to vector<8x128xf32>
    %442 = arith.addf %441, %440 : vector<8x128xf32>
    %443 = arith.divf %441, %442 : vector<8x128xf32>
    %444 = vector.extract_strided_slice %427 {offsets = [0, 256], sizes = [8, 128], strides = [1, 1]} : vector<8x384xf32> to vector<8x128xf32>
    %445 = vector.extract_strided_slice %424 {offsets = [0, 256], sizes = [8, 128], strides = [1, 1]} : vector<8x384xf32> to vector<8x128xf32>
    %446 = arith.addf %445, %315 : vector<8x128xf32>
    %447 = arith.mulf %435, %446 : vector<8x128xf32>
    %448 = arith.addf %444, %447 : vector<8x128xf32>
    %449 = math.tanh %448 : vector<8x128xf32>
    %450 = arith.subf %417, %449 : vector<8x128xf32>
    %451 = arith.mulf %443, %450 : vector<8x128xf32>
    %452 = arith.addf %449, %451 : vector<8x128xf32>
    %453 = arith.index_cast %c3_i32_129 : i32 to index
    %c0_137 = arith.constant 0 : index
    %c0_138 = arith.constant 0 : index
    %454 = vector.load %arg7[%453, %c0_137, %c0_138] : memref<8x8x128xf32, #tpu.memory_space<vmem>>, vector<1x8x128xf32>
    %455 = vector.shape_cast %454 : vector<1x8x128xf32> to vector<8x128xf32>
    %456 = vector.shape_cast %452 : vector<8x128xf32> to vector<1x8x128xf32>
    tpu.vector_store %arg7[%453, %c0_137, %c0_138], %456 {strides = array<i32>} : memref<8x8x128xf32, #tpu.memory_space<vmem>>, vector<1x8x128xf32>,
    %c4_i32_139 = arith.constant 4 : i32
    %457 = arith.truncf %452 : vector<8x128xf32> to vector<8x128xbf16>
    %c0_140 = arith.constant 0 : index
    %c0_141 = arith.constant 0 : index
    %458 = vector.load %arg5[%c0_140, %c0_141] : memref<128x384xbf16, #tpu.memory_space<vmem>>, vector<128x384xbf16>
    %cst_142 = arith.constant dense<0.000000e+00> : vector<8x384xf32>
    %459 = tpu.matmul %457, %458, %cst_142 {dimension_numbers = #tpu.dot_dimension_numbers<[1], [0], [0], [1], [0, 0, 1, 1], [], []>} : vector<8x128xbf16>, vector<128x384xbf16>, vector<8x384xf32> -> vector<8x384xf32>
    %460 = arith.index_cast %c4_i32_139 : i32 to index
    %c0_143 = arith.constant 0 : index
    %c0_144 = arith.constant 0 : index
    %461 = vector.load %arg9[%460, %c0_143, %c0_144] : memref<8x8x384xf32, #tpu.memory_space<vmem>>, vector<1x8x384xf32>
    %462 = vector.shape_cast %461 : vector<1x8x384xf32> to vector<8x384xf32>
    %463 = vector.extract_strided_slice %462 {offsets = [0, 0], sizes = [8, 128], strides = [1, 1]} : vector<8x384xf32> to vector<8x128xf32>
    %464 = vector.extract_strided_slice %459 {offsets = [0, 0], sizes = [8, 128], strides = [1, 1]} : vector<8x384xf32> to vector<8x128xf32>
    %465 = arith.addf %463, %464 : vector<8x128xf32>
    %466 = arith.negf %465 : vector<8x128xf32>
    %467 = math.exp %466 : vector<8x128xf32>
    %cst_145 = arith.constant 1.000000e+00 : f32
    %468 = vector.broadcast %cst_145 : f32 to vector<8x128xf32>
    %469 = arith.addf %468, %467 : vector<8x128xf32>
    %470 = arith.divf %468, %469 : vector<8x128xf32>
    %471 = vector.extract_strided_slice %462 {offsets = [0, 128], sizes = [8, 128], strides = [1, 1]} : vector<8x384xf32> to vector<8x128xf32>
    %472 = vector.extract_strided_slice %459 {offsets = [0, 128], sizes = [8, 128], strides = [1, 1]} : vector<8x384xf32> to vector<8x128xf32>
    %473 = arith.addf %471, %472 : vector<8x128xf32>
    %474 = arith.negf %473 : vector<8x128xf32>
    %475 = math.exp %474 : vector<8x128xf32>
    %cst_146 = arith.constant 1.000000e+00 : f32
    %476 = vector.broadcast %cst_146 : f32 to vector<8x128xf32>
    %477 = arith.addf %476, %475 : vector<8x128xf32>
    %478 = arith.divf %476, %477 : vector<8x128xf32>
    %479 = vector.extract_strided_slice %462 {offsets = [0, 256], sizes = [8, 128], strides = [1, 1]} : vector<8x384xf32> to vector<8x128xf32>
    %480 = vector.extract_strided_slice %459 {offsets = [0, 256], sizes = [8, 128], strides = [1, 1]} : vector<8x384xf32> to vector<8x128xf32>
    %481 = arith.addf %480, %315 : vector<8x128xf32>
    %482 = arith.mulf %470, %481 : vector<8x128xf32>
    %483 = arith.addf %479, %482 : vector<8x128xf32>
    %484 = math.tanh %483 : vector<8x128xf32>
    %485 = arith.subf %452, %484 : vector<8x128xf32>
    %486 = arith.mulf %478, %485 : vector<8x128xf32>
    %487 = arith.addf %484, %486 : vector<8x128xf32>
    %488 = arith.index_cast %c4_i32_139 : i32 to index
    %c0_147 = arith.constant 0 : index
    %c0_148 = arith.constant 0 : index
    %489 = vector.load %arg7[%488, %c0_147, %c0_148] : memref<8x8x128xf32, #tpu.memory_space<vmem>>, vector<1x8x128xf32>
    %490 = vector.shape_cast %489 : vector<1x8x128xf32> to vector<8x128xf32>
    %491 = vector.shape_cast %487 : vector<8x128xf32> to vector<1x8x128xf32>
    tpu.vector_store %arg7[%488, %c0_147, %c0_148], %491 {strides = array<i32>} : memref<8x8x128xf32, #tpu.memory_space<vmem>>, vector<1x8x128xf32>,
    %c5_i32_149 = arith.constant 5 : i32
    %492 = arith.truncf %487 : vector<8x128xf32> to vector<8x128xbf16>
    %c0_150 = arith.constant 0 : index
    %c0_151 = arith.constant 0 : index
    %493 = vector.load %arg5[%c0_150, %c0_151] : memref<128x384xbf16, #tpu.memory_space<vmem>>, vector<128x384xbf16>
    %cst_152 = arith.constant dense<0.000000e+00> : vector<8x384xf32>
    %494 = tpu.matmul %492, %493, %cst_152 {dimension_numbers = #tpu.dot_dimension_numbers<[1], [0], [0], [1], [0, 0, 1, 1], [], []>} : vector<8x128xbf16>, vector<128x384xbf16>, vector<8x384xf32> -> vector<8x384xf32>
    %495 = arith.index_cast %c5_i32_149 : i32 to index
    %c0_153 = arith.constant 0 : index
    %c0_154 = arith.constant 0 : index
    %496 = vector.load %arg9[%495, %c0_153, %c0_154] : memref<8x8x384xf32, #tpu.memory_space<vmem>>, vector<1x8x384xf32>
    %497 = vector.shape_cast %496 : vector<1x8x384xf32> to vector<8x384xf32>
    %498 = vector.extract_strided_slice %497 {offsets = [0, 0], sizes = [8, 128], strides = [1, 1]} : vector<8x384xf32> to vector<8x128xf32>
    %499 = vector.extract_strided_slice %494 {offsets = [0, 0], sizes = [8, 128], strides = [1, 1]} : vector<8x384xf32> to vector<8x128xf32>
    %500 = arith.addf %498, %499 : vector<8x128xf32>
    %501 = arith.negf %500 : vector<8x128xf32>
    %502 = math.exp %501 : vector<8x128xf32>
    %cst_155 = arith.constant 1.000000e+00 : f32
    %503 = vector.broadcast %cst_155 : f32 to vector<8x128xf32>
    %504 = arith.addf %503, %502 : vector<8x128xf32>
    %505 = arith.divf %503, %504 : vector<8x128xf32>
    %506 = vector.extract_strided_slice %497 {offsets = [0, 128], sizes = [8, 128], strides = [1, 1]} : vector<8x384xf32> to vector<8x128xf32>
    %507 = vector.extract_strided_slice %494 {offsets = [0, 128], sizes = [8, 128], strides = [1, 1]} : vector<8x384xf32> to vector<8x128xf32>
    %508 = arith.addf %506, %507 : vector<8x128xf32>
    %509 = arith.negf %508 : vector<8x128xf32>
    %510 = math.exp %509 : vector<8x128xf32>
    %cst_156 = arith.constant 1.000000e+00 : f32
    %511 = vector.broadcast %cst_156 : f32 to vector<8x128xf32>
    %512 = arith.addf %511, %510 : vector<8x128xf32>
    %513 = arith.divf %511, %512 : vector<8x128xf32>
    %514 = vector.extract_strided_slice %497 {offsets = [0, 256], sizes = [8, 128], strides = [1, 1]} : vector<8x384xf32> to vector<8x128xf32>
    %515 = vector.extract_strided_slice %494 {offsets = [0, 256], sizes = [8, 128], strides = [1, 1]} : vector<8x384xf32> to vector<8x128xf32>
    %516 = arith.addf %515, %315 : vector<8x128xf32>
    %517 = arith.mulf %505, %516 : vector<8x128xf32>
    %518 = arith.addf %514, %517 : vector<8x128xf32>
    %519 = math.tanh %518 : vector<8x128xf32>
    %520 = arith.subf %487, %519 : vector<8x128xf32>
    %521 = arith.mulf %513, %520 : vector<8x128xf32>
    %522 = arith.addf %519, %521 : vector<8x128xf32>
    %523 = arith.index_cast %c5_i32_149 : i32 to index
    %c0_157 = arith.constant 0 : index
    %c0_158 = arith.constant 0 : index
    %524 = vector.load %arg7[%523, %c0_157, %c0_158] : memref<8x8x128xf32, #tpu.memory_space<vmem>>, vector<1x8x128xf32>
    %525 = vector.shape_cast %524 : vector<1x8x128xf32> to vector<8x128xf32>
    %526 = vector.shape_cast %522 : vector<8x128xf32> to vector<1x8x128xf32>
    tpu.vector_store %arg7[%523, %c0_157, %c0_158], %526 {strides = array<i32>} : memref<8x8x128xf32, #tpu.memory_space<vmem>>, vector<1x8x128xf32>,
    %c6_i32_159 = arith.constant 6 : i32
    %527 = arith.truncf %522 : vector<8x128xf32> to vector<8x128xbf16>
    %c0_160 = arith.constant 0 : index
    %c0_161 = arith.constant 0 : index
    %528 = vector.load %arg5[%c0_160, %c0_161] : memref<128x384xbf16, #tpu.memory_space<vmem>>, vector<128x384xbf16>
    %cst_162 = arith.constant dense<0.000000e+00> : vector<8x384xf32>
    %529 = tpu.matmul %527, %528, %cst_162 {dimension_numbers = #tpu.dot_dimension_numbers<[1], [0], [0], [1], [0, 0, 1, 1], [], []>} : vector<8x128xbf16>, vector<128x384xbf16>, vector<8x384xf32> -> vector<8x384xf32>
    %530 = arith.index_cast %c6_i32_159 : i32 to index
    %c0_163 = arith.constant 0 : index
    %c0_164 = arith.constant 0 : index
    %531 = vector.load %arg9[%530, %c0_163, %c0_164] : memref<8x8x384xf32, #tpu.memory_space<vmem>>, vector<1x8x384xf32>
    %532 = vector.shape_cast %531 : vector<1x8x384xf32> to vector<8x384xf32>
    %533 = vector.extract_strided_slice %532 {offsets = [0, 0], sizes = [8, 128], strides = [1, 1]} : vector<8x384xf32> to vector<8x128xf32>
    %534 = vector.extract_strided_slice %529 {offsets = [0, 0], sizes = [8, 128], strides = [1, 1]} : vector<8x384xf32> to vector<8x128xf32>
    %535 = arith.addf %533, %534 : vector<8x128xf32>
    %536 = arith.negf %535 : vector<8x128xf32>
    %537 = math.exp %536 : vector<8x128xf32>
    %cst_165 = arith.constant 1.000000e+00 : f32
    %538 = vector.broadcast %cst_165 : f32 to vector<8x128xf32>
    %539 = arith.addf %538, %537 : vector<8x128xf32>
    %540 = arith.divf %538, %539 : vector<8x128xf32>
    %541 = vector.extract_strided_slice %532 {offsets = [0, 128], sizes = [8, 128], strides = [1, 1]} : vector<8x384xf32> to vector<8x128xf32>
    %542 = vector.extract_strided_slice %529 {offsets = [0, 128], sizes = [8, 128], strides = [1, 1]} : vector<8x384xf32> to vector<8x128xf32>
    %543 = arith.addf %541, %542 : vector<8x128xf32>
    %544 = arith.negf %543 : vector<8x128xf32>
    %545 = math.exp %544 : vector<8x128xf32>
    %cst_166 = arith.constant 1.000000e+00 : f32
    %546 = vector.broadcast %cst_166 : f32 to vector<8x128xf32>
    %547 = arith.addf %546, %545 : vector<8x128xf32>
    %548 = arith.divf %546, %547 : vector<8x128xf32>
    %549 = vector.extract_strided_slice %532 {offsets = [0, 256], sizes = [8, 128], strides = [1, 1]} : vector<8x384xf32> to vector<8x128xf32>
    %550 = vector.extract_strided_slice %529 {offsets = [0, 256], sizes = [8, 128], strides = [1, 1]} : vector<8x384xf32> to vector<8x128xf32>
    %551 = arith.addf %550, %315 : vector<8x128xf32>
    %552 = arith.mulf %540, %551 : vector<8x128xf32>
    %553 = arith.addf %549, %552 : vector<8x128xf32>
    %554 = math.tanh %553 : vector<8x128xf32>
    %555 = arith.subf %522, %554 : vector<8x128xf32>
    %556 = arith.mulf %548, %555 : vector<8x128xf32>
    %557 = arith.addf %554, %556 : vector<8x128xf32>
    %558 = arith.index_cast %c6_i32_159 : i32 to index
    %c0_167 = arith.constant 0 : index
    %c0_168 = arith.constant 0 : index
    %559 = vector.load %arg7[%558, %c0_167, %c0_168] : memref<8x8x128xf32, #tpu.memory_space<vmem>>, vector<1x8x128xf32>
    %560 = vector.shape_cast %559 : vector<1x8x128xf32> to vector<8x128xf32>
    %561 = vector.shape_cast %557 : vector<8x128xf32> to vector<1x8x128xf32>
    tpu.vector_store %arg7[%558, %c0_167, %c0_168], %561 {strides = array<i32>} : memref<8x8x128xf32, #tpu.memory_space<vmem>>, vector<1x8x128xf32>,
    %c7_i32_169 = arith.constant 7 : i32
    %562 = arith.truncf %557 : vector<8x128xf32> to vector<8x128xbf16>
    %c0_170 = arith.constant 0 : index
    %c0_171 = arith.constant 0 : index
    %563 = vector.load %arg5[%c0_170, %c0_171] : memref<128x384xbf16, #tpu.memory_space<vmem>>, vector<128x384xbf16>
    %cst_172 = arith.constant dense<0.000000e+00> : vector<8x384xf32>
    %564 = tpu.matmul %562, %563, %cst_172 {dimension_numbers = #tpu.dot_dimension_numbers<[1], [0], [0], [1], [0, 0, 1, 1], [], []>} : vector<8x128xbf16>, vector<128x384xbf16>, vector<8x384xf32> -> vector<8x384xf32>
    %565 = arith.index_cast %c7_i32_169 : i32 to index
    %c0_173 = arith.constant 0 : index
    %c0_174 = arith.constant 0 : index
    %566 = vector.load %arg9[%565, %c0_173, %c0_174] : memref<8x8x384xf32, #tpu.memory_space<vmem>>, vector<1x8x384xf32>
    %567 = vector.shape_cast %566 : vector<1x8x384xf32> to vector<8x384xf32>
    %568 = vector.extract_strided_slice %567 {offsets = [0, 0], sizes = [8, 128], strides = [1, 1]} : vector<8x384xf32> to vector<8x128xf32>
    %569 = vector.extract_strided_slice %564 {offsets = [0, 0], sizes = [8, 128], strides = [1, 1]} : vector<8x384xf32> to vector<8x128xf32>
    %570 = arith.addf %568, %569 : vector<8x128xf32>
    %571 = arith.negf %570 : vector<8x128xf32>
    %572 = math.exp %571 : vector<8x128xf32>
    %cst_175 = arith.constant 1.000000e+00 : f32
    %573 = vector.broadcast %cst_175 : f32 to vector<8x128xf32>
    %574 = arith.addf %573, %572 : vector<8x128xf32>
    %575 = arith.divf %573, %574 : vector<8x128xf32>
    %576 = vector.extract_strided_slice %567 {offsets = [0, 128], sizes = [8, 128], strides = [1, 1]} : vector<8x384xf32> to vector<8x128xf32>
    %577 = vector.extract_strided_slice %564 {offsets = [0, 128], sizes = [8, 128], strides = [1, 1]} : vector<8x384xf32> to vector<8x128xf32>
    %578 = arith.addf %576, %577 : vector<8x128xf32>
    %579 = arith.negf %578 : vector<8x128xf32>
    %580 = math.exp %579 : vector<8x128xf32>
    %cst_176 = arith.constant 1.000000e+00 : f32
    %581 = vector.broadcast %cst_176 : f32 to vector<8x128xf32>
    %582 = arith.addf %581, %580 : vector<8x128xf32>
    %583 = arith.divf %581, %582 : vector<8x128xf32>
    %584 = vector.extract_strided_slice %567 {offsets = [0, 256], sizes = [8, 128], strides = [1, 1]} : vector<8x384xf32> to vector<8x128xf32>
    %585 = vector.extract_strided_slice %564 {offsets = [0, 256], sizes = [8, 128], strides = [1, 1]} : vector<8x384xf32> to vector<8x128xf32>
    %586 = arith.addf %585, %315 : vector<8x128xf32>
    %587 = arith.mulf %575, %586 : vector<8x128xf32>
    %588 = arith.addf %584, %587 : vector<8x128xf32>
    %589 = math.tanh %588 : vector<8x128xf32>
    %590 = arith.subf %557, %589 : vector<8x128xf32>
    %591 = arith.mulf %583, %590 : vector<8x128xf32>
    %592 = arith.addf %589, %591 : vector<8x128xf32>
    %593 = arith.index_cast %c7_i32_169 : i32 to index
    %c0_177 = arith.constant 0 : index
    %c0_178 = arith.constant 0 : index
    %594 = vector.load %arg7[%593, %c0_177, %c0_178] : memref<8x8x128xf32, #tpu.memory_space<vmem>>, vector<1x8x128xf32>
    %595 = vector.shape_cast %594 : vector<1x8x128xf32> to vector<8x128xf32>
    %596 = vector.shape_cast %592 : vector<8x128xf32> to vector<1x8x128xf32>
    tpu.vector_store %arg7[%593, %c0_177, %c0_178], %596 {strides = array<i32>} : memref<8x8x128xf32, #tpu.memory_space<vmem>>, vector<1x8x128xf32>,
    %c8_i32_179 = arith.constant 8 : i32
    %c1_180 = arith.constant 1 : index
    %c0_181 = arith.constant 0 : index
    %c0_182 = arith.constant 0 : index
    %597 = vector.load %arg8[%c1_180, %c0_181, %c0_182] : memref<2x8x128xf32, #tpu.memory_space<vmem>>, vector<1x8x128xf32>
    %598 = vector.shape_cast %597 : vector<1x8x128xf32> to vector<8x128xf32>
    %599 = vector.shape_cast %592 : vector<8x128xf32> to vector<1x8x128xf32>
    tpu.vector_store %arg8[%c1_180, %c0_181, %c0_182], %599 {strides = array<i32>} : memref<2x8x128xf32, #tpu.memory_space<vmem>>, vector<1x8x128xf32>,
    return
  }
}

</mosaic_0001>

<llo_original>
// kernel: tpu_custom_call.1
$region0: #{tpu_custom_call.1}
  #allocation0 [shape = 'u32[]', space=smem, size = 0x4, offset = 0x4, fixed_abs, tag = 'smem constant byte address 0x4 - core index']
  #allocation1 [shape = 'u32[144,128]{1,0:T(1,128)}', space=vmem, size = 0x12000, scoped, tag = 'internal scratch']
  #allocation2 [shape = 'f32[8,8,384]{2,1,0:T(8,128)}', space=vmem, size = 0x18000, scoped, tag = 'scratch operand']
  #allocation3 [shape = 'bf16[8,8,128]{2,1,0:T(8,128)(2,1)}', space=vmem, size = 0x4000, scoped, tag = 'scratch operand']
  %s0 = inlined_call_operand.hbm [shape: bf16[8,8,16], index: 0, kind: input, shape index: {}]
  %s1 = inlined_call_operand.hbm [shape: bf16[16,384], index: 1, kind: input, shape index: {}]
  %s2 = inlined_call_operand.hbm [shape: bf16[128,384], index: 2, kind: input, shape index: {}]
  %s3 = inlined_call_operand.hbm [shape: f32[2,384], index: 3, kind: input, shape index: {}]
  %s4 = inlined_call_operand.hbm [shape: bf16[128,384], index: 4, kind: input, shape index: {}]
  %s5 = inlined_call_operand.hbm [shape: bf16[128,384], index: 5, kind: input, shape index: {}]
  %s6 = inlined_call_operand.vmem [shape: f32[2,384], index: 6, kind: input, shape index: {}]
  %s7 = inlined_call_operand.hbm [shape: f32[8,8,128], index: 7, kind: output, shape index: {0}]
  %s8 = inlined_call_operand.hbm [shape: f32[2,8,128], index: 8, kind: output, shape index: {1}]
  %9 = xla_tuple %s7, %s8
  %s10 = sld [smem:[#allocation0]]
  $region70: #{tpu_custom_call.1} parent=0
    _
  %s12 = ssub.s32 1, %s10
  %s13 = scalar_select 0, %s12, %s10
  $region1: #{tpu_custom_call.1} parent=0
    #allocation4 [shape = 'u8[16384]{0}', space=vmem, size = 0x4000, scoped, tag = 'input window, operand 0, single buffered']
    #allocation5 [shape = 's32[1]{0}', space=sflag, size = 0x4, scoped, tag = 'scoped memory for tpu_custom_call.1']
    #allocation6 [shape = 's32[1]{0}', space=sflag, size = 0x4, scoped, tag = 'scoped memory for tpu_custom_call.1']
    #allocation7 [shape = 'u8[12288]{0}', space=vmem, size = 0x3000, scoped, tag = 'input window, operand 1, single buffered']
    #allocation8 [shape = 's32[1]{0}', space=sflag, size = 0x4, scoped, tag = 'scoped memory for tpu_custom_call.1']
    #allocation9 [shape = 'u8[98304]{0}', space=vmem, size = 0x18000, scoped, tag = 'input window, operand 2, single buffered']
    #allocation10 [shape = 'u8[3072]{0}', space=vmem, size = 0xc00, scoped, tag = 'input window, operand 3, single buffered']
    #allocation11 [shape = 's32[1]{0}', space=sflag, size = 0x4, scoped, tag = 'scoped memory for tpu_custom_call.1']
    #allocation12 [shape = 'u8[98304]{0}', space=vmem, size = 0x18000, scoped, tag = 'input window, operand 4, single buffered']
    #allocation13 [shape = 'u8[98304]{0}', space=vmem, size = 0x18000, scoped, tag = 'input window, operand 5, single buffered']
    #allocation14 [shape = 's32[1]{0}', space=sflag, size = 0x4, scoped, tag = 'scoped memory for tpu_custom_call.1']
    #allocation15 [shape = 'u8[32768]{0}', space=vmem, size = 0x8000, scoped, tag = 'output window, operand 0, single buffered']
    #allocation16 [shape = 'u8[8192]{0}', space=vmem, size = 0x2000, scoped, tag = 'output window, operand 1, single buffered']
    #allocation17 [shape = 's32[1]{0}', space=sflag, size = 0x4, scoped, tag = 'scoped memory for tpu_custom_call.1']
    %14 = vsyncpa [#allocation5], 0
    %15 = vsyncpa [#allocation8], 0
    %16 = vsyncpa [#allocation11], 0
    %17 = vsyncpa [#allocation14], 0
    %18 = vsyncpa [#allocation6], 0
    %19 = vsyncpa [#allocation17], 0
    // Predicated region
    $region2: #{tpu_custom_call.1} parent=1 // pred_check
      _
    $region3: #{tpu_custom_call.1} parent=1 // pred_check_branch
      %21 = sbr.rel (0) target = $region5
    $region4: #{tpu_custom_call.1} parent=1 // pred_region
      %s23 = ssub.s32 512, 512
      %24 = vsyncadd [#allocation5], %s23
      %s25 = sshll.u32 [#allocation4], 4
      %s26 = int_to_ptr.vmem [resolvable:$true] %s25
      %31 = dma.hbm_to_vmem [thread:$0]  %s0, 512, %s26, [#allocation5], 64, 64, 4
    $region5: #{tpu_custom_call.1} parent=1 // pred_fallthru
      _
    // Predicated region
    $region6: #{tpu_custom_call.1} parent=1 // pred_check
      _
    $region7: #{tpu_custom_call.1} parent=1 // pred_check_branch
      %33 = sbr.rel (0) target = $region9
    $region8: #{tpu_custom_call.1} parent=1 // pred_region
      %s35 = ssub.s32 384, 384
      %36 = vsyncadd [#allocation8], %s35
      %s37 = sshll.u32 [#allocation7], 4
      %s38 = int_to_ptr.vmem [resolvable:$true] %s37
      %43 = dma.hbm_to_vmem [thread:$0]  %s1, 384, %s38, [#allocation8], 192, 192, 12
    $region9: #{tpu_custom_call.1} parent=1 // pred_fallthru
      _
    // Predicated region
    $region10: #{tpu_custom_call.1} parent=1 // pred_check
      _
    $region11: #{tpu_custom_call.1} parent=1 // pred_check_branch
      %45 = sbr.rel (0) target = $region13
    $region12: #{tpu_custom_call.1} parent=1 // pred_region
      %s47 = ssub.s32 3072, 3072
      %48 = vsyncadd [#allocation8], %s47
      %s49 = sshll.u32 [#allocation9], 4
      %s50 = int_to_ptr.vmem [resolvable:$true] %s49
      %55 = dma.hbm_to_vmem [thread:$0]  %s2, 3072, %s50, [#allocation8], 192, 192, 12
    $region13: #{tpu_custom_call.1} parent=1 // pred_fallthru
      _
    // Predicated region
    $region14: #{tpu_custom_call.1} parent=1 // pred_check
      _
    $region15: #{tpu_custom_call.1} parent=1 // pred_check_branch
      %57 = sbr.rel (0) target = $region17
    $region16: #{tpu_custom_call.1} parent=1 // pred_region
      %s59 = ssub.s32 96, 96
      %60 = vsyncadd [#allocation11], %s59
      %s62 = sshll.u32 [#allocation10], 4
      %s63 = int_to_ptr.vmem [resolvable:$true] %s62
      %65 = dma.hbm_to_vmem [thread:$0]  %s3, 96, %s63, [#allocation11]
    $region17: #{tpu_custom_call.1} parent=1 // pred_fallthru
      _
    // Predicated region
    $region18: #{tpu_custom_call.1} parent=1 // pred_check
      _
    $region19: #{tpu_custom_call.1} parent=1 // pred_check_branch
      %67 = sbr.rel (0) target = $region21
    $region20: #{tpu_custom_call.1} parent=1 // pred_region
      %s69 = ssub.s32 3072, 3072
      %70 = vsyncadd [#allocation11], %s69
      %s71 = sshll.u32 [#allocation12], 4
      %s72 = int_to_ptr.vmem [resolvable:$true] %s71
      %77 = dma.hbm_to_vmem [thread:$0]  %s4, 3072, %s72, [#allocation11], 192, 192, 12
    $region21: #{tpu_custom_call.1} parent=1 // pred_fallthru
      _
    // Predicated region
    $region22: #{tpu_custom_call.1} parent=1 // pred_check
      _
    $region23: #{tpu_custom_call.1} parent=1 // pred_check_branch
      %79 = sbr.rel (0) target = $region25
    $region24: #{tpu_custom_call.1} parent=1 // pred_region
      %s81 = ssub.s32 3072, 3072
      %82 = vsyncadd [#allocation14], %s81
      %s83 = sshll.u32 [#allocation13], 4
      %s84 = int_to_ptr.vmem [resolvable:$true] %s83
      %89 = dma.hbm_to_vmem [thread:$0]  %s5, 3072, %s84, [#allocation14], 192, 192, 12
    $region25: #{tpu_custom_call.1} parent=1 // pred_fallthru
      _
    // Predicated region
    $region26: #{tpu_custom_call.1} parent=1 // pred_check
      _
    $region27: #{tpu_custom_call.1} parent=1 // pred_check_branch
      %91 = sbr.rel (0) target = $region29
    $region28: #{tpu_custom_call.1} parent=1 // pred_region
      _
    $region29: #{tpu_custom_call.1} parent=1 // pred_fallthru
      _
    // Predicated region
    $region30: #{tpu_custom_call.1} parent=1 // pred_check
      _
    $region31: #{tpu_custom_call.1} parent=1 // pred_check_branch
      %93 = sbr.rel (0) target = $region33
    $region32: #{tpu_custom_call.1} parent=1 // pred_region
      %94 = dma.done [#allocation5], 512
    $region33: #{tpu_custom_call.1} parent=1 // pred_fallthru
      _
    // Predicated region
    $region34: #{tpu_custom_call.1} parent=1 // pred_check
      _
    $region35: #{tpu_custom_call.1} parent=1 // pred_check_branch
      %96 = sbr.rel (0) target = $region37
    $region36: #{tpu_custom_call.1} parent=1 // pred_region
      %97 = dma.done [#allocation8], 384
    $region37: #{tpu_custom_call.1} parent=1 // pred_fallthru
      _
    // Predicated region
    $region38: #{tpu_custom_call.1} parent=1 // pred_check
      _
    $region39: #{tpu_custom_call.1} parent=1 // pred_check_branch
      %99 = sbr.rel (0) target = $region41
    $region40: #{tpu_custom_call.1} parent=1 // pred_region
      %100 = dma.done [#allocation8], 3072
    $region41: #{tpu_custom_call.1} parent=1 // pred_fallthru
      _
    // Predicated region
    $region42: #{tpu_custom_call.1} parent=1 // pred_check
      _
    $region43: #{tpu_custom_call.1} parent=1 // pred_check_branch
      %102 = sbr.rel (0) target = $region45
    $region44: #{tpu_custom_call.1} parent=1 // pred_region
      %103 = dma.done [#allocation11], 96
    $region45: #{tpu_custom_call.1} parent=1 // pred_fallthru
      _
    // Predicated region
    $region46: #{tpu_custom_call.1} parent=1 // pred_check
      _
    $region47: #{tpu_custom_call.1} parent=1 // pred_check_branch
      %105 = sbr.rel (0) target = $region49
    $region48: #{tpu_custom_call.1} parent=1 // pred_region
      %106 = dma.done [#allocation11], 3072
    $region49: #{tpu_custom_call.1} parent=1 // pred_fallthru
      _
    // Predicated region
    $region50: #{tpu_custom_call.1} parent=1 // pred_check
      _
    $region51: #{tpu_custom_call.1} parent=1 // pred_check_branch
      %108 = sbr.rel (0) target = $region53
    $region52: #{tpu_custom_call.1} parent=1 // pred_region
      %109 = dma.done [#allocation14], 3072
    $region53: #{tpu_custom_call.1} parent=1 // pred_fallthru
      _
    %v111 = vld [vmem:[#allocation4] sm:$0xf]
    %v112 = vld [vmem:[#allocation4 + $0x4] sm:$0xf]
    %v113 = vld [vmem:[#allocation4 + $0x8] sm:$0xf]
    %v114 = vld [vmem:[#allocation4 + $0xc] sm:$0xf]
    %v115 = vld [vmem:[#allocation4 + $0x10] sm:$0xf]
    %v116 = vld [vmem:[#allocation4 + $0x14] sm:$0xf]
    %v117 = vld [vmem:[#allocation4 + $0x18] sm:$0xf]
    %v118 = vld [vmem:[#allocation4 + $0x1c] sm:$0xf]
    %v119 = vld [vmem:[#allocation7] sm:$0xff]
    %v120 = vld [vmem:[#allocation7 + $0x8] sm:$0xf]
    %v121 = vld [vmem:[#allocation7 + $0xc] sm:$0xff]
    %v122 = vld [vmem:[#allocation7 + $0x14] sm:$0xf]
    %v123 = vld [vmem:[#allocation10] ss:$2 sm:$0x7]
    %v125 = vlaneseq
    %v126 = vshrl.u32 %v125, 7
    %v127 = vsub.s32 0, %v126
    %v128 = vrot.slane %v123, %v127
    %v129 = vlaneseq
    %v130 = vshrl.u32 %v129, 7
    %v131 = vsub.s32 1, %v130
    %v132 = vrot.slane %v123, %v131
    %v133 = vlaneseq
    %v134 = vshrl.u32 %v133, 7
    %v135 = vsub.s32 2, %v134
    %v136 = vrot.slane %v123, %v135
    %v148 = vunpack.c.l.b16 %v111
    %v149 = vunpack.c.l.b16 %v112
    %v150 = vunpack.c.l.b16 %v113
    %v151 = vunpack.c.l.b16 %v114
    %v152 = vunpack.c.l.b16 %v115
    %v153 = vunpack.c.l.b16 %v116
    %v154 = vunpack.c.l.b16 %v117
    %v155 = vunpack.c.l.b16 %v118
    %v156 = vpack.c.b16 %v149, %v148
    %v157 = vpack.c.b16 %v151, %v150
    %v158 = vpack.c.b16 %v153, %v152
    %v159 = vpack.c.b16 %v155, %v154
    %v164 = vunpack.c.l.b16 %v119
    %v165 = vunpack.c.h.b16 %v119
    %v166 = vunpack.c.l.b16 %v120
    %v167 = vunpack.c.l.b16 %v121
    %v168 = vunpack.c.h.b16 %v121
    %v169 = vunpack.c.l.b16 %v122
    %v170 = vpack.c.b16 %v167, %v164
    %v171 = vpack.c.b16 %v168, %v165
    %v172 = vpack.c.b16 %v169, %v166
    %vm176 = vcmask 130048
    %v178 = vsel %vm176, %v156, 0
    %v181 = vsel %vm176, %v157, 0
    %v184 = vsel %vm176, %v158, 0
    %v187 = vsel %vm176, %v159, 0
    %189 = vmatprep.subr.bf16.mxu0 0
    %190 = vmatpush1.bf16.msra.mxu0 0
    %191 = vmatprep.subr.bf16.mxu0 0
    %192 = vmatpush1.bf16.msra.mxu0 0
    %193 = vmatprep.subr.bf16.mxu0 0
    %194 = vmatpush1.bf16.msra.mxu0 0
    %195 = vmatprep.subr.bf16.mxu0 0
    %196 = vmatpush1.bf16.msra.mxu0 0
    %197 = vmatprep.subr.bf16.mxu0 0
    %198 = vmatpush1.bf16.msra.mxu0 0
    %199 = vmatprep.subr.bf16.mxu0 0
    %200 = vmatpush1.bf16.msra.mxu0 0
    %201 = vmatprep.subr.bf16.mxu0 0
    %202 = vmatpush1.bf16.msra.mxu0 0
    %203 = vmatprep.subr.bf16.mxu0 %v171
    %204 = vmatpush1.bf16.msra.mxu0 %v170
    %205 = vmatprep.subr.bf16.mxu0 0
    %206 = vmatpush2.bf16.msra.mxu0 0
    %207 = vmatprep.subr.bf16.mxu0 0
    %208 = vmatpush2.bf16.msra.mxu0 0
    %209 = vmatprep.subr.bf16.mxu0 0
    %210 = vmatpush2.bf16.msra.mxu0 0
    %211 = vmatprep.subr.bf16.mxu0 0
    %212 = vmatpush2.bf16.msra.mxu0 0
    %213 = vmatprep.subr.bf16.mxu0 0
    %214 = vmatpush2.bf16.msra.mxu0 0
    %215 = vmatprep.subr.bf16.mxu0 0
    %216 = vmatpush2.bf16.msra.mxu0 0
    %217 = vmatprep.subr.bf16.mxu0 0
    %218 = vmatpush2.bf16.msra.mxu0 0
    %219 = vmatprep.subr.bf16.mxu0 0
    %220 = vmatpush2.bf16.msra.mxu0 0
    %221 = vmatprep.mubr.bf16.mxu0 0
    %222 = vmatmul.mubr.bf16.gmra.mxu0 %v178
    %v223 = vpop.f32.mrf.mxu0
    %v224 = vadd.f32 %v128, %v223
    %v225 = vpop.f32.mrf.mxu0
    %v226 = vadd.f32 %v132, %v225
    %v227 = vpop.f32.mrf.mxu0
    %v228 = vadd.f32 %v128, %v227
    %v229 = vpop.f32.mrf.mxu0
    %v230 = vadd.f32 %v132, %v229
    %231 = vmatprep.mubr.bf16.mxu0 0
    %232 = vmatmul.mubr.bf16.gmra.mxu0 %v181
    %v233 = vpop.f32.mrf.mxu0
    %v234 = vadd.f32 %v128, %v233
    %v235 = vpop.f32.mrf.mxu0
    %v236 = vadd.f32 %v132, %v235
    %v237 = vpop.f32.mrf.mxu0
    %v238 = vadd.f32 %v128, %v237
    %v239 = vpop.f32.mrf.mxu0
    %v240 = vadd.f32 %v132, %v239
    %241 = vmatprep.mubr.bf16.mxu0 0
    %242 = vmatmul.mubr.bf16.gmra.mxu0 %v184
    %v243 = vpop.f32.mrf.mxu0
    %v244 = vadd.f32 %v128, %v243
    %v245 = vpop.f32.mrf.mxu0
    %v246 = vadd.f32 %v132, %v245
    %v247 = vpop.f32.mrf.mxu0
    %v248 = vadd.f32 %v128, %v247
    %v249 = vpop.f32.mrf.mxu0
    %v250 = vadd.f32 %v132, %v249
    %251 = vmatprep.mubr.bf16.mxu0 0
    %252 = vmatmul.mubr.bf16.gmra.mxu0 %v187
    %v253 = vpop.f32.mrf.mxu0
    %v254 = vadd.f32 %v128, %v253
    %v255 = vpop.f32.mrf.mxu0
    %v256 = vadd.f32 %v132, %v255
    %v257 = vpop.f32.mrf.mxu0
    %v258 = vadd.f32 %v128, %v257
    %v259 = vpop.f32.mrf.mxu0
    %v260 = vadd.f32 %v132, %v259
    %261 = vdwg.mxu0
    %262 = vmatprep.subr.bf16.mxu0 0
    %263 = vmatpush1.bf16.msra.mxu0 0
    %264 = vmatprep.subr.bf16.mxu0 0
    %265 = vmatpush1.bf16.msra.mxu0 0
    %266 = vmatprep.subr.bf16.mxu0 0
    %267 = vmatpush1.bf16.msra.mxu0 0
    %268 = vmatprep.subr.bf16.mxu0 0
    %269 = vmatpush1.bf16.msra.mxu0 0
    %270 = vmatprep.subr.bf16.mxu0 0
    %271 = vmatpush1.bf16.msra.mxu0 0
    %272 = vmatprep.subr.bf16.mxu0 0
    %273 = vmatpush1.bf16.msra.mxu0 0
    %274 = vmatprep.subr.bf16.mxu0 0
    %275 = vmatpush1.bf16.msra.mxu0 0
    %276 = vmatprep.subr.bf16.mxu0 0
    %277 = vmatpush1.bf16.msra.mxu0 %v172
    %278 = vmatprep.subr.bf16.mxu0 0
    %279 = vmatpush2.bf16.msra.mxu0 0
    %280 = vmatprep.subr.bf16.mxu0 0
    %281 = vmatpush2.bf16.msra.mxu0 0
    %282 = vmatprep.subr.bf16.mxu0 0
    %283 = vmatpush2.bf16.msra.mxu0 0
    %284 = vmatprep.subr.bf16.mxu0 0
    %285 = vmatpush2.bf16.msra.mxu0 0
    %286 = vmatprep.subr.bf16.mxu0 0
    %287 = vmatpush2.bf16.msra.mxu0 0
    %288 = vmatprep.subr.bf16.mxu0 0
    %289 = vmatpush2.bf16.msra.mxu0 0
    %290 = vmatprep.subr.bf16.mxu0 0
    %291 = vmatpush2.bf16.msra.mxu0 0
    %292 = vmatprep.subr.bf16.mxu0 0
    %293 = vmatpush2.bf16.msra.mxu0 0
    %294 = vmatprep.mubr.bf16.mxu0 0
    %295 = vmatmul.mubr.bf16.gmra.mxu0 %v178
    %v296 = vpop.f32.mrf.mxu0
    %v297 = vadd.f32 %v136, %v296
    %v298 = vpop.f32.mrf.mxu0
    %v299 = vpop.f32.mrf.mxu0
    %v300 = vadd.f32 %v136, %v299
    %v301 = vpop.f32.mrf.mxu0
    %302 = vmatprep.mubr.bf16.mxu0 0
    %303 = vmatmul.mubr.bf16.gmra.mxu0 %v181
    %v304 = vpop.f32.mrf.mxu0
    %v305 = vadd.f32 %v136, %v304
    %v306 = vpop.f32.mrf.mxu0
    %v307 = vpop.f32.mrf.mxu0
    %v308 = vadd.f32 %v136, %v307
    %v309 = vpop.f32.mrf.mxu0
    %310 = vmatprep.mubr.bf16.mxu0 0
    %311 = vmatmul.mubr.bf16.gmra.mxu0 %v184
    %v312 = vpop.f32.mrf.mxu0
    %v313 = vadd.f32 %v136, %v312
    %v314 = vpop.f32.mrf.mxu0
    %v315 = vpop.f32.mrf.mxu0
    %v316 = vadd.f32 %v136, %v315
    %v317 = vpop.f32.mrf.mxu0
    %318 = vmatprep.mubr.bf16.mxu0 0
    %319 = vmatmul.mubr.bf16.gmra.mxu0 %v187
    %v320 = vpop.f32.mrf.mxu0
    %v321 = vadd.f32 %v136, %v320
    %v322 = vpop.f32.mrf.mxu0
    %v323 = vpop.f32.mrf.mxu0
    %v324 = vadd.f32 %v136, %v323
    %v325 = vpop.f32.mrf.mxu0
    %326 = vdwg.mxu0
    %327 = vst [vmem:[#allocation2] sm:$0xff] %v224
    %328 = vst [vmem:[#allocation2 + $0x8] sm:$0xff] %v226
    %329 = vst [vmem:[#allocation2 + $0x10] sm:$0xff] %v297
    %330 = vst [vmem:[#allocation2 + $0x18] sm:$0xff] %v228
    %331 = vst [vmem:[#allocation2 + $0x20] sm:$0xff] %v230
    %332 = vst [vmem:[#allocation2 + $0x28] sm:$0xff] %v300
    %333 = vst [vmem:[#allocation2 + $0x30] sm:$0xff] %v234
    %334 = vst [vmem:[#allocation2 + $0x38] sm:$0xff] %v236
    %335 = vst [vmem:[#allocation2 + $0x40] sm:$0xff] %v305
    %336 = vst [vmem:[#allocation2 + $0x48] sm:$0xff] %v238
    %337 = vst [vmem:[#allocation2 + $0x50] sm:$0xff] %v240
    %338 = vst [vmem:[#allocation2 + $0x58] sm:$0xff] %v308
    %339 = vst [vmem:[#allocation2 + $0x60] sm:$0xff] %v244
    %340 = vst [vmem:[#allocation2 + $0x68] sm:$0xff] %v246
    %341 = vst [vmem:[#allocation2 + $0x70] sm:$0xff] %v313
    %342 = vst [vmem:[#allocation2 + $0x78] sm:$0xff] %v248
    %343 = vst [vmem:[#allocation2 + $0x80] sm:$0xff] %v250
    %344 = vst [vmem:[#allocation2 + $0x88] sm:$0xff] %v316
    %345 = vst [vmem:[#allocation2 + $0x90] sm:$0xff] %v254
    %346 = vst [vmem:[#allocation2 + $0x98] sm:$0xff] %v256
    %347 = vst [vmem:[#allocation2 + $0xa0] sm:$0xff] %v321
    %348 = vst [vmem:[#allocation2 + $0xa8] sm:$0xff] %v258
    %349 = vst [vmem:[#allocation2 + $0xb0] sm:$0xff] %v260
    %350 = vst [vmem:[#allocation2 + $0xb8] sm:$0xff] %v324
    %v351 = vld [vmem:[#allocation10 + $0x5] sm:$0x1]
    %v352 = vlaneseq
    %v353 = vshrl.u32 %v352, 7
    %v354 = vsub.s32 0, %v353
    %v355 = vrot.slane %v351, %v354
    %v356 = vld [vmem:[#allocation9] sm:$0xff]
    %v357 = vld [vmem:[#allocation9 + $0x8] sm:$0xf]
    %v358 = vld [vmem:[#allocation9 + $0xc] sm:$0xff]
    %v359 = vld [vmem:[#allocation9 + $0x14] sm:$0xf]
    %v360 = vld [vmem:[#allocation9 + $0x18] sm:$0xff]
    %v361 = vld [vmem:[#allocation9 + $0x20] sm:$0xf]
    %v362 = vld [vmem:[#allocation9 + $0x24] sm:$0xff]
    %v363 = vld [vmem:[#allocation9 + $0x2c] sm:$0xf]
    %v364 = vld [vmem:[#allocation9 + $0x30] sm:$0xff]
    %v365 = vld [vmem:[#allocation9 + $0x38] sm:$0xf]
    %v366 = vld [vmem:[#allocation9 + $0x3c] sm:$0xff]
    %v367 = vld [vmem:[#allocation9 + $0x44] sm:$0xf]
    %v368 = vld [vmem:[#allocation9 + $0x48] sm:$0xff]
    %v369 = vld [vmem:[#allocation9 + $0x50] sm:$0xf]
    %v370 = vld [vmem:[#allocation9 + $0x54] sm:$0xff]
    %v371 = vld [vmem:[#allocation9 + $0x5c] sm:$0xf]
    %v372 = vld [vmem:[#allocation9 + $0x60] sm:$0xff]
    %v373 = vld [vmem:[#allocation9 + $0x68] sm:$0xf]
    %v374 = vld [vmem:[#allocation9 + $0x6c] sm:$0xff]
    %v375 = vld [vmem:[#allocation9 + $0x74] sm:$0xf]
    %v376 = vld [vmem:[#allocation9 + $0x78] sm:$0xff]
    %v377 = vld [vmem:[#allocation9 + $0x80] sm:$0xf]
    %v378 = vld [vmem:[#allocation9 + $0x84] sm:$0xff]
    %v379 = vld [vmem:[#allocation9 + $0x8c] sm:$0xf]
    %v380 = vld [vmem:[#allocation9 + $0x90] sm:$0xff]
    %v381 = vld [vmem:[#allocation9 + $0x98] sm:$0xf]
    %v382 = vld [vmem:[#allocation9 + $0x9c] sm:$0xff]
    %v383 = vld [vmem:[#allocation9 + $0xa4] sm:$0xf]
    %v384 = vld [vmem:[#allocation9 + $0xa8] sm:$0xff]
    %v385 = vld [vmem:[#allocation9 + $0xb0] sm:$0xf]
    %v386 = vld [vmem:[#allocation9 + $0xb4] sm:$0xff]
    %v387 = vld [vmem:[#allocation9 + $0xbc] sm:$0xf]
    %v420 = vunpack.c.l.b16 %v356
    %v421 = vunpack.c.h.b16 %v356
    %v422 = vunpack.c.l.b16 %v357
    %v423 = vunpack.c.l.b16 %v358
    %v424 = vunpack.c.h.b16 %v358
    %v425 = vunpack.c.l.b16 %v359
    %v426 = vunpack.c.l.b16 %v360
    %v427 = vunpack.c.h.b16 %v360
    %v428 = vunpack.c.l.b16 %v361
    %v429 = vunpack.c.l.b16 %v362
    %v430 = vunpack.c.h.b16 %v362
    %v431 = vunpack.c.l.b16 %v363
    %v432 = vunpack.c.l.b16 %v364
    %v433 = vunpack.c.h.b16 %v364
    %v434 = vunpack.c.l.b16 %v365
    %v435 = vunpack.c.l.b16 %v366
    %v436 = vunpack.c.h.b16 %v366
    %v437 = vunpack.c.l.b16 %v367
    %v438 = vunpack.c.l.b16 %v368
    %v439 = vunpack.c.h.b16 %v368
    %v440 = vunpack.c.l.b16 %v369
    %v441 = vunpack.c.l.b16 %v370
    %v442 = vunpack.c.h.b16 %v370
    %v443 = vunpack.c.l.b16 %v371
    %v444 = vunpack.c.l.b16 %v372
    %v445 = vunpack.c.h.b16 %v372
    %v446 = vunpack.c.l.b16 %v373
    %v447 = vunpack.c.l.b16 %v374
    %v448 = vunpack.c.h.b16 %v374
    %v449 = vunpack.c.l.b16 %v375
    %v450 = vunpack.c.l.b16 %v376
    %v451 = vunpack.c.h.b16 %v376
    %v452 = vunpack.c.l.b16 %v377
    %v453 = vunpack.c.l.b16 %v378
    %v454 = vunpack.c.h.b16 %v378
    %v455 = vunpack.c.l.b16 %v379
    %v456 = vunpack.c.l.b16 %v380
    %v457 = vunpack.c.h.b16 %v380
    %v458 = vunpack.c.l.b16 %v381
    %v459 = vunpack.c.l.b16 %v382
    %v460 = vunpack.c.h.b16 %v382
    %v461 = vunpack.c.l.b16 %v383
    %v462 = vunpack.c.l.b16 %v384
    %v463 = vunpack.c.h.b16 %v384
    %v464 = vunpack.c.l.b16 %v385
    %v465 = vunpack.c.l.b16 %v386
    %v466 = vunpack.c.h.b16 %v386
    %v467 = vunpack.c.l.b16 %v387
    %v468 = vpack.c.b16 %v423, %v420
    %v469 = vpack.c.b16 %v424, %v421
    %v470 = vpack.c.b16 %v425, %v422
    %v471 = vpack.c.b16 %v429, %v426
    %v472 = vpack.c.b16 %v430, %v427
    %v473 = vpack.c.b16 %v431, %v428
    %v474 = vpack.c.b16 %v435, %v432
    %v475 = vpack.c.b16 %v436, %v433
    %v476 = vpack.c.b16 %v437, %v434
    %v477 = vpack.c.b16 %v441, %v438
    %v478 = vpack.c.b16 %v442, %v439
    %v479 = vpack.c.b16 %v443, %v440
    %v480 = vpack.c.b16 %v447, %v444
    %v481 = vpack.c.b16 %v448, %v445
    %v482 = vpack.c.b16 %v449, %v446
    %v483 = vpack.c.b16 %v453, %v450
    %v484 = vpack.c.b16 %v454, %v451
    %v485 = vpack.c.b16 %v455, %v452
    %v486 = vpack.c.b16 %v459, %v456
    %v487 = vpack.c.b16 %v460, %v457
    %v488 = vpack.c.b16 %v461, %v458
    %v489 = vpack.c.b16 %v465, %v462
    %v490 = vpack.c.b16 %v466, %v463
    %v491 = vpack.c.b16 %v467, %v464
    %516 = vmatprep.subr.bf16.mxu0 %v490
    %517 = vmatpush1.bf16.msra.mxu0 %v489
    %518 = vmatprep.subr.bf16.mxu0 %v487
    %519 = vmatpush1.bf16.msra.mxu0 %v486
    %520 = vmatprep.subr.bf16.mxu0 %v484
    %521 = vmatpush1.bf16.msra.mxu0 %v483
    %522 = vmatprep.subr.bf16.mxu0 %v481
    %523 = vmatpush1.bf16.msra.mxu0 %v480
    %524 = vmatprep.subr.bf16.mxu0 %v478
    %525 = vmatpush1.bf16.msra.mxu0 %v477
    %526 = vmatprep.subr.bf16.mxu0 %v475
    %527 = vmatpush1.bf16.msra.mxu0 %v474
    %528 = vmatprep.subr.bf16.mxu0 %v472
    %529 = vmatpush1.bf16.msra.mxu0 %v471
    %530 = vmatprep.subr.bf16.mxu0 %v469
    %531 = vmatpush1.bf16.msra.mxu0 %v468
    %532 = vmatprep.subr.bf16.mxu0 0
    %533 = vmatpush2.bf16.msra.mxu0 0
    %534 = vmatprep.subr.bf16.mxu0 0
    %535 = vmatpush2.bf16.msra.mxu0 0
    %536 = vmatprep.subr.bf16.mxu0 0
    %537 = vmatpush2.bf16.msra.mxu0 0
    %538 = vmatprep.subr.bf16.mxu0 0
    %539 = vmatpush2.bf16.msra.mxu0 0
    %540 = vmatprep.subr.bf16.mxu0 0
    %541 = vmatpush2.bf16.msra.mxu0 0
    %542 = vmatprep.subr.bf16.mxu0 0
    %543 = vmatpush2.bf16.msra.mxu0 0
    %544 = vmatprep.subr.bf16.mxu0 0
    %545 = vmatpush2.bf16.msra.mxu0 0
    %546 = vmatprep.subr.bf16.mxu0 0
    %547 = vmatpush2.bf16.msra.mxu0 0
    %548 = vmatprep.mubr.bf16.mxu0 0
    %549 = vmatmul.mubr.bf16.gmra.mxu0 0
    %v550 = vpop.f32.mrf.mxu0
    %v551 = vadd.f32 0.0, %v550
    %v552 = vpop.f32.mrf.mxu0
    %v553 = vadd.f32 0.0, %v552
    %v554 = vpop.f32.mrf.mxu0
    %v555 = vpop.f32.mrf.mxu0
    %556 = vdwg.mxu0
    %557 = vmatprep.subr.bf16.mxu0 0
    %558 = vmatpush1.bf16.msra.mxu0 %v491
    %559 = vmatprep.subr.bf16.mxu0 0
    %560 = vmatpush1.bf16.msra.mxu0 %v488
    %561 = vmatprep.subr.bf16.mxu0 0
    %562 = vmatpush1.bf16.msra.mxu0 %v485
    %563 = vmatprep.subr.bf16.mxu0 0
    %564 = vmatpush1.bf16.msra.mxu0 %v482
    %565 = vmatprep.subr.bf16.mxu0 0
    %566 = vmatpush1.bf16.msra.mxu0 %v479
    %567 = vmatprep.subr.bf16.mxu0 0
    %568 = vmatpush1.bf16.msra.mxu0 %v476
    %569 = vmatprep.subr.bf16.mxu0 0
    %570 = vmatpush1.bf16.msra.mxu0 %v473
    %571 = vmatprep.subr.bf16.mxu0 0
    %572 = vmatpush1.bf16.msra.mxu0 %v470
    %573 = vmatprep.subr.bf16.mxu0 0
    %574 = vmatpush2.bf16.msra.mxu0 0
    %575 = vmatprep.subr.bf16.mxu0 0
    %576 = vmatpush2.bf16.msra.mxu0 0
    %577 = vmatprep.subr.bf16.mxu0 0
    %578 = vmatpush2.bf16.msra.mxu0 0
    %579 = vmatprep.subr.bf16.mxu0 0
    %580 = vmatpush2.bf16.msra.mxu0 0
    %581 = vmatprep.subr.bf16.mxu0 0
    %582 = vmatpush2.bf16.msra.mxu0 0
    %583 = vmatprep.subr.bf16.mxu0 0
    %584 = vmatpush2.bf16.msra.mxu0 0
    %585 = vmatprep.subr.bf16.mxu0 0
    %586 = vmatpush2.bf16.msra.mxu0 0
    %587 = vmatprep.subr.bf16.mxu0 0
    %588 = vmatpush2.bf16.msra.mxu0 0
    %589 = vmatprep.mubr.bf16.mxu0 0
    %590 = vmatmul.mubr.bf16.gmra.mxu0 0
    %v591 = vpop.f32.mrf.mxu0
    %v592 = vadd.f32 0.0, %v591
    %v593 = vpop.f32.mrf.mxu0
    %v594 = vpop.f32.mrf.mxu0
    %v595 = vpop.f32.mrf.mxu0
    %596 = vdwg.mxu0
    %v597 = vld [vmem:[#allocation2] sm:$0xff]
    %v598 = vld [vmem:[#allocation2 + $0x8] sm:$0xff]
    %v599 = vld [vmem:[#allocation2 + $0x10] sm:$0xff]
    %v600 = vadd.f32 %v597, %v551
    %v601 = vxor.u32 %v600, 2147483648
    %v602 = vmul.f32 %v601, 1.442695
    %v603 = vpow.pop %v602
    %v604 = vadd.f32 %v603, 1.0
    %v605 = vrcp.pop %v604
    %v606 = vmul.f32 1.0, %v605
    %v607 = vadd.f32 %v598, %v553
    %v608 = vxor.u32 %v607, 2147483648
    %v609 = vmul.f32 %v608, 1.442695
    %v610 = vpow.pop %v609
    %v611 = vadd.f32 %v610, 1.0
    %v612 = vrcp.pop %v611
    %v613 = vmul.f32 1.0, %v612
    %v614 = vadd.f32 %v592, %v355
    %v615 = vmul.f32 %v606, %v614
    %v616 = vadd.f32 %v599, %v615
    %v617 = vtanh.pop %v616
    %v618 = vsub.f32 0.0, %v617
    %v619 = vmul.f32 %v613, %v618
    %v620 = vadd.f32 %v617, %v619
    %v621 = vpack.c.bf16 %v620, %v620
    %622 = vst [vmem:[#allocation3] sm:$0xf] %v621
    %v623 = vld [vmem:[#allocation9] sm:$0xff]
    %v624 = vld [vmem:[#allocation9 + $0x8] sm:$0xf]
    %v625 = vld [vmem:[#allocation9 + $0xc] sm:$0xff]
    %v626 = vld [vmem:[#allocation9 + $0x14] sm:$0xf]
    %v627 = vld [vmem:[#allocation9 + $0x18] sm:$0xff]
    %v628 = vld [vmem:[#allocation9 + $0x20] sm:$0xf]
    %v629 = vld [vmem:[#allocation9 + $0x24] sm:$0xff]
    %v630 = vld [vmem:[#allocation9 + $0x2c] sm:$0xf]
    %v631 = vld [vmem:[#allocation9 + $0x30] sm:$0xff]
    %v632 = vld [vmem:[#allocation9 + $0x38] sm:$0xf]
    %v633 = vld [vmem:[#allocation9 + $0x3c] sm:$0xff]
    %v634 = vld [vmem:[#allocation9 + $0x44] sm:$0xf]
    %v635 = vld [vmem:[#allocation9 + $0x48] sm:$0xff]
    %v636 = vld [vmem:[#allocation9 + $0x50] sm:$0xf]
    %v637 = vld [vmem:[#allocation9 + $0x54] sm:$0xff]
    %v638 = vld [vmem:[#allocation9 + $0x5c] sm:$0xf]
    %v639 = vld [vmem:[#allocation9 + $0x60] sm:$0xff]
    %v640 = vld [vmem:[#allocation9 + $0x68] sm:$0xf]
    %v641 = vld [vmem:[#allocation9 + $0x6c] sm:$0xff]
    %v642 = vld [vmem:[#allocation9 + $0x74] sm:$0xf]
    %v643 = vld [vmem:[#allocation9 + $0x78] sm:$0xff]
    %v644 = vld [vmem:[#allocation9 + $0x80] sm:$0xf]
    %v645 = vld [vmem:[#allocation9 + $0x84] sm:$0xff]
    %v646 = vld [vmem:[#allocation9 + $0x8c] sm:$0xf]
    %v647 = vld [vmem:[#allocation9 + $0x90] sm:$0xff]
    %v648 = vld [vmem:[#allocation9 + $0x98] sm:$0xf]
    %v649 = vld [vmem:[#allocation9 + $0x9c] sm:$0xff]
    %v650 = vld [vmem:[#allocation9 + $0xa4] sm:$0xf]
    %v651 = vld [vmem:[#allocation9 + $0xa8] sm:$0xff]
    %v652 = vld [vmem:[#allocation9 + $0xb0] sm:$0xf]
    %v653 = vld [vmem:[#allocation9 + $0xb4] sm:$0xff]
    %v654 = vld [vmem:[#allocation9 + $0xbc] sm:$0xf]
    %v687 = vunpack.c.l.b16 %v623
    %v688 = vunpack.c.h.b16 %v623
    %v689 = vunpack.c.l.b16 %v624
    %v690 = vunpack.c.l.b16 %v625
    %v691 = vunpack.c.h.b16 %v625
    %v692 = vunpack.c.l.b16 %v626
    %v693 = vunpack.c.l.b16 %v627
    %v694 = vunpack.c.h.b16 %v627
    %v695 = vunpack.c.l.b16 %v628
    %v696 = vunpack.c.l.b16 %v629
    %v697 = vunpack.c.h.b16 %v629
    %v698 = vunpack.c.l.b16 %v630
    %v699 = vunpack.c.l.b16 %v631
    %v700 = vunpack.c.h.b16 %v631
    %v701 = vunpack.c.l.b16 %v632
    %v702 = vunpack.c.l.b16 %v633
    %v703 = vunpack.c.h.b16 %v633
    %v704 = vunpack.c.l.b16 %v634
    %v705 = vunpack.c.l.b16 %v635
    %v706 = vunpack.c.h.b16 %v635
    %v707 = vunpack.c.l.b16 %v636
    %v708 = vunpack.c.l.b16 %v637
    %v709 = vunpack.c.h.b16 %v637
    %v710 = vunpack.c.l.b16 %v638
    %v711 = vunpack.c.l.b16 %v639
    %v712 = vunpack.c.h.b16 %v639
    %v713 = vunpack.c.l.b16 %v640
    %v714 = vunpack.c.l.b16 %v641
    %v715 = vunpack.c.h.b16 %v641
    %v716 = vunpack.c.l.b16 %v642
    %v717 = vunpack.c.l.b16 %v643
    %v718 = vunpack.c.h.b16 %v643
    %v719 = vunpack.c.l.b16 %v644
    %v720 = vunpack.c.l.b16 %v645
    %v721 = vunpack.c.h.b16 %v645
    %v722 = vunpack.c.l.b16 %v646
    %v723 = vunpack.c.l.b16 %v647
    %v724 = vunpack.c.h.b16 %v647
    %v725 = vunpack.c.l.b16 %v648
    %v726 = vunpack.c.l.b16 %v649
    %v727 = vunpack.c.h.b16 %v649
    %v728 = vunpack.c.l.b16 %v650
    %v729 = vunpack.c.l.b16 %v651
    %v730 = vunpack.c.h.b16 %v651
    %v731 = vunpack.c.l.b16 %v652
    %v732 = vunpack.c.l.b16 %v653
    %v733 = vunpack.c.h.b16 %v653
    %v734 = vunpack.c.l.b16 %v654
    %v735 = vpack.c.b16 %v690, %v687
    %v736 = vpack.c.b16 %v691, %v688
    %v737 = vpack.c.b16 %v692, %v689
    %v738 = vpack.c.b16 %v696, %v693
    %v739 = vpack.c.b16 %v697, %v694
    %v740 = vpack.c.b16 %v698, %v695
    %v741 = vpack.c.b16 %v702, %v699
    %v742 = vpack.c.b16 %v703, %v700
    %v743 = vpack.c.b16 %v704, %v701
    %v744 = vpack.c.b16 %v708, %v705
    %v745 = vpack.c.b16 %v709, %v706
    %v746 = vpack.c.b16 %v710, %v707
    %v747 = vpack.c.b16 %v714, %v711
    %v748 = vpack.c.b16 %v715, %v712
    %v749 = vpack.c.b16 %v716, %v713
    %v750 = vpack.c.b16 %v720, %v717
    %v751 = vpack.c.b16 %v721, %v718
    %v752 = vpack.c.b16 %v722, %v719
    %v753 = vpack.c.b16 %v726, %v723
    %v754 = vpack.c.b16 %v727, %v724
    %v755 = vpack.c.b16 %v728, %v725
    %v756 = vpack.c.b16 %v732, %v729
    %v757 = vpack.c.b16 %v733, %v730
    %v758 = vpack.c.b16 %v734, %v731
    %783 = vmatprep.subr.bf16.mxu0 %v757
    %784 = vmatpush1.bf16.msra.mxu0 %v756
    %785 = vmatprep.subr.bf16.mxu0 %v754
    %786 = vmatpush1.bf16.msra.mxu0 %v753
    %787 = vmatprep.subr.bf16.mxu0 %v751
    %788 = vmatpush1.bf16.msra.mxu0 %v750
    %789 = vmatprep.subr.bf16.mxu0 %v748
    %790 = vmatpush1.bf16.msra.mxu0 %v747
    %791 = vmatprep.subr.bf16.mxu0 %v745
    %792 = vmatpush1.bf16.msra.mxu0 %v744
    %793 = vmatprep.subr.bf16.mxu0 %v742
    %794 = vmatpush1.bf16.msra.mxu0 %v741
    %795 = vmatprep.subr.bf16.mxu0 %v739
    %796 = vmatpush1.bf16.msra.mxu0 %v738
    %797 = vmatprep.subr.bf16.mxu0 %v736
    %798 = vmatpush1.bf16.msra.mxu0 %v735
    %799 = vmatprep.subr.bf16.mxu0 0
    %800 = vmatpush2.bf16.msra.mxu0 0
    %801 = vmatprep.subr.bf16.mxu0 0
    %802 = vmatpush2.bf16.msra.mxu0 0
    %803 = vmatprep.subr.bf16.mxu0 0
    %804 = vmatpush2.bf16.msra.mxu0 0
    %805 = vmatprep.subr.bf16.mxu0 0
    %806 = vmatpush2.bf16.msra.mxu0 0
    %807 = vmatprep.subr.bf16.mxu0 0
    %808 = vmatpush2.bf16.msra.mxu0 0
    %809 = vmatprep.subr.bf16.mxu0 0
    %810 = vmatpush2.bf16.msra.mxu0 0
    %811 = vmatprep.subr.bf16.mxu0 0
    %812 = vmatpush2.bf16.msra.mxu0 0
    %813 = vmatprep.subr.bf16.mxu0 0
    %814 = vmatpush2.bf16.msra.mxu0 0
    %815 = vmatprep.mubr.bf16.mxu0 0
    %816 = vmatmul.mubr.bf16.gmra.mxu0 %v621
    %v817 = vpop.f32.mrf.mxu0
    %v818 = vadd.f32 0.0, %v817
    %v819 = vpop.f32.mrf.mxu0
    %v820 = vadd.f32 0.0, %v819
    %v821 = vpop.f32.mrf.mxu0
    %v822 = vpop.f32.mrf.mxu0
    %823 = vdwg.mxu0
    %824 = vmatprep.subr.bf16.mxu0 0
    %825 = vmatpush1.bf16.msra.mxu0 %v758
    %826 = vmatprep.subr.bf16.mxu0 0
    %827 = vmatpush1.bf16.msra.mxu0 %v755
    %828 = vmatprep.subr.bf16.mxu0 0
    %829 = vmatpush1.bf16.msra.mxu0 %v752
    %830 = vmatprep.subr.bf16.mxu0 0
    %831 = vmatpush1.bf16.msra.mxu0 %v749
    %832 = vmatprep.subr.bf16.mxu0 0
    %833 = vmatpush1.bf16.msra.mxu0 %v746
    %834 = vmatprep.subr.bf16.mxu0 0
    %835 = vmatpush1.bf16.msra.mxu0 %v743
    %836 = vmatprep.subr.bf16.mxu0 0
    %837 = vmatpush1.bf16.msra.mxu0 %v740
    %838 = vmatprep.subr.bf16.mxu0 0
    %839 = vmatpush1.bf16.msra.mxu0 %v737
    %840 = vmatprep.subr.bf16.mxu0 0
    %841 = vmatpush2.bf16.msra.mxu0 0
    %842 = vmatprep.subr.bf16.mxu0 0
    %843 = vmatpush2.bf16.msra.mxu0 0
    %844 = vmatprep.subr.bf16.mxu0 0
    %845 = vmatpush2.bf16.msra.mxu0 0
    %846 = vmatprep.subr.bf16.mxu0 0
    %847 = vmatpush2.bf16.msra.mxu0 0
    %848 = vmatprep.subr.bf16.mxu0 0
    %849 = vmatpush2.bf16.msra.mxu0 0
    %850 = vmatprep.subr.bf16.mxu0 0
    %851 = vmatpush2.bf16.msra.mxu0 0
    %852 = vmatprep.subr.bf16.mxu0 0
    %853 = vmatpush2.bf16.msra.mxu0 0
    %854 = vmatprep.subr.bf16.mxu0 0
    %855 = vmatpush2.bf16.msra.mxu0 0
    %856 = vmatprep.mubr.bf16.mxu0 0
    %857 = vmatmul.mubr.bf16.gmra.mxu0 %v621
    %v858 = vpop.f32.mrf.mxu0
    %v859 = vadd.f32 0.0, %v858
    %v860 = vpop.f32.mrf.mxu0
    %v861 = vpop.f32.mrf.mxu0
    %v862 = vpop.f32.mrf.mxu0
    %863 = vdwg.mxu0
    %s864 = scalar_lea.vmem [#allocation2], 24
    %v865 = vld [vmem:[%s864] sm:$0xff]
    %v866 = vld [vmem:[%s864 + $0x8] sm:$0xff]
    %v867 = vld [vmem:[%s864 + $0x10] sm:$0xff]
    %v868 = vadd.f32 %v865, %v818
    %v869 = vxor.u32 %v868, 2147483648
    %v870 = vmul.f32 %v869, 1.442695
    %v871 = vpow.pop %v870
    %v872 = vadd.f32 %v871, 1.0
    %v873 = vrcp.pop %v872
    %v874 = vmul.f32 1.0, %v873
    %v875 = vadd.f32 %v866, %v820
    %v876 = vxor.u32 %v875, 2147483648
    %v877 = vmul.f32 %v876, 1.442695
    %v878 = vpow.pop %v877
    %v879 = vadd.f32 %v878, 1.0
    %v880 = vrcp.pop %v879
    %v881 = vmul.f32 1.0, %v880
    %v882 = vadd.f32 %v859, %v355
    %v883 = vmul.f32 %v874, %v882
    %v884 = vadd.f32 %v867, %v883
    %v885 = vtanh.pop %v884
    %v886 = vsub.f32 %v620, %v885
    %v887 = vmul.f32 %v881, %v886
    %v888 = vadd.f32 %v885, %v887
    %v889 = vpack.c.bf16 %v888, %v888
    %s890 = scalar_lea.vmem [#allocation3], 4
    %891 = vst [vmem:[%s890] sm:$0xf] %v889
    %v892 = vld [vmem:[#allocation9] sm:$0xff]
    %v893 = vld [vmem:[#allocation9 + $0x8] sm:$0xf]
    %v894 = vld [vmem:[#allocation9 + $0xc] sm:$0xff]
    %v895 = vld [vmem:[#allocation9 + $0x14] sm:$0xf]
    %v896 = vld [vmem:[#allocation9 + $0x18] sm:$0xff]
    %v897 = vld [vmem:[#allocation9 + $0x20] sm:$0xf]
    %v898 = vld [vmem:[#allocation9 + $0x24] sm:$0xff]
    %v899 = vld [vmem:[#allocation9 + $0x2c] sm:$0xf]
    %v900 = vld [vmem:[#allocation9 + $0x30] sm:$0xff]
    %v901 = vld [vmem:[#allocation9 + $0x38] sm:$0xf]
    %v902 = vld [vmem:[#allocation9 + $0x3c] sm:$0xff]
    %v903 = vld [vmem:[#allocation9 + $0x44] sm:$0xf]
    %v904 = vld [vmem:[#allocation9 + $0x48] sm:$0xff]
    %v905 = vld [vmem:[#allocation9 + $0x50] sm:$0xf]
    %v906 = vld [vmem:[#allocation9 + $0x54] sm:$0xff]
    %v907 = vld [vmem:[#allocation9 + $0x5c] sm:$0xf]
    %v908 = vld [vmem:[#allocation9 + $0x60] sm:$0xff]
    %v909 = vld [vmem:[#allocation9 + $0x68] sm:$0xf]
    %v910 = vld [vmem:[#allocation9 + $0x6c] sm:$0xff]
    %v911 = vld [vmem:[#allocation9 + $0x74] sm:$0xf]
    %v912 = vld [vmem:[#allocation9 + $0x78] sm:$0xff]
    %v913 = vld [vmem:[#allocation9 + $0x80] sm:$0xf]
    %v914 = vld [vmem:[#allocation9 + $0x84] sm:$0xff]
    %v915 = vld [vmem:[#allocation9 + $0x8c] sm:$0xf]
    %v916 = vld [vmem:[#allocation9 + $0x90] sm:$0xff]
    %v917 = vld [vmem:[#allocation9 + $0x98] sm:$0xf]
    %v918 = vld [vmem:[#allocation9 + $0x9c] sm:$0xff]
    %v919 = vld [vmem:[#allocation9 + $0xa4] sm:$0xf]
    %v920 = vld [vmem:[#allocation9 + $0xa8] sm:$0xff]
    %v921 = vld [vmem:[#allocation9 + $0xb0] sm:$0xf]
    %v922 = vld [vmem:[#allocation9 + $0xb4] sm:$0xff]
    %v923 = vld [vmem:[#allocation9 + $0xbc] sm:$0xf]
    %v956 = vunpack.c.l.b16 %v892
    %v957 = vunpack.c.h.b16 %v892
    %v958 = vunpack.c.l.b16 %v893
    %v959 = vunpack.c.l.b16 %v894
    %v960 = vunpack.c.h.b16 %v894
    %v961 = vunpack.c.l.b16 %v895
    %v962 = vunpack.c.l.b16 %v896
    %v963 = vunpack.c.h.b16 %v896
    %v964 = vunpack.c.l.b16 %v897
    %v965 = vunpack.c.l.b16 %v898
    %v966 = vunpack.c.h.b16 %v898
    %v967 = vunpack.c.l.b16 %v899
    %v968 = vunpack.c.l.b16 %v900
    %v969 = vunpack.c.h.b16 %v900
    %v970 = vunpack.c.l.b16 %v901
    %v971 = vunpack.c.l.b16 %v902
    %v972 = vunpack.c.h.b16 %v902
    %v973 = vunpack.c.l.b16 %v903
    %v974 = vunpack.c.l.b16 %v904
    %v975 = vunpack.c.h.b16 %v904
    %v976 = vunpack.c.l.b16 %v905
    %v977 = vunpack.c.l.b16 %v906
    %v978 = vunpack.c.h.b16 %v906
    %v979 = vunpack.c.l.b16 %v907
    %v980 = vunpack.c.l.b16 %v908
    %v981 = vunpack.c.h.b16 %v908
    %v982 = vunpack.c.l.b16 %v909
    %v983 = vunpack.c.l.b16 %v910
    %v984 = vunpack.c.h.b16 %v910
    %v985 = vunpack.c.l.b16 %v911
    %v986 = vunpack.c.l.b16 %v912
    %v987 = vunpack.c.h.b16 %v912
    %v988 = vunpack.c.l.b16 %v913
    %v989 = vunpack.c.l.b16 %v914
    %v990 = vunpack.c.h.b16 %v914
    %v991 = vunpack.c.l.b16 %v915
    %v992 = vunpack.c.l.b16 %v916
    %v993 = vunpack.c.h.b16 %v916
    %v994 = vunpack.c.l.b16 %v917
    %v995 = vunpack.c.l.b16 %v918
    %v996 = vunpack.c.h.b16 %v918
    %v997 = vunpack.c.l.b16 %v919
    %v998 = vunpack.c.l.b16 %v920
    %v999 = vunpack.c.h.b16 %v920
    %v1000 = vunpack.c.l.b16 %v921
    %v1001 = vunpack.c.l.b16 %v922
    %v1002 = vunpack.c.h.b16 %v922
    %v1003 = vunpack.c.l.b16 %v923
    %v1004 = vpack.c.b16 %v959, %v956
    %v1005 = vpack.c.b16 %v960, %v957
    %v1006 = vpack.c.b16 %v961, %v958
    %v1007 = vpack.c.b16 %v965, %v962
    %v1008 = vpack.c.b16 %v966, %v963
    %v1009 = vpack.c.b16 %v967, %v964
    %v1010 = vpack.c.b16 %v971, %v968
    %v1011 = vpack.c.b16 %v972, %v969
    %v1012 = vpack.c.b16 %v973, %v970
    %v1013 = vpack.c.b16 %v977, %v974
    %v1014 = vpack.c.b16 %v978, %v975
    %v1015 = vpack.c.b16 %v979, %v976
    %v1016 = vpack.c.b16 %v983, %v980
    %v1017 = vpack.c.b16 %v984, %v981
    %v1018 = vpack.c.b16 %v985, %v982
    %v1019 = vpack.c.b16 %v989, %v986
    %v1020 = vpack.c.b16 %v990, %v987
    %v1021 = vpack.c.b16 %v991, %v988
    %v1022 = vpack.c.b16 %v995, %v992
    %v1023 = vpack.c.b16 %v996, %v993
    %v1024 = vpack.c.b16 %v997, %v994
    %v1025 = vpack.c.b16 %v1001, %v998
    %v1026 = vpack.c.b16 %v1002, %v999
    %v1027 = vpack.c.b16 %v1003, %v1000
    %1052 = vmatprep.subr.bf16.mxu0 %v1026
    %1053 = vmatpush1.bf16.msra.mxu0 %v1025
    %1054 = vmatprep.subr.bf16.mxu0 %v1023
    %1055 = vmatpush1.bf16.msra.mxu0 %v1022
    %1056 = vmatprep.subr.bf16.mxu0 %v1020
    %1057 = vmatpush1.bf16.msra.mxu0 %v1019
    %1058 = vmatprep.subr.bf16.mxu0 %v1017
    %1059 = vmatpush1.bf16.msra.mxu0 %v1016
    %1060 = vmatprep.subr.bf16.mxu0 %v1014
    %1061 = vmatpush1.bf16.msra.mxu0 %v1013
    %1062 = vmatprep.subr.bf16.mxu0 %v1011
    %1063 = vmatpush1.bf16.msra.mxu0 %v1010
    %1064 = vmatprep.subr.bf16.mxu0 %v1008
    %1065 = vmatpush1.bf16.msra.mxu0 %v1007
    %1066 = vmatprep.subr.bf16.mxu0 %v1005
    %1067 = vmatpush1.bf16.msra.mxu0 %v1004
    %1068 = vmatprep.subr.bf16.mxu0 0
    %1069 = vmatpush2.bf16.msra.mxu0 0
    %1070 = vmatprep.subr.bf16.mxu0 0
    %1071 = vmatpush2.bf16.msra.mxu0 0
    %1072 = vmatprep.subr.bf16.mxu0 0
    %1073 = vmatpush2.bf16.msra.mxu0 0
    %1074 = vmatprep.subr.bf16.mxu0 0
    %1075 = vmatpush2.bf16.msra.mxu0 0
    %1076 = vmatprep.subr.bf16.mxu0 0
    %1077 = vmatpush2.bf16.msra.mxu0 0
    %1078 = vmatprep.subr.bf16.mxu0 0
    %1079 = vmatpush2.bf16.msra.mxu0 0
    %1080 = vmatprep.subr.bf16.mxu0 0
    %1081 = vmatpush2.bf16.msra.mxu0 0
    %1082 = vmatprep.subr.bf16.mxu0 0
    %1083 = vmatpush2.bf16.msra.mxu0 0
    %1084 = vmatprep.mubr.bf16.mxu0 0
    %1085 = vmatmul.mubr.bf16.gmra.mxu0 %v889
    %v1086 = vpop.f32.mrf.mxu0
    %v1087 = vadd.f32 0.0, %v1086
    %v1088 = vpop.f32.mrf.mxu0
    %v1089 = vadd.f32 0.0, %v1088
    %v1090 = vpop.f32.mrf.mxu0
    %v1091 = vpop.f32.mrf.mxu0
    %1092 = vdwg.mxu0
    %1093 = vmatprep.subr.bf16.mxu0 0
    %1094 = vmatpush1.bf16.msra.mxu0 %v1027
    %1095 = vmatprep.subr.bf16.mxu0 0
    %1096 = vmatpush1.bf16.msra.mxu0 %v1024
    %1097 = vmatprep.subr.bf16.mxu0 0
    %1098 = vmatpush1.bf16.msra.mxu0 %v1021
    %1099 = vmatprep.subr.bf16.mxu0 0
    %1100 = vmatpush1.bf16.msra.mxu0 %v1018
    %1101 = vmatprep.subr.bf16.mxu0 0
    %1102 = vmatpush1.bf16.msra.mxu0 %v1015
    %1103 = vmatprep.subr.bf16.mxu0 0
    %1104 = vmatpush1.bf16.msra.mxu0 %v1012
    %1105 = vmatprep.subr.bf16.mxu0 0
    %1106 = vmatpush1.bf16.msra.mxu0 %v1009
    %1107 = vmatprep.subr.bf16.mxu0 0
    %1108 = vmatpush1.bf16.msra.mxu0 %v1006
    %1109 = vmatprep.subr.bf16.mxu0 0
    %1110 = vmatpush2.bf16.msra.mxu0 0
    %1111 = vmatprep.subr.bf16.mxu0 0
    %1112 = vmatpush2.bf16.msra.mxu0 0
    %1113 = vmatprep.subr.bf16.mxu0 0
    %1114 = vmatpush2.bf16.msra.mxu0 0
    %1115 = vmatprep.subr.bf16.mxu0 0
    %1116 = vmatpush2.bf16.msra.mxu0 0
    %1117 = vmatprep.subr.bf16.mxu0 0
    %1118 = vmatpush2.bf16.msra.mxu0 0
    %1119 = vmatprep.subr.bf16.mxu0 0
    %1120 = vmatpush2.bf16.msra.mxu0 0
    %1121 = vmatprep.subr.bf16.mxu0 0
    %1122 = vmatpush2.bf16.msra.mxu0 0
    %1123 = vmatprep.subr.bf16.mxu0 0
    %1124 = vmatpush2.bf16.msra.mxu0 0
    %1125 = vmatprep.mubr.bf16.mxu0 0
    %1126 = vmatmul.mubr.bf16.gmra.mxu0 %v889
    %v1127 = vpop.f32.mrf.mxu0
    %v1128 = vadd.f32 0.0, %v1127
    %v1129 = vpop.f32.mrf.mxu0
    %v1130 = vpop.f32.mrf.mxu0
    %v1131 = vpop.f32.mrf.mxu0
    %1132 = vdwg.mxu0
    %s1133 = scalar_lea.vmem [#allocation2], 48
    %v1134 = vld [vmem:[%s1133] sm:$0xff]
    %v1135 = vld [vmem:[%s1133 + $0x8] sm:$0xff]
    %v1136 = vld [vmem:[%s1133 + $0x10] sm:$0xff]
    %v1137 = vadd.f32 %v1134, %v1087
    %v1138 = vxor.u32 %v1137, 2147483648
    %v1139 = vmul.f32 %v1138, 1.442695
    %v1140 = vpow.pop %v1139
    %v1141 = vadd.f32 %v1140, 1.0
    %v1142 = vrcp.pop %v1141
    %v1143 = vmul.f32 1.0, %v1142
    %v1144 = vadd.f32 %v1135, %v1089
    %v1145 = vxor.u32 %v1144, 2147483648
    %v1146 = vmul.f32 %v1145, 1.442695
    %v1147 = vpow.pop %v1146
    %v1148 = vadd.f32 %v1147, 1.0
    %v1149 = vrcp.pop %v1148
    %v1150 = vmul.f32 1.0, %v1149
    %v1151 = vadd.f32 %v1128, %v355
    %v1152 = vmul.f32 %v1143, %v1151
    %v1153 = vadd.f32 %v1136, %v1152
    %v1154 = vtanh.pop %v1153
    %v1155 = vsub.f32 %v888, %v1154
    %v1156 = vmul.f32 %v1150, %v1155
    %v1157 = vadd.f32 %v1154, %v1156
    %v1158 = vpack.c.bf16 %v1157, %v1157
    %s1159 = scalar_lea.vmem [#allocation3], 8
    %1160 = vst [vmem:[%s1159] sm:$0xf] %v1158
    %v1161 = vld [vmem:[#allocation9] sm:$0xff]
    %v1162 = vld [vmem:[#allocation9 + $0x8] sm:$0xf]
    %v1163 = vld [vmem:[#allocation9 + $0xc] sm:$0xff]
    %v1164 = vld [vmem:[#allocation9 + $0x14] sm:$0xf]
    %v1165 = vld [vmem:[#allocation9 + $0x18] sm:$0xff]
    %v1166 = vld [vmem:[#allocation9 + $0x20] sm:$0xf]
    %v1167 = vld [vmem:[#allocation9 + $0x24] sm:$0xff]
    %v1168 = vld [vmem:[#allocation9 + $0x2c] sm:$0xf]
    %v1169 = vld [vmem:[#allocation9 + $0x30] sm:$0xff]
    %v1170 = vld [vmem:[#allocation9 + $0x38] sm:$0xf]
    %v1171 = vld [vmem:[#allocation9 + $0x3c] sm:$0xff]
    %v1172 = vld [vmem:[#allocation9 + $0x44] sm:$0xf]
    %v1173 = vld [vmem:[#allocation9 + $0x48] sm:$0xff]
    %v1174 = vld [vmem:[#allocation9 + $0x50] sm:$0xf]
    %v1175 = vld [vmem:[#allocation9 + $0x54] sm:$0xff]
    %v1176 = vld [vmem:[#allocation9 + $0x5c] sm:$0xf]
    %v1177 = vld [vmem:[#allocation9 + $0x60] sm:$0xff]
    %v1178 = vld [vmem:[#allocation9 + $0x68] sm:$0xf]
    %v1179 = vld [vmem:[#allocation9 + $0x6c] sm:$0xff]
    %v1180 = vld [vmem:[#allocation9 + $0x74] sm:$0xf]
    %v1181 = vld [vmem:[#allocation9 + $0x78] sm:$0xff]
    %v1182 = vld [vmem:[#allocation9 + $0x80] sm:$0xf]
    %v1183 = vld [vmem:[#allocation9 + $0x84] sm:$0xff]
    %v1184 = vld [vmem:[#allocation9 + $0x8c] sm:$0xf]
    %v1185 = vld [vmem:[#allocation9 + $0x90] sm:$0xff]
    %v1186 = vld [vmem:[#allocation9 + $0x98] sm:$0xf]
    %v1187 = vld [vmem:[#allocation9 + $0x9c] sm:$0xff]
    %v1188 = vld [vmem:[#allocation9 + $0xa4] sm:$0xf]
    %v1189 = vld [vmem:[#allocation9 + $0xa8] sm:$0xff]
    %v1190 = vld [vmem:[#allocation9 + $0xb0] sm:$0xf]
    %v1191 = vld [vmem:[#allocation9 + $0xb4] sm:$0xff]
    %v1192 = vld [vmem:[#allocation9 + $0xbc] sm:$0xf]
    %v1225 = vunpack.c.l.b16 %v1161
    %v1226 = vunpack.c.h.b16 %v1161
    %v1227 = vunpack.c.l.b16 %v1162
    %v1228 = vunpack.c.l.b16 %v1163
    %v1229 = vunpack.c.h.b16 %v1163
    %v1230 = vunpack.c.l.b16 %v1164
    %v1231 = vunpack.c.l.b16 %v1165
    %v1232 = vunpack.c.h.b16 %v1165
    %v1233 = vunpack.c.l.b16 %v1166
    %v1234 = vunpack.c.l.b16 %v1167
    %v1235 = vunpack.c.h.b16 %v1167
    %v1236 = vunpack.c.l.b16 %v1168
    %v1237 = vunpack.c.l.b16 %v1169
    %v1238 = vunpack.c.h.b16 %v1169
    %v1239 = vunpack.c.l.b16 %v1170
    %v1240 = vunpack.c.l.b16 %v1171
    %v1241 = vunpack.c.h.b16 %v1171
    %v1242 = vunpack.c.l.b16 %v1172
    %v1243 = vunpack.c.l.b16 %v1173
    %v1244 = vunpack.c.h.b16 %v1173
    %v1245 = vunpack.c.l.b16 %v1174
    %v1246 = vunpack.c.l.b16 %v1175
    %v1247 = vunpack.c.h.b16 %v1175
    %v1248 = vunpack.c.l.b16 %v1176
    %v1249 = vunpack.c.l.b16 %v1177
    %v1250 = vunpack.c.h.b16 %v1177
    %v1251 = vunpack.c.l.b16 %v1178
    %v1252 = vunpack.c.l.b16 %v1179
    %v1253 = vunpack.c.h.b16 %v1179
    %v1254 = vunpack.c.l.b16 %v1180
    %v1255 = vunpack.c.l.b16 %v1181
    %v1256 = vunpack.c.h.b16 %v1181
    %v1257 = vunpack.c.l.b16 %v1182
    %v1258 = vunpack.c.l.b16 %v1183
    %v1259 = vunpack.c.h.b16 %v1183
    %v1260 = vunpack.c.l.b16 %v1184
    %v1261 = vunpack.c.l.b16 %v1185
    %v1262 = vunpack.c.h.b16 %v1185
    %v1263 = vunpack.c.l.b16 %v1186
    %v1264 = vunpack.c.l.b16 %v1187
    %v1265 = vunpack.c.h.b16 %v1187
    %v1266 = vunpack.c.l.b16 %v1188
    %v1267 = vunpack.c.l.b16 %v1189
    %v1268 = vunpack.c.h.b16 %v1189
    %v1269 = vunpack.c.l.b16 %v1190
    %v1270 = vunpack.c.l.b16 %v1191
    %v1271 = vunpack.c.h.b16 %v1191
    %v1272 = vunpack.c.l.b16 %v1192
    %v1273 = vpack.c.b16 %v1228, %v1225
    %v1274 = vpack.c.b16 %v1229, %v1226
    %v1275 = vpack.c.b16 %v1230, %v1227
    %v1276 = vpack.c.b16 %v1234, %v1231
    %v1277 = vpack.c.b16 %v1235, %v1232
    %v1278 = vpack.c.b16 %v1236, %v1233
    %v1279 = vpack.c.b16 %v1240, %v1237
    %v1280 = vpack.c.b16 %v1241, %v1238
    %v1281 = vpack.c.b16 %v1242, %v1239
    %v1282 = vpack.c.b16 %v1246, %v1243
    %v1283 = vpack.c.b16 %v1247, %v1244
    %v1284 = vpack.c.b16 %v1248, %v1245
    %v1285 = vpack.c.b16 %v1252, %v1249
    %v1286 = vpack.c.b16 %v1253, %v1250
    %v1287 = vpack.c.b16 %v1254, %v1251
    %v1288 = vpack.c.b16 %v1258, %v1255
    %v1289 = vpack.c.b16 %v1259, %v1256
    %v1290 = vpack.c.b16 %v1260, %v1257
    %v1291 = vpack.c.b16 %v1264, %v1261
    %v1292 = vpack.c.b16 %v1265, %v1262
    %v1293 = vpack.c.b16 %v1266, %v1263
    %v1294 = vpack.c.b16 %v1270, %v1267
    %v1295 = vpack.c.b16 %v1271, %v1268
    %v1296 = vpack.c.b16 %v1272, %v1269
    %1321 = vmatprep.subr.bf16.mxu0 %v1295
    %1322 = vmatpush1.bf16.msra.mxu0 %v1294
    %1323 = vmatprep.subr.bf16.mxu0 %v1292
    %1324 = vmatpush1.bf16.msra.mxu0 %v1291
    %1325 = vmatprep.subr.bf16.mxu0 %v1289
    %1326 = vmatpush1.bf16.msra.mxu0 %v1288
    %1327 = vmatprep.subr.bf16.mxu0 %v1286
    %1328 = vmatpush1.bf16.msra.mxu0 %v1285
    %1329 = vmatprep.subr.bf16.mxu0 %v1283
    %1330 = vmatpush1.bf16.msra.mxu0 %v1282
    %1331 = vmatprep.subr.bf16.mxu0 %v1280
    %1332 = vmatpush1.bf16.msra.mxu0 %v1279
    %1333 = vmatprep.subr.bf16.mxu0 %v1277
    %1334 = vmatpush1.bf16.msra.mxu0 %v1276
    %1335 = vmatprep.subr.bf16.mxu0 %v1274
    %1336 = vmatpush1.bf16.msra.mxu0 %v1273
    %1337 = vmatprep.subr.bf16.mxu0 0
    %1338 = vmatpush2.bf16.msra.mxu0 0
    %1339 = vmatprep.subr.bf16.mxu0 0
    %1340 = vmatpush2.bf16.msra.mxu0 0
    %1341 = vmatprep.subr.bf16.mxu0 0
    %1342 = vmatpush2.bf16.msra.mxu0 0
    %1343 = vmatprep.subr.bf16.mxu0 0
    %1344 = vmatpush2.bf16.msra.mxu0 0
    %1345 = vmatprep.subr.bf16.mxu0 0
    %1346 = vmatpush2.bf16.msra.mxu0 0
    %1347 = vmatprep.subr.bf16.mxu0 0
    %1348 = vmatpush2.bf16.msra.mxu0 0
    %1349 = vmatprep.subr.bf16.mxu0 0
    %1350 = vmatpush2.bf16.msra.mxu0 0
    %1351 = vmatprep.subr.bf16.mxu0 0
    %1352 = vmatpush2.bf16.msra.mxu0 0
    %1353 = vmatprep.mubr.bf16.mxu0 0
    %1354 = vmatmul.mubr.bf16.gmra.mxu0 %v1158
    %v1355 = vpop.f32.mrf.mxu0
    %v1356 = vadd.f32 0.0, %v1355
    %v1357 = vpop.f32.mrf.mxu0
    %v1358 = vadd.f32 0.0, %v1357
    %v1359 = vpop.f32.mrf.mxu0
    %v1360 = vpop.f32.mrf.mxu0
    %1361 = vdwg.mxu0
    %1362 = vmatprep.subr.bf16.mxu0 0
    %1363 = vmatpush1.bf16.msra.mxu0 %v1296
    %1364 = vmatprep.subr.bf16.mxu0 0
    %1365 = vmatpush1.bf16.msra.mxu0 %v1293
    %1366 = vmatprep.subr.bf16.mxu0 0
    %1367 = vmatpush1.bf16.msra.mxu0 %v1290
    %1368 = vmatprep.subr.bf16.mxu0 0
    %1369 = vmatpush1.bf16.msra.mxu0 %v1287
    %1370 = vmatprep.subr.bf16.mxu0 0
    %1371 = vmatpush1.bf16.msra.mxu0 %v1284
    %1372 = vmatprep.subr.bf16.mxu0 0
    %1373 = vmatpush1.bf16.msra.mxu0 %v1281
    %1374 = vmatprep.subr.bf16.mxu0 0
    %1375 = vmatpush1.bf16.msra.mxu0 %v1278
    %1376 = vmatprep.subr.bf16.mxu0 0
    %1377 = vmatpush1.bf16.msra.mxu0 %v1275
    %1378 = vmatprep.subr.bf16.mxu0 0
    %1379 = vmatpush2.bf16.msra.mxu0 0
    %1380 = vmatprep.subr.bf16.mxu0 0
    %1381 = vmatpush2.bf16.msra.mxu0 0
    %1382 = vmatprep.subr.bf16.mxu0 0
    %1383 = vmatpush2.bf16.msra.mxu0 0
    %1384 = vmatprep.subr.bf16.mxu0 0
    %1385 = vmatpush2.bf16.msra.mxu0 0
    %1386 = vmatprep.subr.bf16.mxu0 0
    %1387 = vmatpush2.bf16.msra.mxu0 0
    %1388 = vmatprep.subr.bf16.mxu0 0
    %1389 = vmatpush2.bf16.msra.mxu0 0
    %1390 = vmatprep.subr.bf16.mxu0 0
    %1391 = vmatpush2.bf16.msra.mxu0 0
    %1392 = vmatprep.subr.bf16.mxu0 0
    %1393 = vmatpush2.bf16.msra.mxu0 0
    %1394 = vmatprep.mubr.bf16.mxu0 0
    %1395 = vmatmul.mubr.bf16.gmra.mxu0 %v1158
    %v1396 = vpop.f32.mrf.mxu0
    %v1397 = vadd.f32 0.0, %v1396
    %v1398 = vpop.f32.mrf.mxu0
    %v1399 = vpop.f32.mrf.mxu0
    %v1400 = vpop.f32.mrf.mxu0
    %1401 = vdwg.mxu0
    %s1402 = scalar_lea.vmem [#allocation2], 72
    %v1403 = vld [vmem:[%s1402] sm:$0xff]
    %v1404 = vld [vmem:[%s1402 + $0x8] sm:$0xff]
    %v1405 = vld [vmem:[%s1402 + $0x10] sm:$0xff]
    %v1406 = vadd.f32 %v1403, %v1356
    %v1407 = vxor.u32 %v1406, 2147483648
    %v1408 = vmul.f32 %v1407, 1.442695
    %v1409 = vpow.pop %v1408
    %v1410 = vadd.f32 %v1409, 1.0
    %v1411 = vrcp.pop %v1410
    %v1412 = vmul.f32 1.0, %v1411
    %v1413 = vadd.f32 %v1404, %v1358
    %v1414 = vxor.u32 %v1413, 2147483648
    %v1415 = vmul.f32 %v1414, 1.442695
    %v1416 = vpow.pop %v1415
    %v1417 = vadd.f32 %v1416, 1.0
    %v1418 = vrcp.pop %v1417
    %v1419 = vmul.f32 1.0, %v1418
    %v1420 = vadd.f32 %v1397, %v355
    %v1421 = vmul.f32 %v1412, %v1420
    %v1422 = vadd.f32 %v1405, %v1421
    %v1423 = vtanh.pop %v1422
    %v1424 = vsub.f32 %v1157, %v1423
    %v1425 = vmul.f32 %v1419, %v1424
    %v1426 = vadd.f32 %v1423, %v1425
    %v1427 = vpack.c.bf16 %v1426, %v1426
    %s1428 = scalar_lea.vmem [#allocation3], 12
    %1429 = vst [vmem:[%s1428] sm:$0xf] %v1427
    %v1430 = vld [vmem:[#allocation9] sm:$0xff]
    %v1431 = vld [vmem:[#allocation9 + $0x8] sm:$0xf]
    %v1432 = vld [vmem:[#allocation9 + $0xc] sm:$0xff]
    %v1433 = vld [vmem:[#allocation9 + $0x14] sm:$0xf]
    %v1434 = vld [vmem:[#allocation9 + $0x18] sm:$0xff]
    %v1435 = vld [vmem:[#allocation9 + $0x20] sm:$0xf]
    %v1436 = vld [vmem:[#allocation9 + $0x24] sm:$0xff]
    %v1437 = vld [vmem:[#allocation9 + $0x2c] sm:$0xf]
    %v1438 = vld [vmem:[#allocation9 + $0x30] sm:$0xff]
    %v1439 = vld [vmem:[#allocation9 + $0x38] sm:$0xf]
    %v1440 = vld [vmem:[#allocation9 + $0x3c] sm:$0xff]
    %v1441 = vld [vmem:[#allocation9 + $0x44] sm:$0xf]
    %v1442 = vld [vmem:[#allocation9 + $0x48] sm:$0xff]
    %v1443 = vld [vmem:[#allocation9 + $0x50] sm:$0xf]
    %v1444 = vld [vmem:[#allocation9 + $0x54] sm:$0xff]
    %v1445 = vld [vmem:[#allocation9 + $0x5c] sm:$0xf]
    %v1446 = vld [vmem:[#allocation9 + $0x60] sm:$0xff]
    %v1447 = vld [vmem:[#allocation9 + $0x68] sm:$0xf]
    %v1448 = vld [vmem:[#allocation9 + $0x6c] sm:$0xff]
    %v1449 = vld [vmem:[#allocation9 + $0x74] sm:$0xf]
    %v1450 = vld [vmem:[#allocation9 + $0x78] sm:$0xff]
    %v1451 = vld [vmem:[#allocation9 + $0x80] sm:$0xf]
    %v1452 = vld [vmem:[#allocation9 + $0x84] sm:$0xff]
    %v1453 = vld [vmem:[#allocation9 + $0x8c] sm:$0xf]
    %v1454 = vld [vmem:[#allocation9 + $0x90] sm:$0xff]
    %v1455 = vld [vmem:[#allocation9 + $0x98] sm:$0xf]
    %v1456 = vld [vmem:[#allocation9 + $0x9c] sm:$0xff]
    %v1457 = vld [vmem:[#allocation9 + $0xa4] sm:$0xf]
    %v1458 = vld [vmem:[#allocation9 + $0xa8] sm:$0xff]
    %v1459 = vld [vmem:[#allocation9 + $0xb0] sm:$0xf]
    %v1460 = vld [vmem:[#allocation9 + $0xb4] sm:$0xff]
    %v1461 = vld [vmem:[#allocation9 + $0xbc] sm:$0xf]
    %v1494 = vunpack.c.l.b16 %v1430
    %v1495 = vunpack.c.h.b16 %v1430
    %v1496 = vunpack.c.l.b16 %v1431
    %v1497 = vunpack.c.l.b16 %v1432
    %v1498 = vunpack.c.h.b16 %v1432
    %v1499 = vunpack.c.l.b16 %v1433
    %v1500 = vunpack.c.l.b16 %v1434
    %v1501 = vunpack.c.h.b16 %v1434
    %v1502 = vunpack.c.l.b16 %v1435
    %v1503 = vunpack.c.l.b16 %v1436
    %v1504 = vunpack.c.h.b16 %v1436
    %v1505 = vunpack.c.l.b16 %v1437
    %v1506 = vunpack.c.l.b16 %v1438
    %v1507 = vunpack.c.h.b16 %v1438
    %v1508 = vunpack.c.l.b16 %v1439
    %v1509 = vunpack.c.l.b16 %v1440
    %v1510 = vunpack.c.h.b16 %v1440
    %v1511 = vunpack.c.l.b16 %v1441
    %v1512 = vunpack.c.l.b16 %v1442
    %v1513 = vunpack.c.h.b16 %v1442
    %v1514 = vunpack.c.l.b16 %v1443
    %v1515 = vunpack.c.l.b16 %v1444
    %v1516 = vunpack.c.h.b16 %v1444
    %v1517 = vunpack.c.l.b16 %v1445
    %v1518 = vunpack.c.l.b16 %v1446
    %v1519 = vunpack.c.h.b16 %v1446
    %v1520 = vunpack.c.l.b16 %v1447
    %v1521 = vunpack.c.l.b16 %v1448
    %v1522 = vunpack.c.h.b16 %v1448
    %v1523 = vunpack.c.l.b16 %v1449
    %v1524 = vunpack.c.l.b16 %v1450
    %v1525 = vunpack.c.h.b16 %v1450
    %v1526 = vunpack.c.l.b16 %v1451
    %v1527 = vunpack.c.l.b16 %v1452
    %v1528 = vunpack.c.h.b16 %v1452
    %v1529 = vunpack.c.l.b16 %v1453
    %v1530 = vunpack.c.l.b16 %v1454
    %v1531 = vunpack.c.h.b16 %v1454
    %v1532 = vunpack.c.l.b16 %v1455
    %v1533 = vunpack.c.l.b16 %v1456
    %v1534 = vunpack.c.h.b16 %v1456
    %v1535 = vunpack.c.l.b16 %v1457
    %v1536 = vunpack.c.l.b16 %v1458
    %v1537 = vunpack.c.h.b16 %v1458
    %v1538 = vunpack.c.l.b16 %v1459
    %v1539 = vunpack.c.l.b16 %v1460
    %v1540 = vunpack.c.h.b16 %v1460
    %v1541 = vunpack.c.l.b16 %v1461
    %v1542 = vpack.c.b16 %v1497, %v1494
    %v1543 = vpack.c.b16 %v1498, %v1495
    %v1544 = vpack.c.b16 %v1499, %v1496
    %v1545 = vpack.c.b16 %v1503, %v1500
    %v1546 = vpack.c.b16 %v1504, %v1501
    %v1547 = vpack.c.b16 %v1505, %v1502
    %v1548 = vpack.c.b16 %v1509, %v1506
    %v1549 = vpack.c.b16 %v1510, %v1507
    %v1550 = vpack.c.b16 %v1511, %v1508
    %v1551 = vpack.c.b16 %v1515, %v1512
    %v1552 = vpack.c.b16 %v1516, %v1513
    %v1553 = vpack.c.b16 %v1517, %v1514
    %v1554 = vpack.c.b16 %v1521, %v1518
    %v1555 = vpack.c.b16 %v1522, %v1519
    %v1556 = vpack.c.b16 %v1523, %v1520
    %v1557 = vpack.c.b16 %v1527, %v1524
    %v1558 = vpack.c.b16 %v1528, %v1525
    %v1559 = vpack.c.b16 %v1529, %v1526
    %v1560 = vpack.c.b16 %v1533, %v1530
    %v1561 = vpack.c.b16 %v1534, %v1531
    %v1562 = vpack.c.b16 %v1535, %v1532
    %v1563 = vpack.c.b16 %v1539, %v1536
    %v1564 = vpack.c.b16 %v1540, %v1537
    %v1565 = vpack.c.b16 %v1541, %v1538
    %1590 = vmatprep.subr.bf16.mxu0 %v1564
    %1591 = vmatpush1.bf16.msra.mxu0 %v1563
    %1592 = vmatprep.subr.bf16.mxu0 %v1561
    %1593 = vmatpush1.bf16.msra.mxu0 %v1560
    %1594 = vmatprep.subr.bf16.mxu0 %v1558
    %1595 = vmatpush1.bf16.msra.mxu0 %v1557
    %1596 = vmatprep.subr.bf16.mxu0 %v1555
    %1597 = vmatpush1.bf16.msra.mxu0 %v1554
    %1598 = vmatprep.subr.bf16.mxu0 %v1552
    %1599 = vmatpush1.bf16.msra.mxu0 %v1551
    %1600 = vmatprep.subr.bf16.mxu0 %v1549
    %1601 = vmatpush1.bf16.msra.mxu0 %v1548
    %1602 = vmatprep.subr.bf16.mxu0 %v1546
    %1603 = vmatpush1.bf16.msra.mxu0 %v1545
    %1604 = vmatprep.subr.bf16.mxu0 %v1543
    %1605 = vmatpush1.bf16.msra.mxu0 %v1542
    %1606 = vmatprep.subr.bf16.mxu0 0
    %1607 = vmatpush2.bf16.msra.mxu0 0
    %1608 = vmatprep.subr.bf16.mxu0 0
    %1609 = vmatpush2.bf16.msra.mxu0 0
    %1610 = vmatprep.subr.bf16.mxu0 0
    %1611 = vmatpush2.bf16.msra.mxu0 0
    %1612 = vmatprep.subr.bf16.mxu0 0
    %1613 = vmatpush2.bf16.msra.mxu0 0
    %1614 = vmatprep.subr.bf16.mxu0 0
    %1615 = vmatpush2.bf16.msra.mxu0 0
    %1616 = vmatprep.subr.bf16.mxu0 0
    %1617 = vmatpush2.bf16.msra.mxu0 0
    %1618 = vmatprep.subr.bf16.mxu0 0
    %1619 = vmatpush2.bf16.msra.mxu0 0
    %1620 = vmatprep.subr.bf16.mxu0 0
    %1621 = vmatpush2.bf16.msra.mxu0 0
    %1622 = vmatprep.mubr.bf16.mxu0 0
    %1623 = vmatmul.mubr.bf16.gmra.mxu0 %v1427
    %v1624 = vpop.f32.mrf.mxu0
    %v1625 = vadd.f32 0.0, %v1624
    %v1626 = vpop.f32.mrf.mxu0
    %v1627 = vadd.f32 0.0, %v1626
    %v1628 = vpop.f32.mrf.mxu0
    %v1629 = vpop.f32.mrf.mxu0
    %1630 = vdwg.mxu0
    %1631 = vmatprep.subr.bf16.mxu0 0
    %1632 = vmatpush1.bf16.msra.mxu0 %v1565
    %1633 = vmatprep.subr.bf16.mxu0 0
    %1634 = vmatpush1.bf16.msra.mxu0 %v1562
    %1635 = vmatprep.subr.bf16.mxu0 0
    %1636 = vmatpush1.bf16.msra.mxu0 %v1559
    %1637 = vmatprep.subr.bf16.mxu0 0
    %1638 = vmatpush1.bf16.msra.mxu0 %v1556
    %1639 = vmatprep.subr.bf16.mxu0 0
    %1640 = vmatpush1.bf16.msra.mxu0 %v1553
    %1641 = vmatprep.subr.bf16.mxu0 0
    %1642 = vmatpush1.bf16.msra.mxu0 %v1550
    %1643 = vmatprep.subr.bf16.mxu0 0
    %1644 = vmatpush1.bf16.msra.mxu0 %v1547
    %1645 = vmatprep.subr.bf16.mxu0 0
    %1646 = vmatpush1.bf16.msra.mxu0 %v1544
    %1647 = vmatprep.subr.bf16.mxu0 0
    %1648 = vmatpush2.bf16.msra.mxu0 0
    %1649 = vmatprep.subr.bf16.mxu0 0
    %1650 = vmatpush2.bf16.msra.mxu0 0
    %1651 = vmatprep.subr.bf16.mxu0 0
    %1652 = vmatpush2.bf16.msra.mxu0 0
    %1653 = vmatprep.subr.bf16.mxu0 0
    %1654 = vmatpush2.bf16.msra.mxu0 0
    %1655 = vmatprep.subr.bf16.mxu0 0
    %1656 = vmatpush2.bf16.msra.mxu0 0
    %1657 = vmatprep.subr.bf16.mxu0 0
    %1658 = vmatpush2.bf16.msra.mxu0 0
    %1659 = vmatprep.subr.bf16.mxu0 0
    %1660 = vmatpush2.bf16.msra.mxu0 0
    %1661 = vmatprep.subr.bf16.mxu0 0
    %1662 = vmatpush2.bf16.msra.mxu0 0
    %1663 = vmatprep.mubr.bf16.mxu0 0
    %1664 = vmatmul.mubr.bf16.gmra.mxu0 %v1427
    %v1665 = vpop.f32.mrf.mxu0
    %v1666 = vadd.f32 0.0, %v1665
    %v1667 = vpop.f32.mrf.mxu0
    %v1668 = vpop.f32.mrf.mxu0
    %v1669 = vpop.f32.mrf.mxu0
    %1670 = vdwg.mxu0
    %s1671 = scalar_lea.vmem [#allocation2], 96
    %v1672 = vld [vmem:[%s1671] sm:$0xff]
    %v1673 = vld [vmem:[%s1671 + $0x8] sm:$0xff]
    %v1674 = vld [vmem:[%s1671 + $0x10] sm:$0xff]
    %v1675 = vadd.f32 %v1672, %v1625
    %v1676 = vxor.u32 %v1675, 2147483648
    %v1677 = vmul.f32 %v1676, 1.442695
    %v1678 = vpow.pop %v1677
    %v1679 = vadd.f32 %v1678, 1.0
    %v1680 = vrcp.pop %v1679
    %v1681 = vmul.f32 1.0, %v1680
    %v1682 = vadd.f32 %v1673, %v1627
    %v1683 = vxor.u32 %v1682, 2147483648
    %v1684 = vmul.f32 %v1683, 1.442695
    %v1685 = vpow.pop %v1684
    %v1686 = vadd.f32 %v1685, 1.0
    %v1687 = vrcp.pop %v1686
    %v1688 = vmul.f32 1.0, %v1687
    %v1689 = vadd.f32 %v1666, %v355
    %v1690 = vmul.f32 %v1681, %v1689
    %v1691 = vadd.f32 %v1674, %v1690
    %v1692 = vtanh.pop %v1691
    %v1693 = vsub.f32 %v1426, %v1692
    %v1694 = vmul.f32 %v1688, %v1693
    %v1695 = vadd.f32 %v1692, %v1694
    %v1696 = vpack.c.bf16 %v1695, %v1695
    %s1697 = scalar_lea.vmem [#allocation3], 16
    %1698 = vst [vmem:[%s1697] sm:$0xf] %v1696
    %v1699 = vld [vmem:[#allocation9] sm:$0xff]
    %v1700 = vld [vmem:[#allocation9 + $0x8] sm:$0xf]
    %v1701 = vld [vmem:[#allocation9 + $0xc] sm:$0xff]
    %v1702 = vld [vmem:[#allocation9 + $0x14] sm:$0xf]
    %v1703 = vld [vmem:[#allocation9 + $0x18] sm:$0xff]
    %v1704 = vld [vmem:[#allocation9 + $0x20] sm:$0xf]
    %v1705 = vld [vmem:[#allocation9 + $0x24] sm:$0xff]
    %v1706 = vld [vmem:[#allocation9 + $0x2c] sm:$0xf]
    %v1707 = vld [vmem:[#allocation9 + $0x30] sm:$0xff]
    %v1708 = vld [vmem:[#allocation9 + $0x38] sm:$0xf]
    %v1709 = vld [vmem:[#allocation9 + $0x3c] sm:$0xff]
    %v1710 = vld [vmem:[#allocation9 + $0x44] sm:$0xf]
    %v1711 = vld [vmem:[#allocation9 + $0x48] sm:$0xff]
    %v1712 = vld [vmem:[#allocation9 + $0x50] sm:$0xf]
    %v1713 = vld [vmem:[#allocation9 + $0x54] sm:$0xff]
    %v1714 = vld [vmem:[#allocation9 + $0x5c] sm:$0xf]
    %v1715 = vld [vmem:[#allocation9 + $0x60] sm:$0xff]
    %v1716 = vld [vmem:[#allocation9 + $0x68] sm:$0xf]
    %v1717 = vld [vmem:[#allocation9 + $0x6c] sm:$0xff]
    %v1718 = vld [vmem:[#allocation9 + $0x74] sm:$0xf]
    %v1719 = vld [vmem:[#allocation9 + $0x78] sm:$0xff]
    %v1720 = vld [vmem:[#allocation9 + $0x80] sm:$0xf]
    %v1721 = vld [vmem:[#allocation9 + $0x84] sm:$0xff]
    %v1722 = vld [vmem:[#allocation9 + $0x8c] sm:$0xf]
    %v1723 = vld [vmem:[#allocation9 + $0x90] sm:$0xff]
    %v1724 = vld [vmem:[#allocation9 + $0x98] sm:$0xf]
    %v1725 = vld [vmem:[#allocation9 + $0x9c] sm:$0xff]
    %v1726 = vld [vmem:[#allocation9 + $0xa4] sm:$0xf]
    %v1727 = vld [vmem:[#allocation9 + $0xa8] sm:$0xff]
    %v1728 = vld [vmem:[#allocation9 + $0xb0] sm:$0xf]
    %v1729 = vld [vmem:[#allocation9 + $0xb4] sm:$0xff]
    %v1730 = vld [vmem:[#allocation9 + $0xbc] sm:$0xf]
    %v1763 = vunpack.c.l.b16 %v1699
    %v1764 = vunpack.c.h.b16 %v1699
    %v1765 = vunpack.c.l.b16 %v1700
    %v1766 = vunpack.c.l.b16 %v1701
    %v1767 = vunpack.c.h.b16 %v1701
    %v1768 = vunpack.c.l.b16 %v1702
    %v1769 = vunpack.c.l.b16 %v1703
    %v1770 = vunpack.c.h.b16 %v1703
    %v1771 = vunpack.c.l.b16 %v1704
    %v1772 = vunpack.c.l.b16 %v1705
    %v1773 = vunpack.c.h.b16 %v1705
    %v1774 = vunpack.c.l.b16 %v1706
    %v1775 = vunpack.c.l.b16 %v1707
    %v1776 = vunpack.c.h.b16 %v1707
    %v1777 = vunpack.c.l.b16 %v1708
    %v1778 = vunpack.c.l.b16 %v1709
    %v1779 = vunpack.c.h.b16 %v1709
    %v1780 = vunpack.c.l.b16 %v1710
    %v1781 = vunpack.c.l.b16 %v1711
    %v1782 = vunpack.c.h.b16 %v1711
    %v1783 = vunpack.c.l.b16 %v1712
    %v1784 = vunpack.c.l.b16 %v1713
    %v1785 = vunpack.c.h.b16 %v1713
    %v1786 = vunpack.c.l.b16 %v1714
    %v1787 = vunpack.c.l.b16 %v1715
    %v1788 = vunpack.c.h.b16 %v1715
    %v1789 = vunpack.c.l.b16 %v1716
    %v1790 = vunpack.c.l.b16 %v1717
    %v1791 = vunpack.c.h.b16 %v1717
    %v1792 = vunpack.c.l.b16 %v1718
    %v1793 = vunpack.c.l.b16 %v1719
    %v1794 = vunpack.c.h.b16 %v1719
    %v1795 = vunpack.c.l.b16 %v1720
    %v1796 = vunpack.c.l.b16 %v1721
    %v1797 = vunpack.c.h.b16 %v1721
    %v1798 = vunpack.c.l.b16 %v1722
    %v1799 = vunpack.c.l.b16 %v1723
    %v1800 = vunpack.c.h.b16 %v1723
    %v1801 = vunpack.c.l.b16 %v1724
    %v1802 = vunpack.c.l.b16 %v1725
    %v1803 = vunpack.c.h.b16 %v1725
    %v1804 = vunpack.c.l.b16 %v1726
    %v1805 = vunpack.c.l.b16 %v1727
    %v1806 = vunpack.c.h.b16 %v1727
    %v1807 = vunpack.c.l.b16 %v1728
    %v1808 = vunpack.c.l.b16 %v1729
    %v1809 = vunpack.c.h.b16 %v1729
    %v1810 = vunpack.c.l.b16 %v1730
    %v1811 = vpack.c.b16 %v1766, %v1763
    %v1812 = vpack.c.b16 %v1767, %v1764
    %v1813 = vpack.c.b16 %v1768, %v1765
    %v1814 = vpack.c.b16 %v1772, %v1769
    %v1815 = vpack.c.b16 %v1773, %v1770
    %v1816 = vpack.c.b16 %v1774, %v1771
    %v1817 = vpack.c.b16 %v1778, %v1775
    %v1818 = vpack.c.b16 %v1779, %v1776
    %v1819 = vpack.c.b16 %v1780, %v1777
    %v1820 = vpack.c.b16 %v1784, %v1781
    %v1821 = vpack.c.b16 %v1785, %v1782
    %v1822 = vpack.c.b16 %v1786, %v1783
    %v1823 = vpack.c.b16 %v1790, %v1787
    %v1824 = vpack.c.b16 %v1791, %v1788
    %v1825 = vpack.c.b16 %v1792, %v1789
    %v1826 = vpack.c.b16 %v1796, %v1793
    %v1827 = vpack.c.b16 %v1797, %v1794
    %v1828 = vpack.c.b16 %v1798, %v1795
    %v1829 = vpack.c.b16 %v1802, %v1799
    %v1830 = vpack.c.b16 %v1803, %v1800
    %v1831 = vpack.c.b16 %v1804, %v1801
    %v1832 = vpack.c.b16 %v1808, %v1805
    %v1833 = vpack.c.b16 %v1809, %v1806
    %v1834 = vpack.c.b16 %v1810, %v1807
    %1859 = vmatprep.subr.bf16.mxu0 %v1833
    %1860 = vmatpush1.bf16.msra.mxu0 %v1832
    %1861 = vmatprep.subr.bf16.mxu0 %v1830
    %1862 = vmatpush1.bf16.msra.mxu0 %v1829
    %1863 = vmatprep.subr.bf16.mxu0 %v1827
    %1864 = vmatpush1.bf16.msra.mxu0 %v1826
    %1865 = vmatprep.subr.bf16.mxu0 %v1824
    %1866 = vmatpush1.bf16.msra.mxu0 %v1823
    %1867 = vmatprep.subr.bf16.mxu0 %v1821
    %1868 = vmatpush1.bf16.msra.mxu0 %v1820
    %1869 = vmatprep.subr.bf16.mxu0 %v1818
    %1870 = vmatpush1.bf16.msra.mxu0 %v1817
    %1871 = vmatprep.subr.bf16.mxu0 %v1815
    %1872 = vmatpush1.bf16.msra.mxu0 %v1814
    %1873 = vmatprep.subr.bf16.mxu0 %v1812
    %1874 = vmatpush1.bf16.msra.mxu0 %v1811
    %1875 = vmatprep.subr.bf16.mxu0 0
    %1876 = vmatpush2.bf16.msra.mxu0 0
    %1877 = vmatprep.subr.bf16.mxu0 0
    %1878 = vmatpush2.bf16.msra.mxu0 0
    %1879 = vmatprep.subr.bf16.mxu0 0
    %1880 = vmatpush2.bf16.msra.mxu0 0
    %1881 = vmatprep.subr.bf16.mxu0 0
    %1882 = vmatpush2.bf16.msra.mxu0 0
    %1883 = vmatprep.subr.bf16.mxu0 0
    %1884 = vmatpush2.bf16.msra.mxu0 0
    %1885 = vmatprep.subr.bf16.mxu0 0
    %1886 = vmatpush2.bf16.msra.mxu0 0
    %1887 = vmatprep.subr.bf16.mxu0 0
    %1888 = vmatpush2.bf16.msra.mxu0 0
    %1889 = vmatprep.subr.bf16.mxu0 0
    %1890 = vmatpush2.bf16.msra.mxu0 0
    %1891 = vmatprep.mubr.bf16.mxu0 0
    %1892 = vmatmul.mubr.bf16.gmra.mxu0 %v1696
    %v1893 = vpop.f32.mrf.mxu0
    %v1894 = vadd.f32 0.0, %v1893
    %v1895 = vpop.f32.mrf.mxu0
    %v1896 = vadd.f32 0.0, %v1895
    %v1897 = vpop.f32.mrf.mxu0
    %v1898 = vpop.f32.mrf.mxu0
    %1899 = vdwg.mxu0
    %1900 = vmatprep.subr.bf16.mxu0 0
    %1901 = vmatpush1.bf16.msra.mxu0 %v1834
    %1902 = vmatprep.subr.bf16.mxu0 0
    %1903 = vmatpush1.bf16.msra.mxu0 %v1831
    %1904 = vmatprep.subr.bf16.mxu0 0
    %1905 = vmatpush1.bf16.msra.mxu0 %v1828
    %1906 = vmatprep.subr.bf16.mxu0 0
    %1907 = vmatpush1.bf16.msra.mxu0 %v1825
    %1908 = vmatprep.subr.bf16.mxu0 0
    %1909 = vmatpush1.bf16.msra.mxu0 %v1822
    %1910 = vmatprep.subr.bf16.mxu0 0
    %1911 = vmatpush1.bf16.msra.mxu0 %v1819
    %1912 = vmatprep.subr.bf16.mxu0 0
    %1913 = vmatpush1.bf16.msra.mxu0 %v1816
    %1914 = vmatprep.subr.bf16.mxu0 0
    %1915 = vmatpush1.bf16.msra.mxu0 %v1813
    %1916 = vmatprep.subr.bf16.mxu0 0
    %1917 = vmatpush2.bf16.msra.mxu0 0
    %1918 = vmatprep.subr.bf16.mxu0 0
    %1919 = vmatpush2.bf16.msra.mxu0 0
    %1920 = vmatprep.subr.bf16.mxu0 0
    %1921 = vmatpush2.bf16.msra.mxu0 0
    %1922 = vmatprep.subr.bf16.mxu0 0
    %1923 = vmatpush2.bf16.msra.mxu0 0
    %1924 = vmatprep.subr.bf16.mxu0 0
    %1925 = vmatpush2.bf16.msra.mxu0 0
    %1926 = vmatprep.subr.bf16.mxu0 0
    %1927 = vmatpush2.bf16.msra.mxu0 0
    %1928 = vmatprep.subr.bf16.mxu0 0
    %1929 = vmatpush2.bf16.msra.mxu0 0
    %1930 = vmatprep.subr.bf16.mxu0 0
    %1931 = vmatpush2.bf16.msra.mxu0 0
    %1932 = vmatprep.mubr.bf16.mxu0 0
    %1933 = vmatmul.mubr.bf16.gmra.mxu0 %v1696
    %v1934 = vpop.f32.mrf.mxu0
    %v1935 = vadd.f32 0.0, %v1934
    %v1936 = vpop.f32.mrf.mxu0
    %v1937 = vpop.f32.mrf.mxu0
    %v1938 = vpop.f32.mrf.mxu0
    %1939 = vdwg.mxu0
    %s1940 = scalar_lea.vmem [#allocation2], 120
    %v1941 = vld [vmem:[%s1940] sm:$0xff]
    %v1942 = vld [vmem:[%s1940 + $0x8] sm:$0xff]
    %v1943 = vld [vmem:[%s1940 + $0x10] sm:$0xff]
    %v1944 = vadd.f32 %v1941, %v1894
    %v1945 = vxor.u32 %v1944, 2147483648
    %v1946 = vmul.f32 %v1945, 1.442695
    %v1947 = vpow.pop %v1946
    %v1948 = vadd.f32 %v1947, 1.0
    %v1949 = vrcp.pop %v1948
    %v1950 = vmul.f32 1.0, %v1949
    %v1951 = vadd.f32 %v1942, %v1896
    %v1952 = vxor.u32 %v1951, 2147483648
    %v1953 = vmul.f32 %v1952, 1.442695
    %v1954 = vpow.pop %v1953
    %v1955 = vadd.f32 %v1954, 1.0
    %v1956 = vrcp.pop %v1955
    %v1957 = vmul.f32 1.0, %v1956
    %v1958 = vadd.f32 %v1935, %v355
    %v1959 = vmul.f32 %v1950, %v1958
    %v1960 = vadd.f32 %v1943, %v1959
    %v1961 = vtanh.pop %v1960
    %v1962 = vsub.f32 %v1695, %v1961
    %v1963 = vmul.f32 %v1957, %v1962
    %v1964 = vadd.f32 %v1961, %v1963
    %v1965 = vpack.c.bf16 %v1964, %v1964
    %s1966 = scalar_lea.vmem [#allocation3], 20
    %1967 = vst [vmem:[%s1966] sm:$0xf] %v1965
    %v1968 = vld [vmem:[#allocation9] sm:$0xff]
    %v1969 = vld [vmem:[#allocation9 + $0x8] sm:$0xf]
    %v1970 = vld [vmem:[#allocation9 + $0xc] sm:$0xff]
    %v1971 = vld [vmem:[#allocation9 + $0x14] sm:$0xf]
    %v1972 = vld [vmem:[#allocation9 + $0x18] sm:$0xff]
    %v1973 = vld [vmem:[#allocation9 + $0x20] sm:$0xf]
    %v1974 = vld [vmem:[#allocation9 + $0x24] sm:$0xff]
    %v1975 = vld [vmem:[#allocation9 + $0x2c] sm:$0xf]
    %v1976 = vld [vmem:[#allocation9 + $0x30] sm:$0xff]
    %v1977 = vld [vmem:[#allocation9 + $0x38] sm:$0xf]
    %v1978 = vld [vmem:[#allocation9 + $0x3c] sm:$0xff]
    %v1979 = vld [vmem:[#allocation9 + $0x44] sm:$0xf]
    %v1980 = vld [vmem:[#allocation9 + $0x48] sm:$0xff]
    %v1981 = vld [vmem:[#allocation9 + $0x50] sm:$0xf]
    %v1982 = vld [vmem:[#allocation9 + $0x54] sm:$0xff]
    %v1983 = vld [vmem:[#allocation9 + $0x5c] sm:$0xf]
    %v1984 = vld [vmem:[#allocation9 + $0x60] sm:$0xff]
    %v1985 = vld [vmem:[#allocation9 + $0x68] sm:$0xf]
    %v1986 = vld [vmem:[#allocation9 + $0x6c] sm:$0xff]
    %v1987 = vld [vmem:[#allocation9 + $0x74] sm:$0xf]
    %v1988 = vld [vmem:[#allocation9 + $0x78] sm:$0xff]
    %v1989 = vld [vmem:[#allocation9 + $0x80] sm:$0xf]
    %v1990 = vld [vmem:[#allocation9 + $0x84] sm:$0xff]
    %v1991 = vld [vmem:[#allocation9 + $0x8c] sm:$0xf]
    %v1992 = vld [vmem:[#allocation9 + $0x90] sm:$0xff]
    %v1993 = vld [vmem:[#allocation9 + $0x98] sm:$0xf]
    %v1994 = vld [vmem:[#allocation9 + $0x9c] sm:$0xff]
    %v1995 = vld [vmem:[#allocation9 + $0xa4] sm:$0xf]
    %v1996 = vld [vmem:[#allocation9 + $0xa8] sm:$0xff]
    %v1997 = vld [vmem:[#allocation9 + $0xb0] sm:$0xf]
    %v1998 = vld [vmem:[#allocation9 + $0xb4] sm:$0xff]
    %v1999 = vld [vmem:[#allocation9 + $0xbc] sm:$0xf]
    %v2032 = vunpack.c.l.b16 %v1968
    %v2033 = vunpack.c.h.b16 %v1968
    %v2034 = vunpack.c.l.b16 %v1969
    %v2035 = vunpack.c.l.b16 %v1970
    %v2036 = vunpack.c.h.b16 %v1970
    %v2037 = vunpack.c.l.b16 %v1971
    %v2038 = vunpack.c.l.b16 %v1972
    %v2039 = vunpack.c.h.b16 %v1972
    %v2040 = vunpack.c.l.b16 %v1973
    %v2041 = vunpack.c.l.b16 %v1974
    %v2042 = vunpack.c.h.b16 %v1974
    %v2043 = vunpack.c.l.b16 %v1975
    %v2044 = vunpack.c.l.b16 %v1976
    %v2045 = vunpack.c.h.b16 %v1976
    %v2046 = vunpack.c.l.b16 %v1977
    %v2047 = vunpack.c.l.b16 %v1978
    %v2048 = vunpack.c.h.b16 %v1978
    %v2049 = vunpack.c.l.b16 %v1979
    %v2050 = vunpack.c.l.b16 %v1980
    %v2051 = vunpack.c.h.b16 %v1980
    %v2052 = vunpack.c.l.b16 %v1981
    %v2053 = vunpack.c.l.b16 %v1982
    %v2054 = vunpack.c.h.b16 %v1982
    %v2055 = vunpack.c.l.b16 %v1983
    %v2056 = vunpack.c.l.b16 %v1984
    %v2057 = vunpack.c.h.b16 %v1984
    %v2058 = vunpack.c.l.b16 %v1985
    %v2059 = vunpack.c.l.b16 %v1986
    %v2060 = vunpack.c.h.b16 %v1986
    %v2061 = vunpack.c.l.b16 %v1987
    %v2062 = vunpack.c.l.b16 %v1988
    %v2063 = vunpack.c.h.b16 %v1988
    %v2064 = vunpack.c.l.b16 %v1989
    %v2065 = vunpack.c.l.b16 %v1990
    %v2066 = vunpack.c.h.b16 %v1990
    %v2067 = vunpack.c.l.b16 %v1991
    %v2068 = vunpack.c.l.b16 %v1992
    %v2069 = vunpack.c.h.b16 %v1992
    %v2070 = vunpack.c.l.b16 %v1993
    %v2071 = vunpack.c.l.b16 %v1994
    %v2072 = vunpack.c.h.b16 %v1994
    %v2073 = vunpack.c.l.b16 %v1995
    %v2074 = vunpack.c.l.b16 %v1996
    %v2075 = vunpack.c.h.b16 %v1996
    %v2076 = vunpack.c.l.b16 %v1997
    %v2077 = vunpack.c.l.b16 %v1998
    %v2078 = vunpack.c.h.b16 %v1998
    %v2079 = vunpack.c.l.b16 %v1999
    %v2080 = vpack.c.b16 %v2035, %v2032
    %v2081 = vpack.c.b16 %v2036, %v2033
    %v2082 = vpack.c.b16 %v2037, %v2034
    %v2083 = vpack.c.b16 %v2041, %v2038
    %v2084 = vpack.c.b16 %v2042, %v2039
    %v2085 = vpack.c.b16 %v2043, %v2040
    %v2086 = vpack.c.b16 %v2047, %v2044
    %v2087 = vpack.c.b16 %v2048, %v2045
    %v2088 = vpack.c.b16 %v2049, %v2046
    %v2089 = vpack.c.b16 %v2053, %v2050
    %v2090 = vpack.c.b16 %v2054, %v2051
    %v2091 = vpack.c.b16 %v2055, %v2052
    %v2092 = vpack.c.b16 %v2059, %v2056
    %v2093 = vpack.c.b16 %v2060, %v2057
    %v2094 = vpack.c.b16 %v2061, %v2058
    %v2095 = vpack.c.b16 %v2065, %v2062
    %v2096 = vpack.c.b16 %v2066, %v2063
    %v2097 = vpack.c.b16 %v2067, %v2064
    %v2098 = vpack.c.b16 %v2071, %v2068
    %v2099 = vpack.c.b16 %v2072, %v2069
    %v2100 = vpack.c.b16 %v2073, %v2070
    %v2101 = vpack.c.b16 %v2077, %v2074
    %v2102 = vpack.c.b16 %v2078, %v2075
    %v2103 = vpack.c.b16 %v2079, %v2076
    %2128 = vmatprep.subr.bf16.mxu0 %v2102
    %2129 = vmatpush1.bf16.msra.mxu0 %v2101
    %2130 = vmatprep.subr.bf16.mxu0 %v2099
    %2131 = vmatpush1.bf16.msra.mxu0 %v2098
    %2132 = vmatprep.subr.bf16.mxu0 %v2096
    %2133 = vmatpush1.bf16.msra.mxu0 %v2095
    %2134 = vmatprep.subr.bf16.mxu0 %v2093
    %2135 = vmatpush1.bf16.msra.mxu0 %v2092
    %2136 = vmatprep.subr.bf16.mxu0 %v2090
    %2137 = vmatpush1.bf16.msra.mxu0 %v2089
    %2138 = vmatprep.subr.bf16.mxu0 %v2087
    %2139 = vmatpush1.bf16.msra.mxu0 %v2086
    %2140 = vmatprep.subr.bf16.mxu0 %v2084
    %2141 = vmatpush1.bf16.msra.mxu0 %v2083
    %2142 = vmatprep.subr.bf16.mxu0 %v2081
    %2143 = vmatpush1.bf16.msra.mxu0 %v2080
    %2144 = vmatprep.subr.bf16.mxu0 0
    %2145 = vmatpush2.bf16.msra.mxu0 0
    %2146 = vmatprep.subr.bf16.mxu0 0
    %2147 = vmatpush2.bf16.msra.mxu0 0
    %2148 = vmatprep.subr.bf16.mxu0 0
    %2149 = vmatpush2.bf16.msra.mxu0 0
    %2150 = vmatprep.subr.bf16.mxu0 0
    %2151 = vmatpush2.bf16.msra.mxu0 0
    %2152 = vmatprep.subr.bf16.mxu0 0
    %2153 = vmatpush2.bf16.msra.mxu0 0
    %2154 = vmatprep.subr.bf16.mxu0 0
    %2155 = vmatpush2.bf16.msra.mxu0 0
    %2156 = vmatprep.subr.bf16.mxu0 0
    %2157 = vmatpush2.bf16.msra.mxu0 0
    %2158 = vmatprep.subr.bf16.mxu0 0
    %2159 = vmatpush2.bf16.msra.mxu0 0
    %2160 = vmatprep.mubr.bf16.mxu0 0
    %2161 = vmatmul.mubr.bf16.gmra.mxu0 %v1965
    %v2162 = vpop.f32.mrf.mxu0
    %v2163 = vadd.f32 0.0, %v2162
    %v2164 = vpop.f32.mrf.mxu0
    %v2165 = vadd.f32 0.0, %v2164
    %v2166 = vpop.f32.mrf.mxu0
    %v2167 = vpop.f32.mrf.mxu0
    %2168 = vdwg.mxu0
    %2169 = vmatprep.subr.bf16.mxu0 0
    %2170 = vmatpush1.bf16.msra.mxu0 %v2103
    %2171 = vmatprep.subr.bf16.mxu0 0
    %2172 = vmatpush1.bf16.msra.mxu0 %v2100
    %2173 = vmatprep.subr.bf16.mxu0 0
    %2174 = vmatpush1.bf16.msra.mxu0 %v2097
    %2175 = vmatprep.subr.bf16.mxu0 0
    %2176 = vmatpush1.bf16.msra.mxu0 %v2094
    %2177 = vmatprep.subr.bf16.mxu0 0
    %2178 = vmatpush1.bf16.msra.mxu0 %v2091
    %2179 = vmatprep.subr.bf16.mxu0 0
    %2180 = vmatpush1.bf16.msra.mxu0 %v2088
    %2181 = vmatprep.subr.bf16.mxu0 0
    %2182 = vmatpush1.bf16.msra.mxu0 %v2085
    %2183 = vmatprep.subr.bf16.mxu0 0
    %2184 = vmatpush1.bf16.msra.mxu0 %v2082
    %2185 = vmatprep.subr.bf16.mxu0 0
    %2186 = vmatpush2.bf16.msra.mxu0 0
    %2187 = vmatprep.subr.bf16.mxu0 0
    %2188 = vmatpush2.bf16.msra.mxu0 0
    %2189 = vmatprep.subr.bf16.mxu0 0
    %2190 = vmatpush2.bf16.msra.mxu0 0
    %2191 = vmatprep.subr.bf16.mxu0 0
    %2192 = vmatpush2.bf16.msra.mxu0 0
    %2193 = vmatprep.subr.bf16.mxu0 0
    %2194 = vmatpush2.bf16.msra.mxu0 0
    %2195 = vmatprep.subr.bf16.mxu0 0
    %2196 = vmatpush2.bf16.msra.mxu0 0
    %2197 = vmatprep.subr.bf16.mxu0 0
    %2198 = vmatpush2.bf16.msra.mxu0 0
    %2199 = vmatprep.subr.bf16.mxu0 0
    %2200 = vmatpush2.bf16.msra.mxu0 0
    %2201 = vmatprep.mubr.bf16.mxu0 0
    %2202 = vmatmul.mubr.bf16.gmra.mxu0 %v1965
    %v2203 = vpop.f32.mrf.mxu0
    %v2204 = vadd.f32 0.0, %v2203
    %v2205 = vpop.f32.mrf.mxu0
    %v2206 = vpop.f32.mrf.mxu0
    %v2207 = vpop.f32.mrf.mxu0
    %2208 = vdwg.mxu0
    %s2209 = scalar_lea.vmem [#allocation2], 144
    %v2210 = vld [vmem:[%s2209] sm:$0xff]
    %v2211 = vld [vmem:[%s2209 + $0x8] sm:$0xff]
    %v2212 = vld [vmem:[%s2209 + $0x10] sm:$0xff]
    %v2213 = vadd.f32 %v2210, %v2163
    %v2214 = vxor.u32 %v2213, 2147483648
    %v2215 = vmul.f32 %v2214, 1.442695
    %v2216 = vpow.pop %v2215
    %v2217 = vadd.f32 %v2216, 1.0
    %v2218 = vrcp.pop %v2217
    %v2219 = vmul.f32 1.0, %v2218
    %v2220 = vadd.f32 %v2211, %v2165
    %v2221 = vxor.u32 %v2220, 2147483648
    %v2222 = vmul.f32 %v2221, 1.442695
    %v2223 = vpow.pop %v2222
    %v2224 = vadd.f32 %v2223, 1.0
    %v2225 = vrcp.pop %v2224
    %v2226 = vmul.f32 1.0, %v2225
    %v2227 = vadd.f32 %v2204, %v355
    %v2228 = vmul.f32 %v2219, %v2227
    %v2229 = vadd.f32 %v2212, %v2228
    %v2230 = vtanh.pop %v2229
    %v2231 = vsub.f32 %v1964, %v2230
    %v2232 = vmul.f32 %v2226, %v2231
    %v2233 = vadd.f32 %v2230, %v2232
    %v2234 = vpack.c.bf16 %v2233, %v2233
    %s2235 = scalar_lea.vmem [#allocation3], 24
    %2236 = vst [vmem:[%s2235] sm:$0xf] %v2234
    %v2237 = vld [vmem:[#allocation9] sm:$0xff]
    %v2238 = vld [vmem:[#allocation9 + $0x8] sm:$0xf]
    %v2239 = vld [vmem:[#allocation9 + $0xc] sm:$0xff]
    %v2240 = vld [vmem:[#allocation9 + $0x14] sm:$0xf]
    %v2241 = vld [vmem:[#allocation9 + $0x18] sm:$0xff]
    %v2242 = vld [vmem:[#allocation9 + $0x20] sm:$0xf]
    %v2243 = vld [vmem:[#allocation9 + $0x24] sm:$0xff]
    %v2244 = vld [vmem:[#allocation9 + $0x2c] sm:$0xf]
    %v2245 = vld [vmem:[#allocation9 + $0x30] sm:$0xff]
    %v2246 = vld [vmem:[#allocation9 + $0x38] sm:$0xf]
    %v2247 = vld [vmem:[#allocation9 + $0x3c] sm:$0xff]
    %v2248 = vld [vmem:[#allocation9 + $0x44] sm:$0xf]
    %v2249 = vld [vmem:[#allocation9 + $0x48] sm:$0xff]
    %v2250 = vld [vmem:[#allocation9 + $0x50] sm:$0xf]
    %v2251 = vld [vmem:[#allocation9 + $0x54] sm:$0xff]
    %v2252 = vld [vmem:[#allocation9 + $0x5c] sm:$0xf]
    %v2253 = vld [vmem:[#allocation9 + $0x60] sm:$0xff]
    %v2254 = vld [vmem:[#allocation9 + $0x68] sm:$0xf]
    %v2255 = vld [vmem:[#allocation9 + $0x6c] sm:$0xff]
    %v2256 = vld [vmem:[#allocation9 + $0x74] sm:$0xf]
    %v2257 = vld [vmem:[#allocation9 + $0x78] sm:$0xff]
    %v2258 = vld [vmem:[#allocation9 + $0x80] sm:$0xf]
    %v2259 = vld [vmem:[#allocation9 + $0x84] sm:$0xff]
    %v2260 = vld [vmem:[#allocation9 + $0x8c] sm:$0xf]
    %v2261 = vld [vmem:[#allocation9 + $0x90] sm:$0xff]
    %v2262 = vld [vmem:[#allocation9 + $0x98] sm:$0xf]
    %v2263 = vld [vmem:[#allocation9 + $0x9c] sm:$0xff]
    %v2264 = vld [vmem:[#allocation9 + $0xa4] sm:$0xf]
    %v2265 = vld [vmem:[#allocation9 + $0xa8] sm:$0xff]
    %v2266 = vld [vmem:[#allocation9 + $0xb0] sm:$0xf]
    %v2267 = vld [vmem:[#allocation9 + $0xb4] sm:$0xff]
    %v2268 = vld [vmem:[#allocation9 + $0xbc] sm:$0xf]
    %v2301 = vunpack.c.l.b16 %v2237
    %v2302 = vunpack.c.h.b16 %v2237
    %v2303 = vunpack.c.l.b16 %v2238
    %v2304 = vunpack.c.l.b16 %v2239
    %v2305 = vunpack.c.h.b16 %v2239
    %v2306 = vunpack.c.l.b16 %v2240
    %v2307 = vunpack.c.l.b16 %v2241
    %v2308 = vunpack.c.h.b16 %v2241
    %v2309 = vunpack.c.l.b16 %v2242
    %v2310 = vunpack.c.l.b16 %v2243
    %v2311 = vunpack.c.h.b16 %v2243
    %v2312 = vunpack.c.l.b16 %v2244
    %v2313 = vunpack.c.l.b16 %v2245
    %v2314 = vunpack.c.h.b16 %v2245
    %v2315 = vunpack.c.l.b16 %v2246
    %v2316 = vunpack.c.l.b16 %v2247
    %v2317 = vunpack.c.h.b16 %v2247
    %v2318 = vunpack.c.l.b16 %v2248
    %v2319 = vunpack.c.l.b16 %v2249
    %v2320 = vunpack.c.h.b16 %v2249
    %v2321 = vunpack.c.l.b16 %v2250
    %v2322 = vunpack.c.l.b16 %v2251
    %v2323 = vunpack.c.h.b16 %v2251
    %v2324 = vunpack.c.l.b16 %v2252
    %v2325 = vunpack.c.l.b16 %v2253
    %v2326 = vunpack.c.h.b16 %v2253
    %v2327 = vunpack.c.l.b16 %v2254
    %v2328 = vunpack.c.l.b16 %v2255
    %v2329 = vunpack.c.h.b16 %v2255
    %v2330 = vunpack.c.l.b16 %v2256
    %v2331 = vunpack.c.l.b16 %v2257
    %v2332 = vunpack.c.h.b16 %v2257
    %v2333 = vunpack.c.l.b16 %v2258
    %v2334 = vunpack.c.l.b16 %v2259
    %v2335 = vunpack.c.h.b16 %v2259
    %v2336 = vunpack.c.l.b16 %v2260
    %v2337 = vunpack.c.l.b16 %v2261
    %v2338 = vunpack.c.h.b16 %v2261
    %v2339 = vunpack.c.l.b16 %v2262
    %v2340 = vunpack.c.l.b16 %v2263
    %v2341 = vunpack.c.h.b16 %v2263
    %v2342 = vunpack.c.l.b16 %v2264
    %v2343 = vunpack.c.l.b16 %v2265
    %v2344 = vunpack.c.h.b16 %v2265
    %v2345 = vunpack.c.l.b16 %v2266
    %v2346 = vunpack.c.l.b16 %v2267
    %v2347 = vunpack.c.h.b16 %v2267
    %v2348 = vunpack.c.l.b16 %v2268
    %v2349 = vpack.c.b16 %v2304, %v2301
    %v2350 = vpack.c.b16 %v2305, %v2302
    %v2351 = vpack.c.b16 %v2306, %v2303
    %v2352 = vpack.c.b16 %v2310, %v2307
    %v2353 = vpack.c.b16 %v2311, %v2308
    %v2354 = vpack.c.b16 %v2312, %v2309
    %v2355 = vpack.c.b16 %v2316, %v2313
    %v2356 = vpack.c.b16 %v2317, %v2314
    %v2357 = vpack.c.b16 %v2318, %v2315
    %v2358 = vpack.c.b16 %v2322, %v2319
    %v2359 = vpack.c.b16 %v2323, %v2320
    %v2360 = vpack.c.b16 %v2324, %v2321
    %v2361 = vpack.c.b16 %v2328, %v2325
    %v2362 = vpack.c.b16 %v2329, %v2326
    %v2363 = vpack.c.b16 %v2330, %v2327
    %v2364 = vpack.c.b16 %v2334, %v2331
    %v2365 = vpack.c.b16 %v2335, %v2332
    %v2366 = vpack.c.b16 %v2336, %v2333
    %v2367 = vpack.c.b16 %v2340, %v2337
    %v2368 = vpack.c.b16 %v2341, %v2338
    %v2369 = vpack.c.b16 %v2342, %v2339
    %v2370 = vpack.c.b16 %v2346, %v2343
    %v2371 = vpack.c.b16 %v2347, %v2344
    %v2372 = vpack.c.b16 %v2348, %v2345
    %2397 = vmatprep.subr.bf16.mxu0 %v2371
    %2398 = vmatpush1.bf16.msra.mxu0 %v2370
    %2399 = vmatprep.subr.bf16.mxu0 %v2368
    %2400 = vmatpush1.bf16.msra.mxu0 %v2367
    %2401 = vmatprep.subr.bf16.mxu0 %v2365
    %2402 = vmatpush1.bf16.msra.mxu0 %v2364
    %2403 = vmatprep.subr.bf16.mxu0 %v2362
    %2404 = vmatpush1.bf16.msra.mxu0 %v2361
    %2405 = vmatprep.subr.bf16.mxu0 %v2359
    %2406 = vmatpush1.bf16.msra.mxu0 %v2358
    %2407 = vmatprep.subr.bf16.mxu0 %v2356
    %2408 = vmatpush1.bf16.msra.mxu0 %v2355
    %2409 = vmatprep.subr.bf16.mxu0 %v2353
    %2410 = vmatpush1.bf16.msra.mxu0 %v2352
    %2411 = vmatprep.subr.bf16.mxu0 %v2350
    %2412 = vmatpush1.bf16.msra.mxu0 %v2349
    %2413 = vmatprep.subr.bf16.mxu0 0
    %2414 = vmatpush2.bf16.msra.mxu0 0
    %2415 = vmatprep.subr.bf16.mxu0 0
    %2416 = vmatpush2.bf16.msra.mxu0 0
    %2417 = vmatprep.subr.bf16.mxu0 0
    %2418 = vmatpush2.bf16.msra.mxu0 0
    %2419 = vmatprep.subr.bf16.mxu0 0
    %2420 = vmatpush2.bf16.msra.mxu0 0
    %2421 = vmatprep.subr.bf16.mxu0 0
    %2422 = vmatpush2.bf16.msra.mxu0 0
    %2423 = vmatprep.subr.bf16.mxu0 0
    %2424 = vmatpush2.bf16.msra.mxu0 0
    %2425 = vmatprep.subr.bf16.mxu0 0
    %2426 = vmatpush2.bf16.msra.mxu0 0
    %2427 = vmatprep.subr.bf16.mxu0 0
    %2428 = vmatpush2.bf16.msra.mxu0 0
    %2429 = vmatprep.mubr.bf16.mxu0 0
    %2430 = vmatmul.mubr.bf16.gmra.mxu0 %v2234
    %v2431 = vpop.f32.mrf.mxu0
    %v2432 = vadd.f32 0.0, %v2431
    %v2433 = vpop.f32.mrf.mxu0
    %v2434 = vadd.f32 0.0, %v2433
    %v2435 = vpop.f32.mrf.mxu0
    %v2436 = vpop.f32.mrf.mxu0
    %2437 = vdwg.mxu0
    %2438 = vmatprep.subr.bf16.mxu0 0
    %2439 = vmatpush1.bf16.msra.mxu0 %v2372
    %2440 = vmatprep.subr.bf16.mxu0 0
    %2441 = vmatpush1.bf16.msra.mxu0 %v2369
    %2442 = vmatprep.subr.bf16.mxu0 0
    %2443 = vmatpush1.bf16.msra.mxu0 %v2366
    %2444 = vmatprep.subr.bf16.mxu0 0
    %2445 = vmatpush1.bf16.msra.mxu0 %v2363
    %2446 = vmatprep.subr.bf16.mxu0 0
    %2447 = vmatpush1.bf16.msra.mxu0 %v2360
    %2448 = vmatprep.subr.bf16.mxu0 0
    %2449 = vmatpush1.bf16.msra.mxu0 %v2357
    %2450 = vmatprep.subr.bf16.mxu0 0
    %2451 = vmatpush1.bf16.msra.mxu0 %v2354
    %2452 = vmatprep.subr.bf16.mxu0 0
    %2453 = vmatpush1.bf16.msra.mxu0 %v2351
    %2454 = vmatprep.subr.bf16.mxu0 0
    %2455 = vmatpush2.bf16.msra.mxu0 0
    %2456 = vmatprep.subr.bf16.mxu0 0
    %2457 = vmatpush2.bf16.msra.mxu0 0
    %2458 = vmatprep.subr.bf16.mxu0 0
    %2459 = vmatpush2.bf16.msra.mxu0 0
    %2460 = vmatprep.subr.bf16.mxu0 0
    %2461 = vmatpush2.bf16.msra.mxu0 0
    %2462 = vmatprep.subr.bf16.mxu0 0
    %2463 = vmatpush2.bf16.msra.mxu0 0
    %2464 = vmatprep.subr.bf16.mxu0 0
    %2465 = vmatpush2.bf16.msra.mxu0 0
    %2466 = vmatprep.subr.bf16.mxu0 0
    %2467 = vmatpush2.bf16.msra.mxu0 0
    %2468 = vmatprep.subr.bf16.mxu0 0
    %2469 = vmatpush2.bf16.msra.mxu0 0
    %2470 = vmatprep.mubr.bf16.mxu0 0
    %2471 = vmatmul.mubr.bf16.gmra.mxu0 %v2234
    %v2472 = vpop.f32.mrf.mxu0
    %v2473 = vadd.f32 0.0, %v2472
    %v2474 = vpop.f32.mrf.mxu0
    %v2475 = vpop.f32.mrf.mxu0
    %v2476 = vpop.f32.mrf.mxu0
    %2477 = vdwg.mxu0
    %s2478 = scalar_lea.vmem [#allocation2], 168
    %v2479 = vld [vmem:[%s2478] sm:$0xff]
    %v2480 = vld [vmem:[%s2478 + $0x8] sm:$0xff]
    %v2481 = vld [vmem:[%s2478 + $0x10] sm:$0xff]
    %v2482 = vadd.f32 %v2479, %v2432
    %v2483 = vxor.u32 %v2482, 2147483648
    %v2484 = vmul.f32 %v2483, 1.442695
    %v2485 = vpow.pop %v2484
    %v2486 = vadd.f32 %v2485, 1.0
    %v2487 = vrcp.pop %v2486
    %v2488 = vmul.f32 1.0, %v2487
    %v2489 = vadd.f32 %v2480, %v2434
    %v2490 = vxor.u32 %v2489, 2147483648
    %v2491 = vmul.f32 %v2490, 1.442695
    %v2492 = vpow.pop %v2491
    %v2493 = vadd.f32 %v2492, 1.0
    %v2494 = vrcp.pop %v2493
    %v2495 = vmul.f32 1.0, %v2494
    %v2496 = vadd.f32 %v2473, %v355
    %v2497 = vmul.f32 %v2488, %v2496
    %v2498 = vadd.f32 %v2481, %v2497
    %v2499 = vtanh.pop %v2498
    %v2500 = vsub.f32 %v2233, %v2499
    %v2501 = vmul.f32 %v2495, %v2500
    %v2502 = vadd.f32 %v2499, %v2501
    %v2503 = vpack.c.bf16 %v2502, %v2502
    %s2504 = scalar_lea.vmem [#allocation3], 28
    %2505 = vst [vmem:[%s2504] sm:$0xf] %v2503
    %2506 = vst [vmem:[#allocation16] sm:$0xff] %v2502
    %v2507 = vld [vmem:[#allocation3] sm:$0xf]
    %v2508 = vld [vmem:[#allocation3 + $0x4] sm:$0xf]
    %v2509 = vld [vmem:[#allocation3 + $0x8] sm:$0xf]
    %v2510 = vld [vmem:[#allocation3 + $0xc] sm:$0xf]
    %v2511 = vld [vmem:[#allocation3 + $0x10] sm:$0xf]
    %v2512 = vld [vmem:[#allocation3 + $0x14] sm:$0xf]
    %v2513 = vld [vmem:[#allocation3 + $0x18] sm:$0xf]
    %v2514 = vld [vmem:[#allocation3 + $0x1c] sm:$0xf]
    %v2515 = vld [vmem:[#allocation12] sm:$0xff]
    %v2516 = vld [vmem:[#allocation12 + $0x8] sm:$0xf]
    %v2517 = vld [vmem:[#allocation12 + $0xc] sm:$0xff]
    %v2518 = vld [vmem:[#allocation12 + $0x14] sm:$0xf]
    %v2519 = vld [vmem:[#allocation12 + $0x18] sm:$0xff]
    %v2520 = vld [vmem:[#allocation12 + $0x20] sm:$0xf]
    %v2521 = vld [vmem:[#allocation12 + $0x24] sm:$0xff]
    %v2522 = vld [vmem:[#allocation12 + $0x2c] sm:$0xf]
    %v2523 = vld [vmem:[#allocation12 + $0x30] sm:$0xff]
    %v2524 = vld [vmem:[#allocation12 + $0x38] sm:$0xf]
    %v2525 = vld [vmem:[#allocation12 + $0x3c] sm:$0xff]
    %v2526 = vld [vmem:[#allocation12 + $0x44] sm:$0xf]
    %v2527 = vld [vmem:[#allocation12 + $0x48] sm:$0xff]
    %v2528 = vld [vmem:[#allocation12 + $0x50] sm:$0xf]
    %v2529 = vld [vmem:[#allocation12 + $0x54] sm:$0xff]
    %v2530 = vld [vmem:[#allocation12 + $0x5c] sm:$0xf]
    %v2531 = vld [vmem:[#allocation12 + $0x60] sm:$0xff]
    %v2532 = vld [vmem:[#allocation12 + $0x68] sm:$0xf]
    %v2533 = vld [vmem:[#allocation12 + $0x6c] sm:$0xff]
    %v2534 = vld [vmem:[#allocation12 + $0x74] sm:$0xf]
    %v2535 = vld [vmem:[#allocation12 + $0x78] sm:$0xff]
    %v2536 = vld [vmem:[#allocation12 + $0x80] sm:$0xf]
    %v2537 = vld [vmem:[#allocation12 + $0x84] sm:$0xff]
    %v2538 = vld [vmem:[#allocation12 + $0x8c] sm:$0xf]
    %v2539 = vld [vmem:[#allocation12 + $0x90] sm:$0xff]
    %v2540 = vld [vmem:[#allocation12 + $0x98] sm:$0xf]
    %v2541 = vld [vmem:[#allocation12 + $0x9c] sm:$0xff]
    %v2542 = vld [vmem:[#allocation12 + $0xa4] sm:$0xf]
    %v2543 = vld [vmem:[#allocation12 + $0xa8] sm:$0xff]
    %v2544 = vld [vmem:[#allocation12 + $0xb0] sm:$0xf]
    %v2545 = vld [vmem:[#allocation12 + $0xb4] sm:$0xff]
    %v2546 = vld [vmem:[#allocation12 + $0xbc] sm:$0xf]
    %v2547 = vld [vmem:[%s6] ss:$2 sm:$0x7]
    %v2549 = vlaneseq
    %v2550 = vshrl.u32 %v2549, 7
    %v2551 = vsub.s32 0, %v2550
    %v2552 = vrot.slane %v2547, %v2551
    %v2553 = vlaneseq
    %v2554 = vshrl.u32 %v2553, 7
    %v2555 = vsub.s32 1, %v2554
    %v2556 = vrot.slane %v2547, %v2555
    %v2557 = vlaneseq
    %v2558 = vshrl.u32 %v2557, 7
    %v2559 = vsub.s32 2, %v2558
    %v2560 = vrot.slane %v2547, %v2559
    %v2572 = vunpack.c.l.b16 %v2507
    %v2573 = vunpack.c.l.b16 %v2508
    %v2574 = vunpack.c.l.b16 %v2509
    %v2575 = vunpack.c.l.b16 %v2510
    %v2576 = vunpack.c.l.b16 %v2511
    %v2577 = vunpack.c.l.b16 %v2512
    %v2578 = vunpack.c.l.b16 %v2513
    %v2579 = vunpack.c.l.b16 %v2514
    %v2580 = vpack.c.b16 %v2573, %v2572
    %v2581 = vpack.c.b16 %v2575, %v2574
    %v2582 = vpack.c.b16 %v2577, %v2576
    %v2583 = vpack.c.b16 %v2579, %v2578
    %v2620 = vunpack.c.l.b16 %v2515
    %v2621 = vunpack.c.h.b16 %v2515
    %v2622 = vunpack.c.l.b16 %v2516
    %v2623 = vunpack.c.l.b16 %v2517
    %v2624 = vunpack.c.h.b16 %v2517
    %v2625 = vunpack.c.l.b16 %v2518
    %v2626 = vunpack.c.l.b16 %v2519
    %v2627 = vunpack.c.h.b16 %v2519
    %v2628 = vunpack.c.l.b16 %v2520
    %v2629 = vunpack.c.l.b16 %v2521
    %v2630 = vunpack.c.h.b16 %v2521
    %v2631 = vunpack.c.l.b16 %v2522
    %v2632 = vunpack.c.l.b16 %v2523
    %v2633 = vunpack.c.h.b16 %v2523
    %v2634 = vunpack.c.l.b16 %v2524
    %v2635 = vunpack.c.l.b16 %v2525
    %v2636 = vunpack.c.h.b16 %v2525
    %v2637 = vunpack.c.l.b16 %v2526
    %v2638 = vunpack.c.l.b16 %v2527
    %v2639 = vunpack.c.h.b16 %v2527
    %v2640 = vunpack.c.l.b16 %v2528
    %v2641 = vunpack.c.l.b16 %v2529
    %v2642 = vunpack.c.h.b16 %v2529
    %v2643 = vunpack.c.l.b16 %v2530
    %v2644 = vunpack.c.l.b16 %v2531
    %v2645 = vunpack.c.h.b16 %v2531
    %v2646 = vunpack.c.l.b16 %v2532
    %v2647 = vunpack.c.l.b16 %v2533
    %v2648 = vunpack.c.h.b16 %v2533
    %v2649 = vunpack.c.l.b16 %v2534
    %v2650 = vunpack.c.l.b16 %v2535
    %v2651 = vunpack.c.h.b16 %v2535
    %v2652 = vunpack.c.l.b16 %v2536
    %v2653 = vunpack.c.l.b16 %v2537
    %v2654 = vunpack.c.h.b16 %v2537
    %v2655 = vunpack.c.l.b16 %v2538
    %v2656 = vunpack.c.l.b16 %v2539
    %v2657 = vunpack.c.h.b16 %v2539
    %v2658 = vunpack.c.l.b16 %v2540
    %v2659 = vunpack.c.l.b16 %v2541
    %v2660 = vunpack.c.h.b16 %v2541
    %v2661 = vunpack.c.l.b16 %v2542
    %v2662 = vunpack.c.l.b16 %v2543
    %v2663 = vunpack.c.h.b16 %v2543
    %v2664 = vunpack.c.l.b16 %v2544
    %v2665 = vunpack.c.l.b16 %v2545
    %v2666 = vunpack.c.h.b16 %v2545
    %v2667 = vunpack.c.l.b16 %v2546
    %v2668 = vpack.c.b16 %v2623, %v2620
    %v2669 = vpack.c.b16 %v2624, %v2621
    %v2670 = vpack.c.b16 %v2625, %v2622
    %v2671 = vpack.c.b16 %v2629, %v2626
    %v2672 = vpack.c.b16 %v2630, %v2627
    %v2673 = vpack.c.b16 %v2631, %v2628
    %v2674 = vpack.c.b16 %v2635, %v2632
    %v2675 = vpack.c.b16 %v2636, %v2633
    %v2676 = vpack.c.b16 %v2637, %v2634
    %v2677 = vpack.c.b16 %v2641, %v2638
    %v2678 = vpack.c.b16 %v2642, %v2639
    %v2679 = vpack.c.b16 %v2643, %v2640
    %v2680 = vpack.c.b16 %v2647, %v2644
    %v2681 = vpack.c.b16 %v2648, %v2645
    %v2682 = vpack.c.b16 %v2649, %v2646
    %v2683 = vpack.c.b16 %v2653, %v2650
    %v2684 = vpack.c.b16 %v2654, %v2651
    %v2685 = vpack.c.b16 %v2655, %v2652
    %v2686 = vpack.c.b16 %v2659, %v2656
    %v2687 = vpack.c.b16 %v2660, %v2657
    %v2688 = vpack.c.b16 %v2661, %v2658
    %v2689 = vpack.c.b16 %v2665, %v2662
    %v2690 = vpack.c.b16 %v2666, %v2663
    %v2691 = vpack.c.b16 %v2667, %v2664
    %2716 = vmatprep.subr.bf16.mxu0 %v2690
    %2717 = vmatpush1.bf16.msra.mxu0 %v2689
    %2718 = vmatprep.subr.bf16.mxu0 %v2687
    %2719 = vmatpush1.bf16.msra.mxu0 %v2686
    %2720 = vmatprep.subr.bf16.mxu0 %v2684
    %2721 = vmatpush1.bf16.msra.mxu0 %v2683
    %2722 = vmatprep.subr.bf16.mxu0 %v2681
    %2723 = vmatpush1.bf16.msra.mxu0 %v2680
    %2724 = vmatprep.subr.bf16.mxu0 %v2678
    %2725 = vmatpush1.bf16.msra.mxu0 %v2677
    %2726 = vmatprep.subr.bf16.mxu0 %v2675
    %2727 = vmatpush1.bf16.msra.mxu0 %v2674
    %2728 = vmatprep.subr.bf16.mxu0 %v2672
    %2729 = vmatpush1.bf16.msra.mxu0 %v2671
    %2730 = vmatprep.subr.bf16.mxu0 %v2669
    %2731 = vmatpush1.bf16.msra.mxu0 %v2668
    %2732 = vmatprep.subr.bf16.mxu0 0
    %2733 = vmatpush2.bf16.msra.mxu0 0
    %2734 = vmatprep.subr.bf16.mxu0 0
    %2735 = vmatpush2.bf16.msra.mxu0 0
    %2736 = vmatprep.subr.bf16.mxu0 0
    %2737 = vmatpush2.bf16.msra.mxu0 0
    %2738 = vmatprep.subr.bf16.mxu0 0
    %2739 = vmatpush2.bf16.msra.mxu0 0
    %2740 = vmatprep.subr.bf16.mxu0 0
    %2741 = vmatpush2.bf16.msra.mxu0 0
    %2742 = vmatprep.subr.bf16.mxu0 0
    %2743 = vmatpush2.bf16.msra.mxu0 0
    %2744 = vmatprep.subr.bf16.mxu0 0
    %2745 = vmatpush2.bf16.msra.mxu0 0
    %2746 = vmatprep.subr.bf16.mxu0 0
    %2747 = vmatpush2.bf16.msra.mxu0 0
    %2748 = vmatprep.mubr.bf16.mxu0 0
    %2749 = vmatmul.mubr.bf16.gmra.mxu0 %v2580
    %v2750 = vpop.f32.mrf.mxu0
    %v2751 = vadd.f32 %v2552, %v2750
    %v2752 = vpop.f32.mrf.mxu0
    %v2753 = vadd.f32 %v2556, %v2752
    %v2754 = vpop.f32.mrf.mxu0
    %v2755 = vadd.f32 %v2552, %v2754
    %v2756 = vpop.f32.mrf.mxu0
    %v2757 = vadd.f32 %v2556, %v2756
    %2758 = vmatprep.mubr.bf16.mxu0 0
    %2759 = vmatmul.mubr.bf16.gmra.mxu0 %v2581
    %v2760 = vpop.f32.mrf.mxu0
    %v2761 = vadd.f32 %v2552, %v2760
    %v2762 = vpop.f32.mrf.mxu0
    %v2763 = vadd.f32 %v2556, %v2762
    %v2764 = vpop.f32.mrf.mxu0
    %v2765 = vadd.f32 %v2552, %v2764
    %v2766 = vpop.f32.mrf.mxu0
    %v2767 = vadd.f32 %v2556, %v2766
    %2768 = vmatprep.mubr.bf16.mxu0 0
    %2769 = vmatmul.mubr.bf16.gmra.mxu0 %v2582
    %v2770 = vpop.f32.mrf.mxu0
    %v2771 = vadd.f32 %v2552, %v2770
    %v2772 = vpop.f32.mrf.mxu0
    %v2773 = vadd.f32 %v2556, %v2772
    %v2774 = vpop.f32.mrf.mxu0
    %v2775 = vadd.f32 %v2552, %v2774
    %v2776 = vpop.f32.mrf.mxu0
    %v2777 = vadd.f32 %v2556, %v2776
    %2778 = vmatprep.mubr.bf16.mxu0 0
    %2779 = vmatmul.mubr.bf16.gmra.mxu0 %v2583
    %v2780 = vpop.f32.mrf.mxu0
    %v2781 = vadd.f32 %v2552, %v2780
    %v2782 = vpop.f32.mrf.mxu0
    %v2783 = vadd.f32 %v2556, %v2782
    %v2784 = vpop.f32.mrf.mxu0
    %v2785 = vadd.f32 %v2552, %v2784
    %v2786 = vpop.f32.mrf.mxu0
    %v2787 = vadd.f32 %v2556, %v2786
    %2788 = vdwg.mxu0
    %2789 = vmatprep.subr.bf16.mxu0 0
    %2790 = vmatpush1.bf16.msra.mxu0 %v2691
    %2791 = vmatprep.subr.bf16.mxu0 0
    %2792 = vmatpush1.bf16.msra.mxu0 %v2688
    %2793 = vmatprep.subr.bf16.mxu0 0
    %2794 = vmatpush1.bf16.msra.mxu0 %v2685
    %2795 = vmatprep.subr.bf16.mxu0 0
    %2796 = vmatpush1.bf16.msra.mxu0 %v2682
    %2797 = vmatprep.subr.bf16.mxu0 0
    %2798 = vmatpush1.bf16.msra.mxu0 %v2679
    %2799 = vmatprep.subr.bf16.mxu0 0
    %2800 = vmatpush1.bf16.msra.mxu0 %v2676
    %2801 = vmatprep.subr.bf16.mxu0 0
    %2802 = vmatpush1.bf16.msra.mxu0 %v2673
    %2803 = vmatprep.subr.bf16.mxu0 0
    %2804 = vmatpush1.bf16.msra.mxu0 %v2670
    %2805 = vmatprep.subr.bf16.mxu0 0
    %2806 = vmatpush2.bf16.msra.mxu0 0
    %2807 = vmatprep.subr.bf16.mxu0 0
    %2808 = vmatpush2.bf16.msra.mxu0 0
    %2809 = vmatprep.subr.bf16.mxu0 0
    %2810 = vmatpush2.bf16.msra.mxu0 0
    %2811 = vmatprep.subr.bf16.mxu0 0
    %2812 = vmatpush2.bf16.msra.mxu0 0
    %2813 = vmatprep.subr.bf16.mxu0 0
    %2814 = vmatpush2.bf16.msra.mxu0 0
    %2815 = vmatprep.subr.bf16.mxu0 0
    %2816 = vmatpush2.bf16.msra.mxu0 0
    %2817 = vmatprep.subr.bf16.mxu0 0
    %2818 = vmatpush2.bf16.msra.mxu0 0
    %2819 = vmatprep.subr.bf16.mxu0 0
    %2820 = vmatpush2.bf16.msra.mxu0 0
    %2821 = vmatprep.mubr.bf16.mxu0 0
    %2822 = vmatmul.mubr.bf16.gmra.mxu0 %v2580
    %v2823 = vpop.f32.mrf.mxu0
    %v2824 = vadd.f32 %v2560, %v2823
    %v2825 = vpop.f32.mrf.mxu0
    %v2826 = vpop.f32.mrf.mxu0
    %v2827 = vadd.f32 %v2560, %v2826
    %v2828 = vpop.f32.mrf.mxu0
    %2829 = vmatprep.mubr.bf16.mxu0 0
    %2830 = vmatmul.mubr.bf16.gmra.mxu0 %v2581
    %v2831 = vpop.f32.mrf.mxu0
    %v2832 = vadd.f32 %v2560, %v2831
    %v2833 = vpop.f32.mrf.mxu0
    %v2834 = vpop.f32.mrf.mxu0
    %v2835 = vadd.f32 %v2560, %v2834
    %v2836 = vpop.f32.mrf.mxu0
    %2837 = vmatprep.mubr.bf16.mxu0 0
    %2838 = vmatmul.mubr.bf16.gmra.mxu0 %v2582
    %v2839 = vpop.f32.mrf.mxu0
    %v2840 = vadd.f32 %v2560, %v2839
    %v2841 = vpop.f32.mrf.mxu0
    %v2842 = vpop.f32.mrf.mxu0
    %v2843 = vadd.f32 %v2560, %v2842
    %v2844 = vpop.f32.mrf.mxu0
    %2845 = vmatprep.mubr.bf16.mxu0 0
    %2846 = vmatmul.mubr.bf16.gmra.mxu0 %v2583
    %v2847 = vpop.f32.mrf.mxu0
    %v2848 = vadd.f32 %v2560, %v2847
    %v2849 = vpop.f32.mrf.mxu0
    %v2850 = vpop.f32.mrf.mxu0
    %v2851 = vadd.f32 %v2560, %v2850
    %v2852 = vpop.f32.mrf.mxu0
    %2853 = vdwg.mxu0
    %2854 = vst [vmem:[#allocation2] sm:$0xff] %v2751
    %2855 = vst [vmem:[#allocation2 + $0x8] sm:$0xff] %v2753
    %2856 = vst [vmem:[#allocation2 + $0x10] sm:$0xff] %v2824
    %2857 = vst [vmem:[#allocation2 + $0x18] sm:$0xff] %v2755
    %2858 = vst [vmem:[#allocation2 + $0x20] sm:$0xff] %v2757
    %2859 = vst [vmem:[#allocation2 + $0x28] sm:$0xff] %v2827
    %2860 = vst [vmem:[#allocation2 + $0x30] sm:$0xff] %v2761
    %2861 = vst [vmem:[#allocation2 + $0x38] sm:$0xff] %v2763
    %2862 = vst [vmem:[#allocation2 + $0x40] sm:$0xff] %v2832
    %2863 = vst [vmem:[#allocation2 + $0x48] sm:$0xff] %v2765
    %2864 = vst [vmem:[#allocation2 + $0x50] sm:$0xff] %v2767
    %2865 = vst [vmem:[#allocation2 + $0x58] sm:$0xff] %v2835
    %2866 = vst [vmem:[#allocation2 + $0x60] sm:$0xff] %v2771
    %2867 = vst [vmem:[#allocation2 + $0x68] sm:$0xff] %v2773
    %2868 = vst [vmem:[#allocation2 + $0x70] sm:$0xff] %v2840
    %2869 = vst [vmem:[#allocation2 + $0x78] sm:$0xff] %v2775
    %2870 = vst [vmem:[#allocation2 + $0x80] sm:$0xff] %v2777
    %2871 = vst [vmem:[#allocation2 + $0x88] sm:$0xff] %v2843
    %2872 = vst [vmem:[#allocation2 + $0x90] sm:$0xff] %v2781
    %2873 = vst [vmem:[#allocation2 + $0x98] sm:$0xff] %v2783
    %2874 = vst [vmem:[#allocation2 + $0xa0] sm:$0xff] %v2848
    %2875 = vst [vmem:[#allocation2 + $0xa8] sm:$0xff] %v2785
    %2876 = vst [vmem:[#allocation2 + $0xb0] sm:$0xff] %v2787
    %2877 = vst [vmem:[#allocation2 + $0xb8] sm:$0xff] %v2851
    %v2878 = vld [vmem:[%s6 + $0x5] sm:$0x1]
    %v2879 = vlaneseq
    %v2880 = vshrl.u32 %v2879, 7
    %v2881 = vsub.s32 0, %v2880
    %v2882 = vrot.slane %v2878, %v2881
    %v2883 = vld [vmem:[#allocation13] sm:$0xff]
    %v2884 = vld [vmem:[#allocation13 + $0x8] sm:$0xf]
    %v2885 = vld [vmem:[#allocation13 + $0xc] sm:$0xff]
    %v2886 = vld [vmem:[#allocation13 + $0x14] sm:$0xf]
    %v2887 = vld [vmem:[#allocation13 + $0x18] sm:$0xff]
    %v2888 = vld [vmem:[#allocation13 + $0x20] sm:$0xf]
    %v2889 = vld [vmem:[#allocation13 + $0x24] sm:$0xff]
    %v2890 = vld [vmem:[#allocation13 + $0x2c] sm:$0xf]
    %v2891 = vld [vmem:[#allocation13 + $0x30] sm:$0xff]
    %v2892 = vld [vmem:[#allocation13 + $0x38] sm:$0xf]
    %v2893 = vld [vmem:[#allocation13 + $0x3c] sm:$0xff]
    %v2894 = vld [vmem:[#allocation13 + $0x44] sm:$0xf]
    %v2895 = vld [vmem:[#allocation13 + $0x48] sm:$0xff]
    %v2896 = vld [vmem:[#allocation13 + $0x50] sm:$0xf]
    %v2897 = vld [vmem:[#allocation13 + $0x54] sm:$0xff]
    %v2898 = vld [vmem:[#allocation13 + $0x5c] sm:$0xf]
    %v2899 = vld [vmem:[#allocation13 + $0x60] sm:$0xff]
    %v2900 = vld [vmem:[#allocation13 + $0x68] sm:$0xf]
    %v2901 = vld [vmem:[#allocation13 + $0x6c] sm:$0xff]
    %v2902 = vld [vmem:[#allocation13 + $0x74] sm:$0xf]
    %v2903 = vld [vmem:[#allocation13 + $0x78] sm:$0xff]
    %v2904 = vld [vmem:[#allocation13 + $0x80] sm:$0xf]
    %v2905 = vld [vmem:[#allocation13 + $0x84] sm:$0xff]
    %v2906 = vld [vmem:[#allocation13 + $0x8c] sm:$0xf]
    %v2907 = vld [vmem:[#allocation13 + $0x90] sm:$0xff]
    %v2908 = vld [vmem:[#allocation13 + $0x98] sm:$0xf]
    %v2909 = vld [vmem:[#allocation13 + $0x9c] sm:$0xff]
    %v2910 = vld [vmem:[#allocation13 + $0xa4] sm:$0xf]
    %v2911 = vld [vmem:[#allocation13 + $0xa8] sm:$0xff]
    %v2912 = vld [vmem:[#allocation13 + $0xb0] sm:$0xf]
    %v2913 = vld [vmem:[#allocation13 + $0xb4] sm:$0xff]
    %v2914 = vld [vmem:[#allocation13 + $0xbc] sm:$0xf]
    %v2947 = vunpack.c.l.b16 %v2883
    %v2948 = vunpack.c.h.b16 %v2883
    %v2949 = vunpack.c.l.b16 %v2884
    %v2950 = vunpack.c.l.b16 %v2885
    %v2951 = vunpack.c.h.b16 %v2885
    %v2952 = vunpack.c.l.b16 %v2886
    %v2953 = vunpack.c.l.b16 %v2887
    %v2954 = vunpack.c.h.b16 %v2887
    %v2955 = vunpack.c.l.b16 %v2888
    %v2956 = vunpack.c.l.b16 %v2889
    %v2957 = vunpack.c.h.b16 %v2889
    %v2958 = vunpack.c.l.b16 %v2890
    %v2959 = vunpack.c.l.b16 %v2891
    %v2960 = vunpack.c.h.b16 %v2891
    %v2961 = vunpack.c.l.b16 %v2892
    %v2962 = vunpack.c.l.b16 %v2893
    %v2963 = vunpack.c.h.b16 %v2893
    %v2964 = vunpack.c.l.b16 %v2894
    %v2965 = vunpack.c.l.b16 %v2895
    %v2966 = vunpack.c.h.b16 %v2895
    %v2967 = vunpack.c.l.b16 %v2896
    %v2968 = vunpack.c.l.b16 %v2897
    %v2969 = vunpack.c.h.b16 %v2897
    %v2970 = vunpack.c.l.b16 %v2898
    %v2971 = vunpack.c.l.b16 %v2899
    %v2972 = vunpack.c.h.b16 %v2899
    %v2973 = vunpack.c.l.b16 %v2900
    %v2974 = vunpack.c.l.b16 %v2901
    %v2975 = vunpack.c.h.b16 %v2901
    %v2976 = vunpack.c.l.b16 %v2902
    %v2977 = vunpack.c.l.b16 %v2903
    %v2978 = vunpack.c.h.b16 %v2903
    %v2979 = vunpack.c.l.b16 %v2904
    %v2980 = vunpack.c.l.b16 %v2905
    %v2981 = vunpack.c.h.b16 %v2905
    %v2982 = vunpack.c.l.b16 %v2906
    %v2983 = vunpack.c.l.b16 %v2907
    %v2984 = vunpack.c.h.b16 %v2907
    %v2985 = vunpack.c.l.b16 %v2908
    %v2986 = vunpack.c.l.b16 %v2909
    %v2987 = vunpack.c.h.b16 %v2909
    %v2988 = vunpack.c.l.b16 %v2910
    %v2989 = vunpack.c.l.b16 %v2911
    %v2990 = vunpack.c.h.b16 %v2911
    %v2991 = vunpack.c.l.b16 %v2912
    %v2992 = vunpack.c.l.b16 %v2913
    %v2993 = vunpack.c.h.b16 %v2913
    %v2994 = vunpack.c.l.b16 %v2914
    %v2995 = vpack.c.b16 %v2950, %v2947
    %v2996 = vpack.c.b16 %v2951, %v2948
    %v2997 = vpack.c.b16 %v2952, %v2949
    %v2998 = vpack.c.b16 %v2956, %v2953
    %v2999 = vpack.c.b16 %v2957, %v2954
    %v3000 = vpack.c.b16 %v2958, %v2955
    %v3001 = vpack.c.b16 %v2962, %v2959
    %v3002 = vpack.c.b16 %v2963, %v2960
    %v3003 = vpack.c.b16 %v2964, %v2961
    %v3004 = vpack.c.b16 %v2968, %v2965
    %v3005 = vpack.c.b16 %v2969, %v2966
    %v3006 = vpack.c.b16 %v2970, %v2967
    %v3007 = vpack.c.b16 %v2974, %v2971
    %v3008 = vpack.c.b16 %v2975, %v2972
    %v3009 = vpack.c.b16 %v2976, %v2973
    %v3010 = vpack.c.b16 %v2980, %v2977
    %v3011 = vpack.c.b16 %v2981, %v2978
    %v3012 = vpack.c.b16 %v2982, %v2979
    %v3013 = vpack.c.b16 %v2986, %v2983
    %v3014 = vpack.c.b16 %v2987, %v2984
    %v3015 = vpack.c.b16 %v2988, %v2985
    %v3016 = vpack.c.b16 %v2992, %v2989
    %v3017 = vpack.c.b16 %v2993, %v2990
    %v3018 = vpack.c.b16 %v2994, %v2991
    %3043 = vmatprep.subr.bf16.mxu0 %v3017
    %3044 = vmatpush1.bf16.msra.mxu0 %v3016
    %3045 = vmatprep.subr.bf16.mxu0 %v3014
    %3046 = vmatpush1.bf16.msra.mxu0 %v3013
    %3047 = vmatprep.subr.bf16.mxu0 %v3011
    %3048 = vmatpush1.bf16.msra.mxu0 %v3010
    %3049 = vmatprep.subr.bf16.mxu0 %v3008
    %3050 = vmatpush1.bf16.msra.mxu0 %v3007
    %3051 = vmatprep.subr.bf16.mxu0 %v3005
    %3052 = vmatpush1.bf16.msra.mxu0 %v3004
    %3053 = vmatprep.subr.bf16.mxu0 %v3002
    %3054 = vmatpush1.bf16.msra.mxu0 %v3001
    %3055 = vmatprep.subr.bf16.mxu0 %v2999
    %3056 = vmatpush1.bf16.msra.mxu0 %v2998
    %3057 = vmatprep.subr.bf16.mxu0 %v2996
    %3058 = vmatpush1.bf16.msra.mxu0 %v2995
    %3059 = vmatprep.subr.bf16.mxu0 0
    %3060 = vmatpush2.bf16.msra.mxu0 0
    %3061 = vmatprep.subr.bf16.mxu0 0
    %3062 = vmatpush2.bf16.msra.mxu0 0
    %3063 = vmatprep.subr.bf16.mxu0 0
    %3064 = vmatpush2.bf16.msra.mxu0 0
    %3065 = vmatprep.subr.bf16.mxu0 0
    %3066 = vmatpush2.bf16.msra.mxu0 0
    %3067 = vmatprep.subr.bf16.mxu0 0
    %3068 = vmatpush2.bf16.msra.mxu0 0
    %3069 = vmatprep.subr.bf16.mxu0 0
    %3070 = vmatpush2.bf16.msra.mxu0 0
    %3071 = vmatprep.subr.bf16.mxu0 0
    %3072 = vmatpush2.bf16.msra.mxu0 0
    %3073 = vmatprep.subr.bf16.mxu0 0
    %3074 = vmatpush2.bf16.msra.mxu0 0
    %3075 = vmatprep.mubr.bf16.mxu0 0
    %3076 = vmatmul.mubr.bf16.gmra.mxu0 0
    %v3077 = vpop.f32.mrf.mxu0
    %v3078 = vadd.f32 0.0, %v3077
    %v3079 = vpop.f32.mrf.mxu0
    %v3080 = vadd.f32 0.0, %v3079
    %v3081 = vpop.f32.mrf.mxu0
    %v3082 = vpop.f32.mrf.mxu0
    %3083 = vdwg.mxu0
    %3084 = vmatprep.subr.bf16.mxu0 0
    %3085 = vmatpush1.bf16.msra.mxu0 %v3018
    %3086 = vmatprep.subr.bf16.mxu0 0
    %3087 = vmatpush1.bf16.msra.mxu0 %v3015
    %3088 = vmatprep.subr.bf16.mxu0 0
    %3089 = vmatpush1.bf16.msra.mxu0 %v3012
    %3090 = vmatprep.subr.bf16.mxu0 0
    %3091 = vmatpush1.bf16.msra.mxu0 %v3009
    %3092 = vmatprep.subr.bf16.mxu0 0
    %3093 = vmatpush1.bf16.msra.mxu0 %v3006
    %3094 = vmatprep.subr.bf16.mxu0 0
    %3095 = vmatpush1.bf16.msra.mxu0 %v3003
    %3096 = vmatprep.subr.bf16.mxu0 0
    %3097 = vmatpush1.bf16.msra.mxu0 %v3000
    %3098 = vmatprep.subr.bf16.mxu0 0
    %3099 = vmatpush1.bf16.msra.mxu0 %v2997
    %3100 = vmatprep.subr.bf16.mxu0 0
    %3101 = vmatpush2.bf16.msra.mxu0 0
    %3102 = vmatprep.subr.bf16.mxu0 0
    %3103 = vmatpush2.bf16.msra.mxu0 0
    %3104 = vmatprep.subr.bf16.mxu0 0
    %3105 = vmatpush2.bf16.msra.mxu0 0
    %3106 = vmatprep.subr.bf16.mxu0 0
    %3107 = vmatpush2.bf16.msra.mxu0 0
    %3108 = vmatprep.subr.bf16.mxu0 0
    %3109 = vmatpush2.bf16.msra.mxu0 0
    %3110 = vmatprep.subr.bf16.mxu0 0
    %3111 = vmatpush2.bf16.msra.mxu0 0
    %3112 = vmatprep.subr.bf16.mxu0 0
    %3113 = vmatpush2.bf16.msra.mxu0 0
    %3114 = vmatprep.subr.bf16.mxu0 0
    %3115 = vmatpush2.bf16.msra.mxu0 0
    %3116 = vmatprep.mubr.bf16.mxu0 0
    %3117 = vmatmul.mubr.bf16.gmra.mxu0 0
    %v3118 = vpop.f32.mrf.mxu0
    %v3119 = vadd.f32 0.0, %v3118
    %v3120 = vpop.f32.mrf.mxu0
    %v3121 = vpop.f32.mrf.mxu0
    %v3122 = vpop.f32.mrf.mxu0
    %3123 = vdwg.mxu0
    %v3124 = vld [vmem:[#allocation2] sm:$0xff]
    %v3125 = vld [vmem:[#allocation2 + $0x8] sm:$0xff]
    %v3126 = vld [vmem:[#allocation2 + $0x10] sm:$0xff]
    %v3127 = vadd.f32 %v3124, %v3078
    %v3128 = vxor.u32 %v3127, 2147483648
    %v3129 = vmul.f32 %v3128, 1.442695
    %v3130 = vpow.pop %v3129
    %v3131 = vadd.f32 %v3130, 1.0
    %v3132 = vrcp.pop %v3131
    %v3133 = vmul.f32 1.0, %v3132
    %v3134 = vadd.f32 %v3125, %v3080
    %v3135 = vxor.u32 %v3134, 2147483648
    %v3136 = vmul.f32 %v3135, 1.442695
    %v3137 = vpow.pop %v3136
    %v3138 = vadd.f32 %v3137, 1.0
    %v3139 = vrcp.pop %v3138
    %v3140 = vmul.f32 1.0, %v3139
    %v3141 = vadd.f32 %v3119, %v2882
    %v3142 = vmul.f32 %v3133, %v3141
    %v3143 = vadd.f32 %v3126, %v3142
    %v3144 = vtanh.pop %v3143
    %v3145 = vsub.f32 0.0, %v3144
    %v3146 = vmul.f32 %v3140, %v3145
    %v3147 = vadd.f32 %v3144, %v3146
    %3148 = vst [vmem:[#allocation15] sm:$0xff] %v3147
    %v3149 = vpack.c.bf16 %v3147, %v3147
    %v3150 = vld [vmem:[#allocation13] sm:$0xff]
    %v3151 = vld [vmem:[#allocation13 + $0x8] sm:$0xf]
    %v3152 = vld [vmem:[#allocation13 + $0xc] sm:$0xff]
    %v3153 = vld [vmem:[#allocation13 + $0x14] sm:$0xf]
    %v3154 = vld [vmem:[#allocation13 + $0x18] sm:$0xff]
    %v3155 = vld [vmem:[#allocation13 + $0x20] sm:$0xf]
    %v3156 = vld [vmem:[#allocation13 + $0x24] sm:$0xff]
    %v3157 = vld [vmem:[#allocation13 + $0x2c] sm:$0xf]
    %v3158 = vld [vmem:[#allocation13 + $0x30] sm:$0xff]
    %v3159 = vld [vmem:[#allocation13 + $0x38] sm:$0xf]
    %v3160 = vld [vmem:[#allocation13 + $0x3c] sm:$0xff]
    %v3161 = vld [vmem:[#allocation13 + $0x44] sm:$0xf]
    %v3162 = vld [vmem:[#allocation13 + $0x48] sm:$0xff]
    %v3163 = vld [vmem:[#allocation13 + $0x50] sm:$0xf]
    %v3164 = vld [vmem:[#allocation13 + $0x54] sm:$0xff]
    %v3165 = vld [vmem:[#allocation13 + $0x5c] sm:$0xf]
    %v3166 = vld [vmem:[#allocation13 + $0x60] sm:$0xff]
    %v3167 = vld [vmem:[#allocation13 + $0x68] sm:$0xf]
    %v3168 = vld [vmem:[#allocation13 + $0x6c] sm:$0xff]
    %v3169 = vld [vmem:[#allocation13 + $0x74] sm:$0xf]
    %v3170 = vld [vmem:[#allocation13 + $0x78] sm:$0xff]
    %v3171 = vld [vmem:[#allocation13 + $0x80] sm:$0xf]
    %v3172 = vld [vmem:[#allocation13 + $0x84] sm:$0xff]
    %v3173 = vld [vmem:[#allocation13 + $0x8c] sm:$0xf]
    %v3174 = vld [vmem:[#allocation13 + $0x90] sm:$0xff]
    %v3175 = vld [vmem:[#allocation13 + $0x98] sm:$0xf]
    %v3176 = vld [vmem:[#allocation13 + $0x9c] sm:$0xff]
    %v3177 = vld [vmem:[#allocation13 + $0xa4] sm:$0xf]
    %v3178 = vld [vmem:[#allocation13 + $0xa8] sm:$0xff]
    %v3179 = vld [vmem:[#allocation13 + $0xb0] sm:$0xf]
    %v3180 = vld [vmem:[#allocation13 + $0xb4] sm:$0xff]
    %v3181 = vld [vmem:[#allocation13 + $0xbc] sm:$0xf]
    %v3214 = vunpack.c.l.b16 %v3150
    %v3215 = vunpack.c.h.b16 %v3150
    %v3216 = vunpack.c.l.b16 %v3151
    %v3217 = vunpack.c.l.b16 %v3152
    %v3218 = vunpack.c.h.b16 %v3152
    %v3219 = vunpack.c.l.b16 %v3153
    %v3220 = vunpack.c.l.b16 %v3154
    %v3221 = vunpack.c.h.b16 %v3154
    %v3222 = vunpack.c.l.b16 %v3155
    %v3223 = vunpack.c.l.b16 %v3156
    %v3224 = vunpack.c.h.b16 %v3156
    %v3225 = vunpack.c.l.b16 %v3157
    %v3226 = vunpack.c.l.b16 %v3158
    %v3227 = vunpack.c.h.b16 %v3158
    %v3228 = vunpack.c.l.b16 %v3159
    %v3229 = vunpack.c.l.b16 %v3160
    %v3230 = vunpack.c.h.b16 %v3160
    %v3231 = vunpack.c.l.b16 %v3161
    %v3232 = vunpack.c.l.b16 %v3162
    %v3233 = vunpack.c.h.b16 %v3162
    %v3234 = vunpack.c.l.b16 %v3163
    %v3235 = vunpack.c.l.b16 %v3164
    %v3236 = vunpack.c.h.b16 %v3164
    %v3237 = vunpack.c.l.b16 %v3165
    %v3238 = vunpack.c.l.b16 %v3166
    %v3239 = vunpack.c.h.b16 %v3166
    %v3240 = vunpack.c.l.b16 %v3167
    %v3241 = vunpack.c.l.b16 %v3168
    %v3242 = vunpack.c.h.b16 %v3168
    %v3243 = vunpack.c.l.b16 %v3169
    %v3244 = vunpack.c.l.b16 %v3170
    %v3245 = vunpack.c.h.b16 %v3170
    %v3246 = vunpack.c.l.b16 %v3171
    %v3247 = vunpack.c.l.b16 %v3172
    %v3248 = vunpack.c.h.b16 %v3172
    %v3249 = vunpack.c.l.b16 %v3173
    %v3250 = vunpack.c.l.b16 %v3174
    %v3251 = vunpack.c.h.b16 %v3174
    %v3252 = vunpack.c.l.b16 %v3175
    %v3253 = vunpack.c.l.b16 %v3176
    %v3254 = vunpack.c.h.b16 %v3176
    %v3255 = vunpack.c.l.b16 %v3177
    %v3256 = vunpack.c.l.b16 %v3178
    %v3257 = vunpack.c.h.b16 %v3178
    %v3258 = vunpack.c.l.b16 %v3179
    %v3259 = vunpack.c.l.b16 %v3180
    %v3260 = vunpack.c.h.b16 %v3180
    %v3261 = vunpack.c.l.b16 %v3181
    %v3262 = vpack.c.b16 %v3217, %v3214
    %v3263 = vpack.c.b16 %v3218, %v3215
    %v3264 = vpack.c.b16 %v3219, %v3216
    %v3265 = vpack.c.b16 %v3223, %v3220
    %v3266 = vpack.c.b16 %v3224, %v3221
    %v3267 = vpack.c.b16 %v3225, %v3222
    %v3268 = vpack.c.b16 %v3229, %v3226
    %v3269 = vpack.c.b16 %v3230, %v3227
    %v3270 = vpack.c.b16 %v3231, %v3228
    %v3271 = vpack.c.b16 %v3235, %v3232
    %v3272 = vpack.c.b16 %v3236, %v3233
    %v3273 = vpack.c.b16 %v3237, %v3234
    %v3274 = vpack.c.b16 %v3241, %v3238
    %v3275 = vpack.c.b16 %v3242, %v3239
    %v3276 = vpack.c.b16 %v3243, %v3240
    %v3277 = vpack.c.b16 %v3247, %v3244
    %v3278 = vpack.c.b16 %v3248, %v3245
    %v3279 = vpack.c.b16 %v3249, %v3246
    %v3280 = vpack.c.b16 %v3253, %v3250
    %v3281 = vpack.c.b16 %v3254, %v3251
    %v3282 = vpack.c.b16 %v3255, %v3252
    %v3283 = vpack.c.b16 %v3259, %v3256
    %v3284 = vpack.c.b16 %v3260, %v3257
    %v3285 = vpack.c.b16 %v3261, %v3258
    %3310 = vmatprep.subr.bf16.mxu0 %v3284
    %3311 = vmatpush1.bf16.msra.mxu0 %v3283
    %3312 = vmatprep.subr.bf16.mxu0 %v3281
    %3313 = vmatpush1.bf16.msra.mxu0 %v3280
    %3314 = vmatprep.subr.bf16.mxu0 %v3278
    %3315 = vmatpush1.bf16.msra.mxu0 %v3277
    %3316 = vmatprep.subr.bf16.mxu0 %v3275
    %3317 = vmatpush1.bf16.msra.mxu0 %v3274
    %3318 = vmatprep.subr.bf16.mxu0 %v3272
    %3319 = vmatpush1.bf16.msra.mxu0 %v3271
    %3320 = vmatprep.subr.bf16.mxu0 %v3269
    %3321 = vmatpush1.bf16.msra.mxu0 %v3268
    %3322 = vmatprep.subr.bf16.mxu0 %v3266
    %3323 = vmatpush1.bf16.msra.mxu0 %v3265
    %3324 = vmatprep.subr.bf16.mxu0 %v3263
    %3325 = vmatpush1.bf16.msra.mxu0 %v3262
    %3326 = vmatprep.subr.bf16.mxu0 0
    %3327 = vmatpush2.bf16.msra.mxu0 0
    %3328 = vmatprep.subr.bf16.mxu0 0
    %3329 = vmatpush2.bf16.msra.mxu0 0
    %3330 = vmatprep.subr.bf16.mxu0 0
    %3331 = vmatpush2.bf16.msra.mxu0 0
    %3332 = vmatprep.subr.bf16.mxu0 0
    %3333 = vmatpush2.bf16.msra.mxu0 0
    %3334 = vmatprep.subr.bf16.mxu0 0
    %3335 = vmatpush2.bf16.msra.mxu0 0
    %3336 = vmatprep.subr.bf16.mxu0 0
    %3337 = vmatpush2.bf16.msra.mxu0 0
    %3338 = vmatprep.subr.bf16.mxu0 0
    %3339 = vmatpush2.bf16.msra.mxu0 0
    %3340 = vmatprep.subr.bf16.mxu0 0
    %3341 = vmatpush2.bf16.msra.mxu0 0
    %3342 = vmatprep.mubr.bf16.mxu0 0
    %3343 = vmatmul.mubr.bf16.gmra.mxu0 %v3149
    %v3344 = vpop.f32.mrf.mxu0
    %v3345 = vadd.f32 0.0, %v3344
    %v3346 = vpop.f32.mrf.mxu0
    %v3347 = vadd.f32 0.0, %v3346
    %v3348 = vpop.f32.mrf.mxu0
    %v3349 = vpop.f32.mrf.mxu0
    %3350 = vdwg.mxu0
    %3351 = vmatprep.subr.bf16.mxu0 0
    %3352 = vmatpush1.bf16.msra.mxu0 %v3285
    %3353 = vmatprep.subr.bf16.mxu0 0
    %3354 = vmatpush1.bf16.msra.mxu0 %v3282
    %3355 = vmatprep.subr.bf16.mxu0 0
    %3356 = vmatpush1.bf16.msra.mxu0 %v3279
    %3357 = vmatprep.subr.bf16.mxu0 0
    %3358 = vmatpush1.bf16.msra.mxu0 %v3276
    %3359 = vmatprep.subr.bf16.mxu0 0
    %3360 = vmatpush1.bf16.msra.mxu0 %v3273
    %3361 = vmatprep.subr.bf16.mxu0 0
    %3362 = vmatpush1.bf16.msra.mxu0 %v3270
    %3363 = vmatprep.subr.bf16.mxu0 0
    %3364 = vmatpush1.bf16.msra.mxu0 %v3267
    %3365 = vmatprep.subr.bf16.mxu0 0
    %3366 = vmatpush1.bf16.msra.mxu0 %v3264
    %3367 = vmatprep.subr.bf16.mxu0 0
    %3368 = vmatpush2.bf16.msra.mxu0 0
    %3369 = vmatprep.subr.bf16.mxu0 0
    %3370 = vmatpush2.bf16.msra.mxu0 0
    %3371 = vmatprep.subr.bf16.mxu0 0
    %3372 = vmatpush2.bf16.msra.mxu0 0
    %3373 = vmatprep.subr.bf16.mxu0 0
    %3374 = vmatpush2.bf16.msra.mxu0 0
    %3375 = vmatprep.subr.bf16.mxu0 0
    %3376 = vmatpush2.bf16.msra.mxu0 0
    %3377 = vmatprep.subr.bf16.mxu0 0
    %3378 = vmatpush2.bf16.msra.mxu0 0
    %3379 = vmatprep.subr.bf16.mxu0 0
    %3380 = vmatpush2.bf16.msra.mxu0 0
    %3381 = vmatprep.subr.bf16.mxu0 0
    %3382 = vmatpush2.bf16.msra.mxu0 0
    %3383 = vmatprep.mubr.bf16.mxu0 0
    %3384 = vmatmul.mubr.bf16.gmra.mxu0 %v3149
    %v3385 = vpop.f32.mrf.mxu0
    %v3386 = vadd.f32 0.0, %v3385
    %v3387 = vpop.f32.mrf.mxu0
    %v3388 = vpop.f32.mrf.mxu0
    %v3389 = vpop.f32.mrf.mxu0
    %3390 = vdwg.mxu0
    %v3391 = vld [vmem:[%s864] sm:$0xff]
    %v3392 = vld [vmem:[%s864 + $0x8] sm:$0xff]
    %v3393 = vld [vmem:[%s864 + $0x10] sm:$0xff]
    %v3394 = vadd.f32 %v3391, %v3345
    %v3395 = vxor.u32 %v3394, 2147483648
    %v3396 = vmul.f32 %v3395, 1.442695
    %v3397 = vpow.pop %v3396
    %v3398 = vadd.f32 %v3397, 1.0
    %v3399 = vrcp.pop %v3398
    %v3400 = vmul.f32 1.0, %v3399
    %v3401 = vadd.f32 %v3392, %v3347
    %v3402 = vxor.u32 %v3401, 2147483648
    %v3403 = vmul.f32 %v3402, 1.442695
    %v3404 = vpow.pop %v3403
    %v3405 = vadd.f32 %v3404, 1.0
    %v3406 = vrcp.pop %v3405
    %v3407 = vmul.f32 1.0, %v3406
    %v3408 = vadd.f32 %v3386, %v2882
    %v3409 = vmul.f32 %v3400, %v3408
    %v3410 = vadd.f32 %v3393, %v3409
    %v3411 = vtanh.pop %v3410
    %v3412 = vsub.f32 %v3147, %v3411
    %v3413 = vmul.f32 %v3407, %v3412
    %v3414 = vadd.f32 %v3411, %v3413
    %s3415 = scalar_lea.vmem [#allocation15], 8
    %3416 = vst [vmem:[%s3415] sm:$0xff] %v3414
    %v3417 = vpack.c.bf16 %v3414, %v3414
    %v3418 = vld [vmem:[#allocation13] sm:$0xff]
    %v3419 = vld [vmem:[#allocation13 + $0x8] sm:$0xf]
    %v3420 = vld [vmem:[#allocation13 + $0xc] sm:$0xff]
    %v3421 = vld [vmem:[#allocation13 + $0x14] sm:$0xf]
    %v3422 = vld [vmem:[#allocation13 + $0x18] sm:$0xff]
    %v3423 = vld [vmem:[#allocation13 + $0x20] sm:$0xf]
    %v3424 = vld [vmem:[#allocation13 + $0x24] sm:$0xff]
    %v3425 = vld [vmem:[#allocation13 + $0x2c] sm:$0xf]
    %v3426 = vld [vmem:[#allocation13 + $0x30] sm:$0xff]
    %v3427 = vld [vmem:[#allocation13 + $0x38] sm:$0xf]
    %v3428 = vld [vmem:[#allocation13 + $0x3c] sm:$0xff]
    %v3429 = vld [vmem:[#allocation13 + $0x44] sm:$0xf]
    %v3430 = vld [vmem:[#allocation13 + $0x48] sm:$0xff]
    %v3431 = vld [vmem:[#allocation13 + $0x50] sm:$0xf]
    %v3432 = vld [vmem:[#allocation13 + $0x54] sm:$0xff]
    %v3433 = vld [vmem:[#allocation13 + $0x5c] sm:$0xf]
    %v3434 = vld [vmem:[#allocation13 + $0x60] sm:$0xff]
    %v3435 = vld [vmem:[#allocation13 + $0x68] sm:$0xf]
    %v3436 = vld [vmem:[#allocation13 + $0x6c] sm:$0xff]
    %v3437 = vld [vmem:[#allocation13 + $0x74] sm:$0xf]
    %v3438 = vld [vmem:[#allocation13 + $0x78] sm:$0xff]
    %v3439 = vld [vmem:[#allocation13 + $0x80] sm:$0xf]
    %v3440 = vld [vmem:[#allocation13 + $0x84] sm:$0xff]
    %v3441 = vld [vmem:[#allocation13 + $0x8c] sm:$0xf]
    %v3442 = vld [vmem:[#allocation13 + $0x90] sm:$0xff]
    %v3443 = vld [vmem:[#allocation13 + $0x98] sm:$0xf]
    %v3444 = vld [vmem:[#allocation13 + $0x9c] sm:$0xff]
    %v3445 = vld [vmem:[#allocation13 + $0xa4] sm:$0xf]
    %v3446 = vld [vmem:[#allocation13 + $0xa8] sm:$0xff]
    %v3447 = vld [vmem:[#allocation13 + $0xb0] sm:$0xf]
    %v3448 = vld [vmem:[#allocation13 + $0xb4] sm:$0xff]
    %v3449 = vld [vmem:[#allocation13 + $0xbc] sm:$0xf]
    %v3482 = vunpack.c.l.b16 %v3418
    %v3483 = vunpack.c.h.b16 %v3418
    %v3484 = vunpack.c.l.b16 %v3419
    %v3485 = vunpack.c.l.b16 %v3420
    %v3486 = vunpack.c.h.b16 %v3420
    %v3487 = vunpack.c.l.b16 %v3421
    %v3488 = vunpack.c.l.b16 %v3422
    %v3489 = vunpack.c.h.b16 %v3422
    %v3490 = vunpack.c.l.b16 %v3423
    %v3491 = vunpack.c.l.b16 %v3424
    %v3492 = vunpack.c.h.b16 %v3424
    %v3493 = vunpack.c.l.b16 %v3425
    %v3494 = vunpack.c.l.b16 %v3426
    %v3495 = vunpack.c.h.b16 %v3426
    %v3496 = vunpack.c.l.b16 %v3427
    %v3497 = vunpack.c.l.b16 %v3428
    %v3498 = vunpack.c.h.b16 %v3428
    %v3499 = vunpack.c.l.b16 %v3429
    %v3500 = vunpack.c.l.b16 %v3430
    %v3501 = vunpack.c.h.b16 %v3430
    %v3502 = vunpack.c.l.b16 %v3431
    %v3503 = vunpack.c.l.b16 %v3432
    %v3504 = vunpack.c.h.b16 %v3432
    %v3505 = vunpack.c.l.b16 %v3433
    %v3506 = vunpack.c.l.b16 %v3434
    %v3507 = vunpack.c.h.b16 %v3434
    %v3508 = vunpack.c.l.b16 %v3435
    %v3509 = vunpack.c.l.b16 %v3436
    %v3510 = vunpack.c.h.b16 %v3436
    %v3511 = vunpack.c.l.b16 %v3437
    %v3512 = vunpack.c.l.b16 %v3438
    %v3513 = vunpack.c.h.b16 %v3438
    %v3514 = vunpack.c.l.b16 %v3439
    %v3515 = vunpack.c.l.b16 %v3440
    %v3516 = vunpack.c.h.b16 %v3440
    %v3517 = vunpack.c.l.b16 %v3441
    %v3518 = vunpack.c.l.b16 %v3442
    %v3519 = vunpack.c.h.b16 %v3442
    %v3520 = vunpack.c.l.b16 %v3443
    %v3521 = vunpack.c.l.b16 %v3444
    %v3522 = vunpack.c.h.b16 %v3444
    %v3523 = vunpack.c.l.b16 %v3445
    %v3524 = vunpack.c.l.b16 %v3446
    %v3525 = vunpack.c.h.b16 %v3446
    %v3526 = vunpack.c.l.b16 %v3447
    %v3527 = vunpack.c.l.b16 %v3448
    %v3528 = vunpack.c.h.b16 %v3448
    %v3529 = vunpack.c.l.b16 %v3449
    %v3530 = vpack.c.b16 %v3485, %v3482
    %v3531 = vpack.c.b16 %v3486, %v3483
    %v3532 = vpack.c.b16 %v3487, %v3484
    %v3533 = vpack.c.b16 %v3491, %v3488
    %v3534 = vpack.c.b16 %v3492, %v3489
    %v3535 = vpack.c.b16 %v3493, %v3490
    %v3536 = vpack.c.b16 %v3497, %v3494
    %v3537 = vpack.c.b16 %v3498, %v3495
    %v3538 = vpack.c.b16 %v3499, %v3496
    %v3539 = vpack.c.b16 %v3503, %v3500
    %v3540 = vpack.c.b16 %v3504, %v3501
    %v3541 = vpack.c.b16 %v3505, %v3502
    %v3542 = vpack.c.b16 %v3509, %v3506
    %v3543 = vpack.c.b16 %v3510, %v3507
    %v3544 = vpack.c.b16 %v3511, %v3508
    %v3545 = vpack.c.b16 %v3515, %v3512
    %v3546 = vpack.c.b16 %v3516, %v3513
    %v3547 = vpack.c.b16 %v3517, %v3514
    %v3548 = vpack.c.b16 %v3521, %v3518
    %v3549 = vpack.c.b16 %v3522, %v3519
    %v3550 = vpack.c.b16 %v3523, %v3520
    %v3551 = vpack.c.b16 %v3527, %v3524
    %v3552 = vpack.c.b16 %v3528, %v3525
    %v3553 = vpack.c.b16 %v3529, %v3526
    %3578 = vmatprep.subr.bf16.mxu0 %v3552
    %3579 = vmatpush1.bf16.msra.mxu0 %v3551
    %3580 = vmatprep.subr.bf16.mxu0 %v3549
    %3581 = vmatpush1.bf16.msra.mxu0 %v3548
    %3582 = vmatprep.subr.bf16.mxu0 %v3546
    %3583 = vmatpush1.bf16.msra.mxu0 %v3545
    %3584 = vmatprep.subr.bf16.mxu0 %v3543
    %3585 = vmatpush1.bf16.msra.mxu0 %v3542
    %3586 = vmatprep.subr.bf16.mxu0 %v3540
    %3587 = vmatpush1.bf16.msra.mxu0 %v3539
    %3588 = vmatprep.subr.bf16.mxu0 %v3537
    %3589 = vmatpush1.bf16.msra.mxu0 %v3536
    %3590 = vmatprep.subr.bf16.mxu0 %v3534
    %3591 = vmatpush1.bf16.msra.mxu0 %v3533
    %3592 = vmatprep.subr.bf16.mxu0 %v3531
    %3593 = vmatpush1.bf16.msra.mxu0 %v3530
    %3594 = vmatprep.subr.bf16.mxu0 0
    %3595 = vmatpush2.bf16.msra.mxu0 0
    %3596 = vmatprep.subr.bf16.mxu0 0
    %3597 = vmatpush2.bf16.msra.mxu0 0
    %3598 = vmatprep.subr.bf16.mxu0 0
    %3599 = vmatpush2.bf16.msra.mxu0 0
    %3600 = vmatprep.subr.bf16.mxu0 0
    %3601 = vmatpush2.bf16.msra.mxu0 0
    %3602 = vmatprep.subr.bf16.mxu0 0
    %3603 = vmatpush2.bf16.msra.mxu0 0
    %3604 = vmatprep.subr.bf16.mxu0 0
    %3605 = vmatpush2.bf16.msra.mxu0 0
    %3606 = vmatprep.subr.bf16.mxu0 0
    %3607 = vmatpush2.bf16.msra.mxu0 0
    %3608 = vmatprep.subr.bf16.mxu0 0
    %3609 = vmatpush2.bf16.msra.mxu0 0
    %3610 = vmatprep.mubr.bf16.mxu0 0
    %3611 = vmatmul.mubr.bf16.gmra.mxu0 %v3417
    %v3612 = vpop.f32.mrf.mxu0
    %v3613 = vadd.f32 0.0, %v3612
    %v3614 = vpop.f32.mrf.mxu0
    %v3615 = vadd.f32 0.0, %v3614
    %v3616 = vpop.f32.mrf.mxu0
    %v3617 = vpop.f32.mrf.mxu0
    %3618 = vdwg.mxu0
    %3619 = vmatprep.subr.bf16.mxu0 0
    %3620 = vmatpush1.bf16.msra.mxu0 %v3553
    %3621 = vmatprep.subr.bf16.mxu0 0
    %3622 = vmatpush1.bf16.msra.mxu0 %v3550
    %3623 = vmatprep.subr.bf16.mxu0 0
    %3624 = vmatpush1.bf16.msra.mxu0 %v3547
    %3625 = vmatprep.subr.bf16.mxu0 0
    %3626 = vmatpush1.bf16.msra.mxu0 %v3544
    %3627 = vmatprep.subr.bf16.mxu0 0
    %3628 = vmatpush1.bf16.msra.mxu0 %v3541
    %3629 = vmatprep.subr.bf16.mxu0 0
    %3630 = vmatpush1.bf16.msra.mxu0 %v3538
    %3631 = vmatprep.subr.bf16.mxu0 0
    %3632 = vmatpush1.bf16.msra.mxu0 %v3535
    %3633 = vmatprep.subr.bf16.mxu0 0
    %3634 = vmatpush1.bf16.msra.mxu0 %v3532
    %3635 = vmatprep.subr.bf16.mxu0 0
    %3636 = vmatpush2.bf16.msra.mxu0 0
    %3637 = vmatprep.subr.bf16.mxu0 0
    %3638 = vmatpush2.bf16.msra.mxu0 0
    %3639 = vmatprep.subr.bf16.mxu0 0
    %3640 = vmatpush2.bf16.msra.mxu0 0
    %3641 = vmatprep.subr.bf16.mxu0 0
    %3642 = vmatpush2.bf16.msra.mxu0 0
    %3643 = vmatprep.subr.bf16.mxu0 0
    %3644 = vmatpush2.bf16.msra.mxu0 0
    %3645 = vmatprep.subr.bf16.mxu0 0
    %3646 = vmatpush2.bf16.msra.mxu0 0
    %3647 = vmatprep.subr.bf16.mxu0 0
    %3648 = vmatpush2.bf16.msra.mxu0 0
    %3649 = vmatprep.subr.bf16.mxu0 0
    %3650 = vmatpush2.bf16.msra.mxu0 0
    %3651 = vmatprep.mubr.bf16.mxu0 0
    %3652 = vmatmul.mubr.bf16.gmra.mxu0 %v3417
    %v3653 = vpop.f32.mrf.mxu0
    %v3654 = vadd.f32 0.0, %v3653
    %v3655 = vpop.f32.mrf.mxu0
    %v3656 = vpop.f32.mrf.mxu0
    %v3657 = vpop.f32.mrf.mxu0
    %3658 = vdwg.mxu0
    %v3659 = vld [vmem:[%s1133] sm:$0xff]
    %v3660 = vld [vmem:[%s1133 + $0x8] sm:$0xff]
    %v3661 = vld [vmem:[%s1133 + $0x10] sm:$0xff]
    %v3662 = vadd.f32 %v3659, %v3613
    %v3663 = vxor.u32 %v3662, 2147483648
    %v3664 = vmul.f32 %v3663, 1.442695
    %v3665 = vpow.pop %v3664
    %v3666 = vadd.f32 %v3665, 1.0
    %v3667 = vrcp.pop %v3666
    %v3668 = vmul.f32 1.0, %v3667
    %v3669 = vadd.f32 %v3660, %v3615
    %v3670 = vxor.u32 %v3669, 2147483648
    %v3671 = vmul.f32 %v3670, 1.442695
    %v3672 = vpow.pop %v3671
    %v3673 = vadd.f32 %v3672, 1.0
    %v3674 = vrcp.pop %v3673
    %v3675 = vmul.f32 1.0, %v3674
    %v3676 = vadd.f32 %v3654, %v2882
    %v3677 = vmul.f32 %v3668, %v3676
    %v3678 = vadd.f32 %v3661, %v3677
    %v3679 = vtanh.pop %v3678
    %v3680 = vsub.f32 %v3414, %v3679
    %v3681 = vmul.f32 %v3675, %v3680
    %v3682 = vadd.f32 %v3679, %v3681
    %s3683 = scalar_lea.vmem [#allocation15], 16
    %3684 = vst [vmem:[%s3683] sm:$0xff] %v3682
    %v3685 = vpack.c.bf16 %v3682, %v3682
    %v3686 = vld [vmem:[#allocation13] sm:$0xff]
    %v3687 = vld [vmem:[#allocation13 + $0x8] sm:$0xf]
    %v3688 = vld [vmem:[#allocation13 + $0xc] sm:$0xff]
    %v3689 = vld [vmem:[#allocation13 + $0x14] sm:$0xf]
    %v3690 = vld [vmem:[#allocation13 + $0x18] sm:$0xff]
    %v3691 = vld [vmem:[#allocation13 + $0x20] sm:$0xf]
    %v3692 = vld [vmem:[#allocation13 + $0x24] sm:$0xff]
    %v3693 = vld [vmem:[#allocation13 + $0x2c] sm:$0xf]
    %v3694 = vld [vmem:[#allocation13 + $0x30] sm:$0xff]
    %v3695 = vld [vmem:[#allocation13 + $0x38] sm:$0xf]
    %v3696 = vld [vmem:[#allocation13 + $0x3c] sm:$0xff]
    %v3697 = vld [vmem:[#allocation13 + $0x44] sm:$0xf]
    %v3698 = vld [vmem:[#allocation13 + $0x48] sm:$0xff]
    %v3699 = vld [vmem:[#allocation13 + $0x50] sm:$0xf]
    %v3700 = vld [vmem:[#allocation13 + $0x54] sm:$0xff]
    %v3701 = vld [vmem:[#allocation13 + $0x5c] sm:$0xf]
    %v3702 = vld [vmem:[#allocation13 + $0x60] sm:$0xff]
    %v3703 = vld [vmem:[#allocation13 + $0x68] sm:$0xf]
    %v3704 = vld [vmem:[#allocation13 + $0x6c] sm:$0xff]
    %v3705 = vld [vmem:[#allocation13 + $0x74] sm:$0xf]
    %v3706 = vld [vmem:[#allocation13 + $0x78] sm:$0xff]
    %v3707 = vld [vmem:[#allocation13 + $0x80] sm:$0xf]
    %v3708 = vld [vmem:[#allocation13 + $0x84] sm:$0xff]
    %v3709 = vld [vmem:[#allocation13 + $0x8c] sm:$0xf]
    %v3710 = vld [vmem:[#allocation13 + $0x90] sm:$0xff]
    %v3711 = vld [vmem:[#allocation13 + $0x98] sm:$0xf]
    %v3712 = vld [vmem:[#allocation13 + $0x9c] sm:$0xff]
    %v3713 = vld [vmem:[#allocation13 + $0xa4] sm:$0xf]
    %v3714 = vld [vmem:[#allocation13 + $0xa8] sm:$0xff]
    %v3715 = vld [vmem:[#allocation13 + $0xb0] sm:$0xf]
    %v3716 = vld [vmem:[#allocation13 + $0xb4] sm:$0xff]
    %v3717 = vld [vmem:[#allocation13 + $0xbc] sm:$0xf]
    %v3750 = vunpack.c.l.b16 %v3686
    %v3751 = vunpack.c.h.b16 %v3686
    %v3752 = vunpack.c.l.b16 %v3687
    %v3753 = vunpack.c.l.b16 %v3688
    %v3754 = vunpack.c.h.b16 %v3688
    %v3755 = vunpack.c.l.b16 %v3689
    %v3756 = vunpack.c.l.b16 %v3690
    %v3757 = vunpack.c.h.b16 %v3690
    %v3758 = vunpack.c.l.b16 %v3691
    %v3759 = vunpack.c.l.b16 %v3692
    %v3760 = vunpack.c.h.b16 %v3692
    %v3761 = vunpack.c.l.b16 %v3693
    %v3762 = vunpack.c.l.b16 %v3694
    %v3763 = vunpack.c.h.b16 %v3694
    %v3764 = vunpack.c.l.b16 %v3695
    %v3765 = vunpack.c.l.b16 %v3696
    %v3766 = vunpack.c.h.b16 %v3696
    %v3767 = vunpack.c.l.b16 %v3697
    %v3768 = vunpack.c.l.b16 %v3698
    %v3769 = vunpack.c.h.b16 %v3698
    %v3770 = vunpack.c.l.b16 %v3699
    %v3771 = vunpack.c.l.b16 %v3700
    %v3772 = vunpack.c.h.b16 %v3700
    %v3773 = vunpack.c.l.b16 %v3701
    %v3774 = vunpack.c.l.b16 %v3702
    %v3775 = vunpack.c.h.b16 %v3702
    %v3776 = vunpack.c.l.b16 %v3703
    %v3777 = vunpack.c.l.b16 %v3704
    %v3778 = vunpack.c.h.b16 %v3704
    %v3779 = vunpack.c.l.b16 %v3705
    %v3780 = vunpack.c.l.b16 %v3706
    %v3781 = vunpack.c.h.b16 %v3706
    %v3782 = vunpack.c.l.b16 %v3707
    %v3783 = vunpack.c.l.b16 %v3708
    %v3784 = vunpack.c.h.b16 %v3708
    %v3785 = vunpack.c.l.b16 %v3709
    %v3786 = vunpack.c.l.b16 %v3710
    %v3787 = vunpack.c.h.b16 %v3710
    %v3788 = vunpack.c.l.b16 %v3711
    %v3789 = vunpack.c.l.b16 %v3712
    %v3790 = vunpack.c.h.b16 %v3712
    %v3791 = vunpack.c.l.b16 %v3713
    %v3792 = vunpack.c.l.b16 %v3714
    %v3793 = vunpack.c.h.b16 %v3714
    %v3794 = vunpack.c.l.b16 %v3715
    %v3795 = vunpack.c.l.b16 %v3716
    %v3796 = vunpack.c.h.b16 %v3716
    %v3797 = vunpack.c.l.b16 %v3717
    %v3798 = vpack.c.b16 %v3753, %v3750
    %v3799 = vpack.c.b16 %v3754, %v3751
    %v3800 = vpack.c.b16 %v3755, %v3752
    %v3801 = vpack.c.b16 %v3759, %v3756
    %v3802 = vpack.c.b16 %v3760, %v3757
    %v3803 = vpack.c.b16 %v3761, %v3758
    %v3804 = vpack.c.b16 %v3765, %v3762
    %v3805 = vpack.c.b16 %v3766, %v3763
    %v3806 = vpack.c.b16 %v3767, %v3764
    %v3807 = vpack.c.b16 %v3771, %v3768
    %v3808 = vpack.c.b16 %v3772, %v3769
    %v3809 = vpack.c.b16 %v3773, %v3770
    %v3810 = vpack.c.b16 %v3777, %v3774
    %v3811 = vpack.c.b16 %v3778, %v3775
    %v3812 = vpack.c.b16 %v3779, %v3776
    %v3813 = vpack.c.b16 %v3783, %v3780
    %v3814 = vpack.c.b16 %v3784, %v3781
    %v3815 = vpack.c.b16 %v3785, %v3782
    %v3816 = vpack.c.b16 %v3789, %v3786
    %v3817 = vpack.c.b16 %v3790, %v3787
    %v3818 = vpack.c.b16 %v3791, %v3788
    %v3819 = vpack.c.b16 %v3795, %v3792
    %v3820 = vpack.c.b16 %v3796, %v3793
    %v3821 = vpack.c.b16 %v3797, %v3794
    %3846 = vmatprep.subr.bf16.mxu0 %v3820
    %3847 = vmatpush1.bf16.msra.mxu0 %v3819
    %3848 = vmatprep.subr.bf16.mxu0 %v3817
    %3849 = vmatpush1.bf16.msra.mxu0 %v3816
    %3850 = vmatprep.subr.bf16.mxu0 %v3814
    %3851 = vmatpush1.bf16.msra.mxu0 %v3813
    %3852 = vmatprep.subr.bf16.mxu0 %v3811
    %3853 = vmatpush1.bf16.msra.mxu0 %v3810
    %3854 = vmatprep.subr.bf16.mxu0 %v3808
    %3855 = vmatpush1.bf16.msra.mxu0 %v3807
    %3856 = vmatprep.subr.bf16.mxu0 %v3805
    %3857 = vmatpush1.bf16.msra.mxu0 %v3804
    %3858 = vmatprep.subr.bf16.mxu0 %v3802
    %3859 = vmatpush1.bf16.msra.mxu0 %v3801
    %3860 = vmatprep.subr.bf16.mxu0 %v3799
    %3861 = vmatpush1.bf16.msra.mxu0 %v3798
    %3862 = vmatprep.subr.bf16.mxu0 0
    %3863 = vmatpush2.bf16.msra.mxu0 0
    %3864 = vmatprep.subr.bf16.mxu0 0
    %3865 = vmatpush2.bf16.msra.mxu0 0
    %3866 = vmatprep.subr.bf16.mxu0 0
    %3867 = vmatpush2.bf16.msra.mxu0 0
    %3868 = vmatprep.subr.bf16.mxu0 0
    %3869 = vmatpush2.bf16.msra.mxu0 0
    %3870 = vmatprep.subr.bf16.mxu0 0
    %3871 = vmatpush2.bf16.msra.mxu0 0
    %3872 = vmatprep.subr.bf16.mxu0 0
    %3873 = vmatpush2.bf16.msra.mxu0 0
    %3874 = vmatprep.subr.bf16.mxu0 0
    %3875 = vmatpush2.bf16.msra.mxu0 0
    %3876 = vmatprep.subr.bf16.mxu0 0
    %3877 = vmatpush2.bf16.msra.mxu0 0
    %3878 = vmatprep.mubr.bf16.mxu0 0
    %3879 = vmatmul.mubr.bf16.gmra.mxu0 %v3685
    %v3880 = vpop.f32.mrf.mxu0
    %v3881 = vadd.f32 0.0, %v3880
    %v3882 = vpop.f32.mrf.mxu0
    %v3883 = vadd.f32 0.0, %v3882
    %v3884 = vpop.f32.mrf.mxu0
    %v3885 = vpop.f32.mrf.mxu0
    %3886 = vdwg.mxu0
    %3887 = vmatprep.subr.bf16.mxu0 0
    %3888 = vmatpush1.bf16.msra.mxu0 %v3821
    %3889 = vmatprep.subr.bf16.mxu0 0
    %3890 = vmatpush1.bf16.msra.mxu0 %v3818
    %3891 = vmatprep.subr.bf16.mxu0 0
    %3892 = vmatpush1.bf16.msra.mxu0 %v3815
    %3893 = vmatprep.subr.bf16.mxu0 0
    %3894 = vmatpush1.bf16.msra.mxu0 %v3812
    %3895 = vmatprep.subr.bf16.mxu0 0
    %3896 = vmatpush1.bf16.msra.mxu0 %v3809
    %3897 = vmatprep.subr.bf16.mxu0 0
    %3898 = vmatpush1.bf16.msra.mxu0 %v3806
    %3899 = vmatprep.subr.bf16.mxu0 0
    %3900 = vmatpush1.bf16.msra.mxu0 %v3803
    %3901 = vmatprep.subr.bf16.mxu0 0
    %3902 = vmatpush1.bf16.msra.mxu0 %v3800
    %3903 = vmatprep.subr.bf16.mxu0 0
    %3904 = vmatpush2.bf16.msra.mxu0 0
    %3905 = vmatprep.subr.bf16.mxu0 0
    %3906 = vmatpush2.bf16.msra.mxu0 0
    %3907 = vmatprep.subr.bf16.mxu0 0
    %3908 = vmatpush2.bf16.msra.mxu0 0
    %3909 = vmatprep.subr.bf16.mxu0 0
    %3910 = vmatpush2.bf16.msra.mxu0 0
    %3911 = vmatprep.subr.bf16.mxu0 0
    %3912 = vmatpush2.bf16.msra.mxu0 0
    %3913 = vmatprep.subr.bf16.mxu0 0
    %3914 = vmatpush2.bf16.msra.mxu0 0
    %3915 = vmatprep.subr.bf16.mxu0 0
    %3916 = vmatpush2.bf16.msra.mxu0 0
    %3917 = vmatprep.subr.bf16.mxu0 0
    %3918 = vmatpush2.bf16.msra.mxu0 0
    %3919 = vmatprep.mubr.bf16.mxu0 0
    %3920 = vmatmul.mubr.bf16.gmra.mxu0 %v3685
    %v3921 = vpop.f32.mrf.mxu0
    %v3922 = vadd.f32 0.0, %v3921
    %v3923 = vpop.f32.mrf.mxu0
    %v3924 = vpop.f32.mrf.mxu0
    %v3925 = vpop.f32.mrf.mxu0
    %3926 = vdwg.mxu0
    %v3927 = vld [vmem:[%s1402] sm:$0xff]
    %v3928 = vld [vmem:[%s1402 + $0x8] sm:$0xff]
    %v3929 = vld [vmem:[%s1402 + $0x10] sm:$0xff]
    %v3930 = vadd.f32 %v3927, %v3881
    %v3931 = vxor.u32 %v3930, 2147483648
    %v3932 = vmul.f32 %v3931, 1.442695
    %v3933 = vpow.pop %v3932
    %v3934 = vadd.f32 %v3933, 1.0
    %v3935 = vrcp.pop %v3934
    %v3936 = vmul.f32 1.0, %v3935
    %v3937 = vadd.f32 %v3928, %v3883
    %v3938 = vxor.u32 %v3937, 2147483648
    %v3939 = vmul.f32 %v3938, 1.442695
    %v3940 = vpow.pop %v3939
    %v3941 = vadd.f32 %v3940, 1.0
    %v3942 = vrcp.pop %v3941
    %v3943 = vmul.f32 1.0, %v3942
    %v3944 = vadd.f32 %v3922, %v2882
    %v3945 = vmul.f32 %v3936, %v3944
    %v3946 = vadd.f32 %v3929, %v3945
    %v3947 = vtanh.pop %v3946
    %v3948 = vsub.f32 %v3682, %v3947
    %v3949 = vmul.f32 %v3943, %v3948
    %v3950 = vadd.f32 %v3947, %v3949
    %s3951 = scalar_lea.vmem [#allocation15], 24
    %3952 = vst [vmem:[%s3951] sm:$0xff] %v3950
    %v3953 = vpack.c.bf16 %v3950, %v3950
    %v3954 = vld [vmem:[#allocation13] sm:$0xff]
    %v3955 = vld [vmem:[#allocation13 + $0x8] sm:$0xf]
    %v3956 = vld [vmem:[#allocation13 + $0xc] sm:$0xff]
    %v3957 = vld [vmem:[#allocation13 + $0x14] sm:$0xf]
    %v3958 = vld [vmem:[#allocation13 + $0x18] sm:$0xff]
    %v3959 = vld [vmem:[#allocation13 + $0x20] sm:$0xf]
    %v3960 = vld [vmem:[#allocation13 + $0x24] sm:$0xff]
    %v3961 = vld [vmem:[#allocation13 + $0x2c] sm:$0xf]
    %v3962 = vld [vmem:[#allocation13 + $0x30] sm:$0xff]
    %v3963 = vld [vmem:[#allocation13 + $0x38] sm:$0xf]
    %v3964 = vld [vmem:[#allocation13 + $0x3c] sm:$0xff]
    %v3965 = vld [vmem:[#allocation13 + $0x44] sm:$0xf]
    %v3966 = vld [vmem:[#allocation13 + $0x48] sm:$0xff]
    %v3967 = vld [vmem:[#allocation13 + $0x50] sm:$0xf]
    %v3968 = vld [vmem:[#allocation13 + $0x54] sm:$0xff]
    %v3969 = vld [vmem:[#allocation13 + $0x5c] sm:$0xf]
    %v3970 = vld [vmem:[#allocation13 + $0x60] sm:$0xff]
    %v3971 = vld [vmem:[#allocation13 + $0x68] sm:$0xf]
    %v3972 = vld [vmem:[#allocation13 + $0x6c] sm:$0xff]
    %v3973 = vld [vmem:[#allocation13 + $0x74] sm:$0xf]
    %v3974 = vld [vmem:[#allocation13 + $0x78] sm:$0xff]
    %v3975 = vld [vmem:[#allocation13 + $0x80] sm:$0xf]
    %v3976 = vld [vmem:[#allocation13 + $0x84] sm:$0xff]
    %v3977 = vld [vmem:[#allocation13 + $0x8c] sm:$0xf]
    %v3978 = vld [vmem:[#allocation13 + $0x90] sm:$0xff]
    %v3979 = vld [vmem:[#allocation13 + $0x98] sm:$0xf]
    %v3980 = vld [vmem:[#allocation13 + $0x9c] sm:$0xff]
    %v3981 = vld [vmem:[#allocation13 + $0xa4] sm:$0xf]
    %v3982 = vld [vmem:[#allocation13 + $0xa8] sm:$0xff]
    %v3983 = vld [vmem:[#allocation13 + $0xb0] sm:$0xf]
    %v3984 = vld [vmem:[#allocation13 + $0xb4] sm:$0xff]
    %v3985 = vld [vmem:[#allocation13 + $0xbc] sm:$0xf]
    %v4018 = vunpack.c.l.b16 %v3954
    %v4019 = vunpack.c.h.b16 %v3954
    %v4020 = vunpack.c.l.b16 %v3955
    %v4021 = vunpack.c.l.b16 %v3956
    %v4022 = vunpack.c.h.b16 %v3956
    %v4023 = vunpack.c.l.b16 %v3957
    %v4024 = vunpack.c.l.b16 %v3958
    %v4025 = vunpack.c.h.b16 %v3958
    %v4026 = vunpack.c.l.b16 %v3959
    %v4027 = vunpack.c.l.b16 %v3960
    %v4028 = vunpack.c.h.b16 %v3960
    %v4029 = vunpack.c.l.b16 %v3961
    %v4030 = vunpack.c.l.b16 %v3962
    %v4031 = vunpack.c.h.b16 %v3962
    %v4032 = vunpack.c.l.b16 %v3963
    %v4033 = vunpack.c.l.b16 %v3964
    %v4034 = vunpack.c.h.b16 %v3964
    %v4035 = vunpack.c.l.b16 %v3965
    %v4036 = vunpack.c.l.b16 %v3966
    %v4037 = vunpack.c.h.b16 %v3966
    %v4038 = vunpack.c.l.b16 %v3967
    %v4039 = vunpack.c.l.b16 %v3968
    %v4040 = vunpack.c.h.b16 %v3968
    %v4041 = vunpack.c.l.b16 %v3969
    %v4042 = vunpack.c.l.b16 %v3970
    %v4043 = vunpack.c.h.b16 %v3970
    %v4044 = vunpack.c.l.b16 %v3971
    %v4045 = vunpack.c.l.b16 %v3972
    %v4046 = vunpack.c.h.b16 %v3972
    %v4047 = vunpack.c.l.b16 %v3973
    %v4048 = vunpack.c.l.b16 %v3974
    %v4049 = vunpack.c.h.b16 %v3974
    %v4050 = vunpack.c.l.b16 %v3975
    %v4051 = vunpack.c.l.b16 %v3976
    %v4052 = vunpack.c.h.b16 %v3976
    %v4053 = vunpack.c.l.b16 %v3977
    %v4054 = vunpack.c.l.b16 %v3978
    %v4055 = vunpack.c.h.b16 %v3978
    %v4056 = vunpack.c.l.b16 %v3979
    %v4057 = vunpack.c.l.b16 %v3980
    %v4058 = vunpack.c.h.b16 %v3980
    %v4059 = vunpack.c.l.b16 %v3981
    %v4060 = vunpack.c.l.b16 %v3982
    %v4061 = vunpack.c.h.b16 %v3982
    %v4062 = vunpack.c.l.b16 %v3983
    %v4063 = vunpack.c.l.b16 %v3984
    %v4064 = vunpack.c.h.b16 %v3984
    %v4065 = vunpack.c.l.b16 %v3985
    %v4066 = vpack.c.b16 %v4021, %v4018
    %v4067 = vpack.c.b16 %v4022, %v4019
    %v4068 = vpack.c.b16 %v4023, %v4020
    %v4069 = vpack.c.b16 %v4027, %v4024
    %v4070 = vpack.c.b16 %v4028, %v4025
    %v4071 = vpack.c.b16 %v4029, %v4026
    %v4072 = vpack.c.b16 %v4033, %v4030
    %v4073 = vpack.c.b16 %v4034, %v4031
    %v4074 = vpack.c.b16 %v4035, %v4032
    %v4075 = vpack.c.b16 %v4039, %v4036
    %v4076 = vpack.c.b16 %v4040, %v4037
    %v4077 = vpack.c.b16 %v4041, %v4038
    %v4078 = vpack.c.b16 %v4045, %v4042
    %v4079 = vpack.c.b16 %v4046, %v4043
    %v4080 = vpack.c.b16 %v4047, %v4044
    %v4081 = vpack.c.b16 %v4051, %v4048
    %v4082 = vpack.c.b16 %v4052, %v4049
    %v4083 = vpack.c.b16 %v4053, %v4050
    %v4084 = vpack.c.b16 %v4057, %v4054
    %v4085 = vpack.c.b16 %v4058, %v4055
    %v4086 = vpack.c.b16 %v4059, %v4056
    %v4087 = vpack.c.b16 %v4063, %v4060
    %v4088 = vpack.c.b16 %v4064, %v4061
    %v4089 = vpack.c.b16 %v4065, %v4062
    %4114 = vmatprep.subr.bf16.mxu0 %v4088
    %4115 = vmatpush1.bf16.msra.mxu0 %v4087
    %4116 = vmatprep.subr.bf16.mxu0 %v4085
    %4117 = vmatpush1.bf16.msra.mxu0 %v4084
    %4118 = vmatprep.subr.bf16.mxu0 %v4082
    %4119 = vmatpush1.bf16.msra.mxu0 %v4081
    %4120 = vmatprep.subr.bf16.mxu0 %v4079
    %4121 = vmatpush1.bf16.msra.mxu0 %v4078
    %4122 = vmatprep.subr.bf16.mxu0 %v4076
    %4123 = vmatpush1.bf16.msra.mxu0 %v4075
    %4124 = vmatprep.subr.bf16.mxu0 %v4073
    %4125 = vmatpush1.bf16.msra.mxu0 %v4072
    %4126 = vmatprep.subr.bf16.mxu0 %v4070
    %4127 = vmatpush1.bf16.msra.mxu0 %v4069
    %4128 = vmatprep.subr.bf16.mxu0 %v4067
    %4129 = vmatpush1.bf16.msra.mxu0 %v4066
    %4130 = vmatprep.subr.bf16.mxu0 0
    %4131 = vmatpush2.bf16.msra.mxu0 0
    %4132 = vmatprep.subr.bf16.mxu0 0
    %4133 = vmatpush2.bf16.msra.mxu0 0
    %4134 = vmatprep.subr.bf16.mxu0 0
    %4135 = vmatpush2.bf16.msra.mxu0 0
    %4136 = vmatprep.subr.bf16.mxu0 0
    %4137 = vmatpush2.bf16.msra.mxu0 0
    %4138 = vmatprep.subr.bf16.mxu0 0
    %4139 = vmatpush2.bf16.msra.mxu0 0
    %4140 = vmatprep.subr.bf16.mxu0 0
    %4141 = vmatpush2.bf16.msra.mxu0 0
    %4142 = vmatprep.subr.bf16.mxu0 0
    %4143 = vmatpush2.bf16.msra.mxu0 0
    %4144 = vmatprep.subr.bf16.mxu0 0
    %4145 = vmatpush2.bf16.msra.mxu0 0
    %4146 = vmatprep.mubr.bf16.mxu0 0
    %4147 = vmatmul.mubr.bf16.gmra.mxu0 %v3953
    %v4148 = vpop.f32.mrf.mxu0
    %v4149 = vadd.f32 0.0, %v4148
    %v4150 = vpop.f32.mrf.mxu0
    %v4151 = vadd.f32 0.0, %v4150
    %v4152 = vpop.f32.mrf.mxu0
    %v4153 = vpop.f32.mrf.mxu0
    %4154 = vdwg.mxu0
    %4155 = vmatprep.subr.bf16.mxu0 0
    %4156 = vmatpush1.bf16.msra.mxu0 %v4089
    %4157 = vmatprep.subr.bf16.mxu0 0
    %4158 = vmatpush1.bf16.msra.mxu0 %v4086
    %4159 = vmatprep.subr.bf16.mxu0 0
    %4160 = vmatpush1.bf16.msra.mxu0 %v4083
    %4161 = vmatprep.subr.bf16.mxu0 0
    %4162 = vmatpush1.bf16.msra.mxu0 %v4080
    %4163 = vmatprep.subr.bf16.mxu0 0
    %4164 = vmatpush1.bf16.msra.mxu0 %v4077
    %4165 = vmatprep.subr.bf16.mxu0 0
    %4166 = vmatpush1.bf16.msra.mxu0 %v4074
    %4167 = vmatprep.subr.bf16.mxu0 0
    %4168 = vmatpush1.bf16.msra.mxu0 %v4071
    %4169 = vmatprep.subr.bf16.mxu0 0
    %4170 = vmatpush1.bf16.msra.mxu0 %v4068
    %4171 = vmatprep.subr.bf16.mxu0 0
    %4172 = vmatpush2.bf16.msra.mxu0 0
    %4173 = vmatprep.subr.bf16.mxu0 0
    %4174 = vmatpush2.bf16.msra.mxu0 0
    %4175 = vmatprep.subr.bf16.mxu0 0
    %4176 = vmatpush2.bf16.msra.mxu0 0
    %4177 = vmatprep.subr.bf16.mxu0 0
    %4178 = vmatpush2.bf16.msra.mxu0 0
    %4179 = vmatprep.subr.bf16.mxu0 0
    %4180 = vmatpush2.bf16.msra.mxu0 0
    %4181 = vmatprep.subr.bf16.mxu0 0
    %4182 = vmatpush2.bf16.msra.mxu0 0
    %4183 = vmatprep.subr.bf16.mxu0 0
    %4184 = vmatpush2.bf16.msra.mxu0 0
    %4185 = vmatprep.subr.bf16.mxu0 0
    %4186 = vmatpush2.bf16.msra.mxu0 0
    %4187 = vmatprep.mubr.bf16.mxu0 0
    %4188 = vmatmul.mubr.bf16.gmra.mxu0 %v3953
    %v4189 = vpop.f32.mrf.mxu0
    %v4190 = vadd.f32 0.0, %v4189
    %v4191 = vpop.f32.mrf.mxu0
    %v4192 = vpop.f32.mrf.mxu0
    %v4193 = vpop.f32.mrf.mxu0
    %4194 = vdwg.mxu0
    %v4195 = vld [vmem:[%s1671] sm:$0xff]
    %v4196 = vld [vmem:[%s1671 + $0x8] sm:$0xff]
    %v4197 = vld [vmem:[%s1671 + $0x10] sm:$0xff]
    %v4198 = vadd.f32 %v4195, %v4149
    %v4199 = vxor.u32 %v4198, 2147483648
    %v4200 = vmul.f32 %v4199, 1.442695
    %v4201 = vpow.pop %v4200
    %v4202 = vadd.f32 %v4201, 1.0
    %v4203 = vrcp.pop %v4202
    %v4204 = vmul.f32 1.0, %v4203
    %v4205 = vadd.f32 %v4196, %v4151
    %v4206 = vxor.u32 %v4205, 2147483648
    %v4207 = vmul.f32 %v4206, 1.442695
    %v4208 = vpow.pop %v4207
    %v4209 = vadd.f32 %v4208, 1.0
    %v4210 = vrcp.pop %v4209
    %v4211 = vmul.f32 1.0, %v4210
    %v4212 = vadd.f32 %v4190, %v2882
    %v4213 = vmul.f32 %v4204, %v4212
    %v4214 = vadd.f32 %v4197, %v4213
    %v4215 = vtanh.pop %v4214
    %v4216 = vsub.f32 %v3950, %v4215
    %v4217 = vmul.f32 %v4211, %v4216
    %v4218 = vadd.f32 %v4215, %v4217
    %s4219 = scalar_lea.vmem [#allocation15], 32
    %4220 = vst [vmem:[%s4219] sm:$0xff] %v4218
    %v4221 = vpack.c.bf16 %v4218, %v4218
    %v4222 = vld [vmem:[#allocation13] sm:$0xff]
    %v4223 = vld [vmem:[#allocation13 + $0x8] sm:$0xf]
    %v4224 = vld [vmem:[#allocation13 + $0xc] sm:$0xff]
    %v4225 = vld [vmem:[#allocation13 + $0x14] sm:$0xf]
    %v4226 = vld [vmem:[#allocation13 + $0x18] sm:$0xff]
    %v4227 = vld [vmem:[#allocation13 + $0x20] sm:$0xf]
    %v4228 = vld [vmem:[#allocation13 + $0x24] sm:$0xff]
    %v4229 = vld [vmem:[#allocation13 + $0x2c] sm:$0xf]
    %v4230 = vld [vmem:[#allocation13 + $0x30] sm:$0xff]
    %v4231 = vld [vmem:[#allocation13 + $0x38] sm:$0xf]
    %v4232 = vld [vmem:[#allocation13 + $0x3c] sm:$0xff]
    %v4233 = vld [vmem:[#allocation13 + $0x44] sm:$0xf]
    %v4234 = vld [vmem:[#allocation13 + $0x48] sm:$0xff]
    %v4235 = vld [vmem:[#allocation13 + $0x50] sm:$0xf]
    %v4236 = vld [vmem:[#allocation13 + $0x54] sm:$0xff]
    %v4237 = vld [vmem:[#allocation13 + $0x5c] sm:$0xf]
    %v4238 = vld [vmem:[#allocation13 + $0x60] sm:$0xff]
    %v4239 = vld [vmem:[#allocation13 + $0x68] sm:$0xf]
    %v4240 = vld [vmem:[#allocation13 + $0x6c] sm:$0xff]
    %v4241 = vld [vmem:[#allocation13 + $0x74] sm:$0xf]
    %v4242 = vld [vmem:[#allocation13 + $0x78] sm:$0xff]
    %v4243 = vld [vmem:[#allocation13 + $0x80] sm:$0xf]
    %v4244 = vld [vmem:[#allocation13 + $0x84] sm:$0xff]
    %v4245 = vld [vmem:[#allocation13 + $0x8c] sm:$0xf]
    %v4246 = vld [vmem:[#allocation13 + $0x90] sm:$0xff]
    %v4247 = vld [vmem:[#allocation13 + $0x98] sm:$0xf]
    %v4248 = vld [vmem:[#allocation13 + $0x9c] sm:$0xff]
    %v4249 = vld [vmem:[#allocation13 + $0xa4] sm:$0xf]
    %v4250 = vld [vmem:[#allocation13 + $0xa8] sm:$0xff]
    %v4251 = vld [vmem:[#allocation13 + $0xb0] sm:$0xf]
    %v4252 = vld [vmem:[#allocation13 + $0xb4] sm:$0xff]
    %v4253 = vld [vmem:[#allocation13 + $0xbc] sm:$0xf]
    %v4286 = vunpack.c.l.b16 %v4222
    %v4287 = vunpack.c.h.b16 %v4222
    %v4288 = vunpack.c.l.b16 %v4223
    %v4289 = vunpack.c.l.b16 %v4224
    %v4290 = vunpack.c.h.b16 %v4224
    %v4291 = vunpack.c.l.b16 %v4225
    %v4292 = vunpack.c.l.b16 %v4226
    %v4293 = vunpack.c.h.b16 %v4226
    %v4294 = vunpack.c.l.b16 %v4227
    %v4295 = vunpack.c.l.b16 %v4228
    %v4296 = vunpack.c.h.b16 %v4228
    %v4297 = vunpack.c.l.b16 %v4229
    %v4298 = vunpack.c.l.b16 %v4230
    %v4299 = vunpack.c.h.b16 %v4230
    %v4300 = vunpack.c.l.b16 %v4231
    %v4301 = vunpack.c.l.b16 %v4232
    %v4302 = vunpack.c.h.b16 %v4232
    %v4303 = vunpack.c.l.b16 %v4233
    %v4304 = vunpack.c.l.b16 %v4234
    %v4305 = vunpack.c.h.b16 %v4234
    %v4306 = vunpack.c.l.b16 %v4235
    %v4307 = vunpack.c.l.b16 %v4236
    %v4308 = vunpack.c.h.b16 %v4236
    %v4309 = vunpack.c.l.b16 %v4237
    %v4310 = vunpack.c.l.b16 %v4238
    %v4311 = vunpack.c.h.b16 %v4238
    %v4312 = vunpack.c.l.b16 %v4239
    %v4313 = vunpack.c.l.b16 %v4240
    %v4314 = vunpack.c.h.b16 %v4240
    %v4315 = vunpack.c.l.b16 %v4241
    %v4316 = vunpack.c.l.b16 %v4242
    %v4317 = vunpack.c.h.b16 %v4242
    %v4318 = vunpack.c.l.b16 %v4243
    %v4319 = vunpack.c.l.b16 %v4244
    %v4320 = vunpack.c.h.b16 %v4244
    %v4321 = vunpack.c.l.b16 %v4245
    %v4322 = vunpack.c.l.b16 %v4246
    %v4323 = vunpack.c.h.b16 %v4246
    %v4324 = vunpack.c.l.b16 %v4247
    %v4325 = vunpack.c.l.b16 %v4248
    %v4326 = vunpack.c.h.b16 %v4248
    %v4327 = vunpack.c.l.b16 %v4249
    %v4328 = vunpack.c.l.b16 %v4250
    %v4329 = vunpack.c.h.b16 %v4250
    %v4330 = vunpack.c.l.b16 %v4251
    %v4331 = vunpack.c.l.b16 %v4252
    %v4332 = vunpack.c.h.b16 %v4252
    %v4333 = vunpack.c.l.b16 %v4253
    %v4334 = vpack.c.b16 %v4289, %v4286
    %v4335 = vpack.c.b16 %v4290, %v4287
    %v4336 = vpack.c.b16 %v4291, %v4288
    %v4337 = vpack.c.b16 %v4295, %v4292
    %v4338 = vpack.c.b16 %v4296, %v4293
    %v4339 = vpack.c.b16 %v4297, %v4294
    %v4340 = vpack.c.b16 %v4301, %v4298
    %v4341 = vpack.c.b16 %v4302, %v4299
    %v4342 = vpack.c.b16 %v4303, %v4300
    %v4343 = vpack.c.b16 %v4307, %v4304
    %v4344 = vpack.c.b16 %v4308, %v4305
    %v4345 = vpack.c.b16 %v4309, %v4306
    %v4346 = vpack.c.b16 %v4313, %v4310
    %v4347 = vpack.c.b16 %v4314, %v4311
    %v4348 = vpack.c.b16 %v4315, %v4312
    %v4349 = vpack.c.b16 %v4319, %v4316
    %v4350 = vpack.c.b16 %v4320, %v4317
    %v4351 = vpack.c.b16 %v4321, %v4318
    %v4352 = vpack.c.b16 %v4325, %v4322
    %v4353 = vpack.c.b16 %v4326, %v4323
    %v4354 = vpack.c.b16 %v4327, %v4324
    %v4355 = vpack.c.b16 %v4331, %v4328
    %v4356 = vpack.c.b16 %v4332, %v4329
    %v4357 = vpack.c.b16 %v4333, %v4330
    %4382 = vmatprep.subr.bf16.mxu0 %v4356
    %4383 = vmatpush1.bf16.msra.mxu0 %v4355
    %4384 = vmatprep.subr.bf16.mxu0 %v4353
    %4385 = vmatpush1.bf16.msra.mxu0 %v4352
    %4386 = vmatprep.subr.bf16.mxu0 %v4350
    %4387 = vmatpush1.bf16.msra.mxu0 %v4349
    %4388 = vmatprep.subr.bf16.mxu0 %v4347
    %4389 = vmatpush1.bf16.msra.mxu0 %v4346
    %4390 = vmatprep.subr.bf16.mxu0 %v4344
    %4391 = vmatpush1.bf16.msra.mxu0 %v4343
    %4392 = vmatprep.subr.bf16.mxu0 %v4341
    %4393 = vmatpush1.bf16.msra.mxu0 %v4340
    %4394 = vmatprep.subr.bf16.mxu0 %v4338
    %4395 = vmatpush1.bf16.msra.mxu0 %v4337
    %4396 = vmatprep.subr.bf16.mxu0 %v4335
    %4397 = vmatpush1.bf16.msra.mxu0 %v4334
    %4398 = vmatprep.subr.bf16.mxu0 0
    %4399 = vmatpush2.bf16.msra.mxu0 0
    %4400 = vmatprep.subr.bf16.mxu0 0
    %4401 = vmatpush2.bf16.msra.mxu0 0
    %4402 = vmatprep.subr.bf16.mxu0 0
    %4403 = vmatpush2.bf16.msra.mxu0 0
    %4404 = vmatprep.subr.bf16.mxu0 0
    %4405 = vmatpush2.bf16.msra.mxu0 0
    %4406 = vmatprep.subr.bf16.mxu0 0
    %4407 = vmatpush2.bf16.msra.mxu0 0
    %4408 = vmatprep.subr.bf16.mxu0 0
    %4409 = vmatpush2.bf16.msra.mxu0 0
    %4410 = vmatprep.subr.bf16.mxu0 0
    %4411 = vmatpush2.bf16.msra.mxu0 0
    %4412 = vmatprep.subr.bf16.mxu0 0
    %4413 = vmatpush2.bf16.msra.mxu0 0
    %4414 = vmatprep.mubr.bf16.mxu0 0
    %4415 = vmatmul.mubr.bf16.gmra.mxu0 %v4221
    %v4416 = vpop.f32.mrf.mxu0
    %v4417 = vadd.f32 0.0, %v4416
    %v4418 = vpop.f32.mrf.mxu0
    %v4419 = vadd.f32 0.0, %v4418
    %v4420 = vpop.f32.mrf.mxu0
    %v4421 = vpop.f32.mrf.mxu0
    %4422 = vdwg.mxu0
    %4423 = vmatprep.subr.bf16.mxu0 0
    %4424 = vmatpush1.bf16.msra.mxu0 %v4357
    %4425 = vmatprep.subr.bf16.mxu0 0
    %4426 = vmatpush1.bf16.msra.mxu0 %v4354
    %4427 = vmatprep.subr.bf16.mxu0 0
    %4428 = vmatpush1.bf16.msra.mxu0 %v4351
    %4429 = vmatprep.subr.bf16.mxu0 0
    %4430 = vmatpush1.bf16.msra.mxu0 %v4348
    %4431 = vmatprep.subr.bf16.mxu0 0
    %4432 = vmatpush1.bf16.msra.mxu0 %v4345
    %4433 = vmatprep.subr.bf16.mxu0 0
    %4434 = vmatpush1.bf16.msra.mxu0 %v4342
    %4435 = vmatprep.subr.bf16.mxu0 0
    %4436 = vmatpush1.bf16.msra.mxu0 %v4339
    %4437 = vmatprep.subr.bf16.mxu0 0
    %4438 = vmatpush1.bf16.msra.mxu0 %v4336
    %4439 = vmatprep.subr.bf16.mxu0 0
    %4440 = vmatpush2.bf16.msra.mxu0 0
    %4441 = vmatprep.subr.bf16.mxu0 0
    %4442 = vmatpush2.bf16.msra.mxu0 0
    %4443 = vmatprep.subr.bf16.mxu0 0
    %4444 = vmatpush2.bf16.msra.mxu0 0
    %4445 = vmatprep.subr.bf16.mxu0 0
    %4446 = vmatpush2.bf16.msra.mxu0 0
    %4447 = vmatprep.subr.bf16.mxu0 0
    %4448 = vmatpush2.bf16.msra.mxu0 0
    %4449 = vmatprep.subr.bf16.mxu0 0
    %4450 = vmatpush2.bf16.msra.mxu0 0
    %4451 = vmatprep.subr.bf16.mxu0 0
    %4452 = vmatpush2.bf16.msra.mxu0 0
    %4453 = vmatprep.subr.bf16.mxu0 0
    %4454 = vmatpush2.bf16.msra.mxu0 0
    %4455 = vmatprep.mubr.bf16.mxu0 0
    %4456 = vmatmul.mubr.bf16.gmra.mxu0 %v4221
    %v4457 = vpop.f32.mrf.mxu0
    %v4458 = vadd.f32 0.0, %v4457
    %v4459 = vpop.f32.mrf.mxu0
    %v4460 = vpop.f32.mrf.mxu0
    %v4461 = vpop.f32.mrf.mxu0
    %4462 = vdwg.mxu0
    %v4463 = vld [vmem:[%s1940] sm:$0xff]
    %v4464 = vld [vmem:[%s1940 + $0x8] sm:$0xff]
    %v4465 = vld [vmem:[%s1940 + $0x10] sm:$0xff]
    %v4466 = vadd.f32 %v4463, %v4417
    %v4467 = vxor.u32 %v4466, 2147483648
    %v4468 = vmul.f32 %v4467, 1.442695
    %v4469 = vpow.pop %v4468
    %v4470 = vadd.f32 %v4469, 1.0
    %v4471 = vrcp.pop %v4470
    %v4472 = vmul.f32 1.0, %v4471
    %v4473 = vadd.f32 %v4464, %v4419
    %v4474 = vxor.u32 %v4473, 2147483648
    %v4475 = vmul.f32 %v4474, 1.442695
    %v4476 = vpow.pop %v4475
    %v4477 = vadd.f32 %v4476, 1.0
    %v4478 = vrcp.pop %v4477
    %v4479 = vmul.f32 1.0, %v4478
    %v4480 = vadd.f32 %v4458, %v2882
    %v4481 = vmul.f32 %v4472, %v4480
    %v4482 = vadd.f32 %v4465, %v4481
    %v4483 = vtanh.pop %v4482
    %v4484 = vsub.f32 %v4218, %v4483
    %v4485 = vmul.f32 %v4479, %v4484
    %v4486 = vadd.f32 %v4483, %v4485
    %s4487 = scalar_lea.vmem [#allocation15], 40
    %4488 = vst [vmem:[%s4487] sm:$0xff] %v4486
    %v4489 = vpack.c.bf16 %v4486, %v4486
    %v4490 = vld [vmem:[#allocation13] sm:$0xff]
    %v4491 = vld [vmem:[#allocation13 + $0x8] sm:$0xf]
    %v4492 = vld [vmem:[#allocation13 + $0xc] sm:$0xff]
    %v4493 = vld [vmem:[#allocation13 + $0x14] sm:$0xf]
    %v4494 = vld [vmem:[#allocation13 + $0x18] sm:$0xff]
    %v4495 = vld [vmem:[#allocation13 + $0x20] sm:$0xf]
    %v4496 = vld [vmem:[#allocation13 + $0x24] sm:$0xff]
    %v4497 = vld [vmem:[#allocation13 + $0x2c] sm:$0xf]
    %v4498 = vld [vmem:[#allocation13 + $0x30] sm:$0xff]
    %v4499 = vld [vmem:[#allocation13 + $0x38] sm:$0xf]
    %v4500 = vld [vmem:[#allocation13 + $0x3c] sm:$0xff]
    %v4501 = vld [vmem:[#allocation13 + $0x44] sm:$0xf]
    %v4502 = vld [vmem:[#allocation13 + $0x48] sm:$0xff]
    %v4503 = vld [vmem:[#allocation13 + $0x50] sm:$0xf]
    %v4504 = vld [vmem:[#allocation13 + $0x54] sm:$0xff]
    %v4505 = vld [vmem:[#allocation13 + $0x5c] sm:$0xf]
    %v4506 = vld [vmem:[#allocation13 + $0x60] sm:$0xff]
    %v4507 = vld [vmem:[#allocation13 + $0x68] sm:$0xf]
    %v4508 = vld [vmem:[#allocation13 + $0x6c] sm:$0xff]
    %v4509 = vld [vmem:[#allocation13 + $0x74] sm:$0xf]
    %v4510 = vld [vmem:[#allocation13 + $0x78] sm:$0xff]
    %v4511 = vld [vmem:[#allocation13 + $0x80] sm:$0xf]
    %v4512 = vld [vmem:[#allocation13 + $0x84] sm:$0xff]
    %v4513 = vld [vmem:[#allocation13 + $0x8c] sm:$0xf]
    %v4514 = vld [vmem:[#allocation13 + $0x90] sm:$0xff]
    %v4515 = vld [vmem:[#allocation13 + $0x98] sm:$0xf]
    %v4516 = vld [vmem:[#allocation13 + $0x9c] sm:$0xff]
    %v4517 = vld [vmem:[#allocation13 + $0xa4] sm:$0xf]
    %v4518 = vld [vmem:[#allocation13 + $0xa8] sm:$0xff]
    %v4519 = vld [vmem:[#allocation13 + $0xb0] sm:$0xf]
    %v4520 = vld [vmem:[#allocation13 + $0xb4] sm:$0xff]
    %v4521 = vld [vmem:[#allocation13 + $0xbc] sm:$0xf]
    %v4554 = vunpack.c.l.b16 %v4490
    %v4555 = vunpack.c.h.b16 %v4490
    %v4556 = vunpack.c.l.b16 %v4491
    %v4557 = vunpack.c.l.b16 %v4492
    %v4558 = vunpack.c.h.b16 %v4492
    %v4559 = vunpack.c.l.b16 %v4493
    %v4560 = vunpack.c.l.b16 %v4494
    %v4561 = vunpack.c.h.b16 %v4494
    %v4562 = vunpack.c.l.b16 %v4495
    %v4563 = vunpack.c.l.b16 %v4496
    %v4564 = vunpack.c.h.b16 %v4496
    %v4565 = vunpack.c.l.b16 %v4497
    %v4566 = vunpack.c.l.b16 %v4498
    %v4567 = vunpack.c.h.b16 %v4498
    %v4568 = vunpack.c.l.b16 %v4499
    %v4569 = vunpack.c.l.b16 %v4500
    %v4570 = vunpack.c.h.b16 %v4500
    %v4571 = vunpack.c.l.b16 %v4501
    %v4572 = vunpack.c.l.b16 %v4502
    %v4573 = vunpack.c.h.b16 %v4502
    %v4574 = vunpack.c.l.b16 %v4503
    %v4575 = vunpack.c.l.b16 %v4504
    %v4576 = vunpack.c.h.b16 %v4504
    %v4577 = vunpack.c.l.b16 %v4505
    %v4578 = vunpack.c.l.b16 %v4506
    %v4579 = vunpack.c.h.b16 %v4506
    %v4580 = vunpack.c.l.b16 %v4507
    %v4581 = vunpack.c.l.b16 %v4508
    %v4582 = vunpack.c.h.b16 %v4508
    %v4583 = vunpack.c.l.b16 %v4509
    %v4584 = vunpack.c.l.b16 %v4510
    %v4585 = vunpack.c.h.b16 %v4510
    %v4586 = vunpack.c.l.b16 %v4511
    %v4587 = vunpack.c.l.b16 %v4512
    %v4588 = vunpack.c.h.b16 %v4512
    %v4589 = vunpack.c.l.b16 %v4513
    %v4590 = vunpack.c.l.b16 %v4514
    %v4591 = vunpack.c.h.b16 %v4514
    %v4592 = vunpack.c.l.b16 %v4515
    %v4593 = vunpack.c.l.b16 %v4516
    %v4594 = vunpack.c.h.b16 %v4516
    %v4595 = vunpack.c.l.b16 %v4517
    %v4596 = vunpack.c.l.b16 %v4518
    %v4597 = vunpack.c.h.b16 %v4518
    %v4598 = vunpack.c.l.b16 %v4519
    %v4599 = vunpack.c.l.b16 %v4520
    %v4600 = vunpack.c.h.b16 %v4520
    %v4601 = vunpack.c.l.b16 %v4521
    %v4602 = vpack.c.b16 %v4557, %v4554
    %v4603 = vpack.c.b16 %v4558, %v4555
    %v4604 = vpack.c.b16 %v4559, %v4556
    %v4605 = vpack.c.b16 %v4563, %v4560
    %v4606 = vpack.c.b16 %v4564, %v4561
    %v4607 = vpack.c.b16 %v4565, %v4562
    %v4608 = vpack.c.b16 %v4569, %v4566
    %v4609 = vpack.c.b16 %v4570, %v4567
    %v4610 = vpack.c.b16 %v4571, %v4568
    %v4611 = vpack.c.b16 %v4575, %v4572
    %v4612 = vpack.c.b16 %v4576, %v4573
    %v4613 = vpack.c.b16 %v4577, %v4574
    %v4614 = vpack.c.b16 %v4581, %v4578
    %v4615 = vpack.c.b16 %v4582, %v4579
    %v4616 = vpack.c.b16 %v4583, %v4580
    %v4617 = vpack.c.b16 %v4587, %v4584
    %v4618 = vpack.c.b16 %v4588, %v4585
    %v4619 = vpack.c.b16 %v4589, %v4586
    %v4620 = vpack.c.b16 %v4593, %v4590
    %v4621 = vpack.c.b16 %v4594, %v4591
    %v4622 = vpack.c.b16 %v4595, %v4592
    %v4623 = vpack.c.b16 %v4599, %v4596
    %v4624 = vpack.c.b16 %v4600, %v4597
    %v4625 = vpack.c.b16 %v4601, %v4598
    %4650 = vmatprep.subr.bf16.mxu0 %v4624
    %4651 = vmatpush1.bf16.msra.mxu0 %v4623
    %4652 = vmatprep.subr.bf16.mxu0 %v4621
    %4653 = vmatpush1.bf16.msra.mxu0 %v4620
    %4654 = vmatprep.subr.bf16.mxu0 %v4618
    %4655 = vmatpush1.bf16.msra.mxu0 %v4617
    %4656 = vmatprep.subr.bf16.mxu0 %v4615
    %4657 = vmatpush1.bf16.msra.mxu0 %v4614
    %4658 = vmatprep.subr.bf16.mxu0 %v4612
    %4659 = vmatpush1.bf16.msra.mxu0 %v4611
    %4660 = vmatprep.subr.bf16.mxu0 %v4609
    %4661 = vmatpush1.bf16.msra.mxu0 %v4608
    %4662 = vmatprep.subr.bf16.mxu0 %v4606
    %4663 = vmatpush1.bf16.msra.mxu0 %v4605
    %4664 = vmatprep.subr.bf16.mxu0 %v4603
    %4665 = vmatpush1.bf16.msra.mxu0 %v4602
    %4666 = vmatprep.subr.bf16.mxu0 0
    %4667 = vmatpush2.bf16.msra.mxu0 0
    %4668 = vmatprep.subr.bf16.mxu0 0
    %4669 = vmatpush2.bf16.msra.mxu0 0
    %4670 = vmatprep.subr.bf16.mxu0 0
    %4671 = vmatpush2.bf16.msra.mxu0 0
    %4672 = vmatprep.subr.bf16.mxu0 0
    %4673 = vmatpush2.bf16.msra.mxu0 0
    %4674 = vmatprep.subr.bf16.mxu0 0
    %4675 = vmatpush2.bf16.msra.mxu0 0
    %4676 = vmatprep.subr.bf16.mxu0 0
    %4677 = vmatpush2.bf16.msra.mxu0 0
    %4678 = vmatprep.subr.bf16.mxu0 0
    %4679 = vmatpush2.bf16.msra.mxu0 0
    %4680 = vmatprep.subr.bf16.mxu0 0
    %4681 = vmatpush2.bf16.msra.mxu0 0
    %4682 = vmatprep.mubr.bf16.mxu0 0
    %4683 = vmatmul.mubr.bf16.gmra.mxu0 %v4489
    %v4684 = vpop.f32.mrf.mxu0
    %v4685 = vadd.f32 0.0, %v4684
    %v4686 = vpop.f32.mrf.mxu0
    %v4687 = vadd.f32 0.0, %v4686
    %v4688 = vpop.f32.mrf.mxu0
    %v4689 = vpop.f32.mrf.mxu0
    %4690 = vdwg.mxu0
    %4691 = vmatprep.subr.bf16.mxu0 0
    %4692 = vmatpush1.bf16.msra.mxu0 %v4625
    %4693 = vmatprep.subr.bf16.mxu0 0
    %4694 = vmatpush1.bf16.msra.mxu0 %v4622
    %4695 = vmatprep.subr.bf16.mxu0 0
    %4696 = vmatpush1.bf16.msra.mxu0 %v4619
    %4697 = vmatprep.subr.bf16.mxu0 0
    %4698 = vmatpush1.bf16.msra.mxu0 %v4616
    %4699 = vmatprep.subr.bf16.mxu0 0
    %4700 = vmatpush1.bf16.msra.mxu0 %v4613
    %4701 = vmatprep.subr.bf16.mxu0 0
    %4702 = vmatpush1.bf16.msra.mxu0 %v4610
    %4703 = vmatprep.subr.bf16.mxu0 0
    %4704 = vmatpush1.bf16.msra.mxu0 %v4607
    %4705 = vmatprep.subr.bf16.mxu0 0
    %4706 = vmatpush1.bf16.msra.mxu0 %v4604
    %4707 = vmatprep.subr.bf16.mxu0 0
    %4708 = vmatpush2.bf16.msra.mxu0 0
    %4709 = vmatprep.subr.bf16.mxu0 0
    %4710 = vmatpush2.bf16.msra.mxu0 0
    %4711 = vmatprep.subr.bf16.mxu0 0
    %4712 = vmatpush2.bf16.msra.mxu0 0
    %4713 = vmatprep.subr.bf16.mxu0 0
    %4714 = vmatpush2.bf16.msra.mxu0 0
    %4715 = vmatprep.subr.bf16.mxu0 0
    %4716 = vmatpush2.bf16.msra.mxu0 0
    %4717 = vmatprep.subr.bf16.mxu0 0
    %4718 = vmatpush2.bf16.msra.mxu0 0
    %4719 = vmatprep.subr.bf16.mxu0 0
    %4720 = vmatpush2.bf16.msra.mxu0 0
    %4721 = vmatprep.subr.bf16.mxu0 0
    %4722 = vmatpush2.bf16.msra.mxu0 0
    %4723 = vmatprep.mubr.bf16.mxu0 0
    %4724 = vmatmul.mubr.bf16.gmra.mxu0 %v4489
    %v4725 = vpop.f32.mrf.mxu0
    %v4726 = vadd.f32 0.0, %v4725
    %v4727 = vpop.f32.mrf.mxu0
    %v4728 = vpop.f32.mrf.mxu0
    %v4729 = vpop.f32.mrf.mxu0
    %4730 = vdwg.mxu0
    %v4731 = vld [vmem:[%s2209] sm:$0xff]
    %v4732 = vld [vmem:[%s2209 + $0x8] sm:$0xff]
    %v4733 = vld [vmem:[%s2209 + $0x10] sm:$0xff]
    %v4734 = vadd.f32 %v4731, %v4685
    %v4735 = vxor.u32 %v4734, 2147483648
    %v4736 = vmul.f32 %v4735, 1.442695
    %v4737 = vpow.pop %v4736
    %v4738 = vadd.f32 %v4737, 1.0
    %v4739 = vrcp.pop %v4738
    %v4740 = vmul.f32 1.0, %v4739
    %v4741 = vadd.f32 %v4732, %v4687
    %v4742 = vxor.u32 %v4741, 2147483648
    %v4743 = vmul.f32 %v4742, 1.442695
    %v4744 = vpow.pop %v4743
    %v4745 = vadd.f32 %v4744, 1.0
    %v4746 = vrcp.pop %v4745
    %v4747 = vmul.f32 1.0, %v4746
    %v4748 = vadd.f32 %v4726, %v2882
    %v4749 = vmul.f32 %v4740, %v4748
    %v4750 = vadd.f32 %v4733, %v4749
    %v4751 = vtanh.pop %v4750
    %v4752 = vsub.f32 %v4486, %v4751
    %v4753 = vmul.f32 %v4747, %v4752
    %v4754 = vadd.f32 %v4751, %v4753
    %s4755 = scalar_lea.vmem [#allocation15], 48
    %4756 = vst [vmem:[%s4755] sm:$0xff] %v4754
    %v4757 = vpack.c.bf16 %v4754, %v4754
    %v4758 = vld [vmem:[#allocation13] sm:$0xff]
    %v4759 = vld [vmem:[#allocation13 + $0x8] sm:$0xf]
    %v4760 = vld [vmem:[#allocation13 + $0xc] sm:$0xff]
    %v4761 = vld [vmem:[#allocation13 + $0x14] sm:$0xf]
    %v4762 = vld [vmem:[#allocation13 + $0x18] sm:$0xff]
    %v4763 = vld [vmem:[#allocation13 + $0x20] sm:$0xf]
    %v4764 = vld [vmem:[#allocation13 + $0x24] sm:$0xff]
    %v4765 = vld [vmem:[#allocation13 + $0x2c] sm:$0xf]
    %v4766 = vld [vmem:[#allocation13 + $0x30] sm:$0xff]
    %v4767 = vld [vmem:[#allocation13 + $0x38] sm:$0xf]
    %v4768 = vld [vmem:[#allocation13 + $0x3c] sm:$0xff]
    %v4769 = vld [vmem:[#allocation13 + $0x44] sm:$0xf]
    %v4770 = vld [vmem:[#allocation13 + $0x48] sm:$0xff]
    %v4771 = vld [vmem:[#allocation13 + $0x50] sm:$0xf]
    %v4772 = vld [vmem:[#allocation13 + $0x54] sm:$0xff]
    %v4773 = vld [vmem:[#allocation13 + $0x5c] sm:$0xf]
    %v4774 = vld [vmem:[#allocation13 + $0x60] sm:$0xff]
    %v4775 = vld [vmem:[#allocation13 + $0x68] sm:$0xf]
    %v4776 = vld [vmem:[#allocation13 + $0x6c] sm:$0xff]
    %v4777 = vld [vmem:[#allocation13 + $0x74] sm:$0xf]
    %v4778 = vld [vmem:[#allocation13 + $0x78] sm:$0xff]
    %v4779 = vld [vmem:[#allocation13 + $0x80] sm:$0xf]
    %v4780 = vld [vmem:[#allocation13 + $0x84] sm:$0xff]
    %v4781 = vld [vmem:[#allocation13 + $0x8c] sm:$0xf]
    %v4782 = vld [vmem:[#allocation13 + $0x90] sm:$0xff]
    %v4783 = vld [vmem:[#allocation13 + $0x98] sm:$0xf]
    %v4784 = vld [vmem:[#allocation13 + $0x9c] sm:$0xff]
    %v4785 = vld [vmem:[#allocation13 + $0xa4] sm:$0xf]
    %v4786 = vld [vmem:[#allocation13 + $0xa8] sm:$0xff]
    %v4787 = vld [vmem:[#allocation13 + $0xb0] sm:$0xf]
    %v4788 = vld [vmem:[#allocation13 + $0xb4] sm:$0xff]
    %v4789 = vld [vmem:[#allocation13 + $0xbc] sm:$0xf]
    %v4822 = vunpack.c.l.b16 %v4758
    %v4823 = vunpack.c.h.b16 %v4758
    %v4824 = vunpack.c.l.b16 %v4759
    %v4825 = vunpack.c.l.b16 %v4760
    %v4826 = vunpack.c.h.b16 %v4760
    %v4827 = vunpack.c.l.b16 %v4761
    %v4828 = vunpack.c.l.b16 %v4762
    %v4829 = vunpack.c.h.b16 %v4762
    %v4830 = vunpack.c.l.b16 %v4763
    %v4831 = vunpack.c.l.b16 %v4764
    %v4832 = vunpack.c.h.b16 %v4764
    %v4833 = vunpack.c.l.b16 %v4765
    %v4834 = vunpack.c.l.b16 %v4766
    %v4835 = vunpack.c.h.b16 %v4766
    %v4836 = vunpack.c.l.b16 %v4767
    %v4837 = vunpack.c.l.b16 %v4768
    %v4838 = vunpack.c.h.b16 %v4768
    %v4839 = vunpack.c.l.b16 %v4769
    %v4840 = vunpack.c.l.b16 %v4770
    %v4841 = vunpack.c.h.b16 %v4770
    %v4842 = vunpack.c.l.b16 %v4771
    %v4843 = vunpack.c.l.b16 %v4772
    %v4844 = vunpack.c.h.b16 %v4772
    %v4845 = vunpack.c.l.b16 %v4773
    %v4846 = vunpack.c.l.b16 %v4774
    %v4847 = vunpack.c.h.b16 %v4774
    %v4848 = vunpack.c.l.b16 %v4775
    %v4849 = vunpack.c.l.b16 %v4776
    %v4850 = vunpack.c.h.b16 %v4776
    %v4851 = vunpack.c.l.b16 %v4777
    %v4852 = vunpack.c.l.b16 %v4778
    %v4853 = vunpack.c.h.b16 %v4778
    %v4854 = vunpack.c.l.b16 %v4779
    %v4855 = vunpack.c.l.b16 %v4780
    %v4856 = vunpack.c.h.b16 %v4780
    %v4857 = vunpack.c.l.b16 %v4781
    %v4858 = vunpack.c.l.b16 %v4782
    %v4859 = vunpack.c.h.b16 %v4782
    %v4860 = vunpack.c.l.b16 %v4783
    %v4861 = vunpack.c.l.b16 %v4784
    %v4862 = vunpack.c.h.b16 %v4784
    %v4863 = vunpack.c.l.b16 %v4785
    %v4864 = vunpack.c.l.b16 %v4786
    %v4865 = vunpack.c.h.b16 %v4786
    %v4866 = vunpack.c.l.b16 %v4787
    %v4867 = vunpack.c.l.b16 %v4788
    %v4868 = vunpack.c.h.b16 %v4788
    %v4869 = vunpack.c.l.b16 %v4789
    %v4870 = vpack.c.b16 %v4825, %v4822
    %v4871 = vpack.c.b16 %v4826, %v4823
    %v4872 = vpack.c.b16 %v4827, %v4824
    %v4873 = vpack.c.b16 %v4831, %v4828
    %v4874 = vpack.c.b16 %v4832, %v4829
    %v4875 = vpack.c.b16 %v4833, %v4830
    %v4876 = vpack.c.b16 %v4837, %v4834
    %v4877 = vpack.c.b16 %v4838, %v4835
    %v4878 = vpack.c.b16 %v4839, %v4836
    %v4879 = vpack.c.b16 %v4843, %v4840
    %v4880 = vpack.c.b16 %v4844, %v4841
    %v4881 = vpack.c.b16 %v4845, %v4842
    %v4882 = vpack.c.b16 %v4849, %v4846
    %v4883 = vpack.c.b16 %v4850, %v4847
    %v4884 = vpack.c.b16 %v4851, %v4848
    %v4885 = vpack.c.b16 %v4855, %v4852
    %v4886 = vpack.c.b16 %v4856, %v4853
    %v4887 = vpack.c.b16 %v4857, %v4854
    %v4888 = vpack.c.b16 %v4861, %v4858
    %v4889 = vpack.c.b16 %v4862, %v4859
    %v4890 = vpack.c.b16 %v4863, %v4860
    %v4891 = vpack.c.b16 %v4867, %v4864
    %v4892 = vpack.c.b16 %v4868, %v4865
    %v4893 = vpack.c.b16 %v4869, %v4866
    %4918 = vmatprep.subr.bf16.mxu0 %v4892
    %4919 = vmatpush1.bf16.msra.mxu0 %v4891
    %4920 = vmatprep.subr.bf16.mxu0 %v4889
    %4921 = vmatpush1.bf16.msra.mxu0 %v4888
    %4922 = vmatprep.subr.bf16.mxu0 %v4886
    %4923 = vmatpush1.bf16.msra.mxu0 %v4885
    %4924 = vmatprep.subr.bf16.mxu0 %v4883
    %4925 = vmatpush1.bf16.msra.mxu0 %v4882
    %4926 = vmatprep.subr.bf16.mxu0 %v4880
    %4927 = vmatpush1.bf16.msra.mxu0 %v4879
    %4928 = vmatprep.subr.bf16.mxu0 %v4877
    %4929 = vmatpush1.bf16.msra.mxu0 %v4876
    %4930 = vmatprep.subr.bf16.mxu0 %v4874
    %4931 = vmatpush1.bf16.msra.mxu0 %v4873
    %4932 = vmatprep.subr.bf16.mxu0 %v4871
    %4933 = vmatpush1.bf16.msra.mxu0 %v4870
    %4934 = vmatprep.subr.bf16.mxu0 0
    %4935 = vmatpush2.bf16.msra.mxu0 0
    %4936 = vmatprep.subr.bf16.mxu0 0
    %4937 = vmatpush2.bf16.msra.mxu0 0
    %4938 = vmatprep.subr.bf16.mxu0 0
    %4939 = vmatpush2.bf16.msra.mxu0 0
    %4940 = vmatprep.subr.bf16.mxu0 0
    %4941 = vmatpush2.bf16.msra.mxu0 0
    %4942 = vmatprep.subr.bf16.mxu0 0
    %4943 = vmatpush2.bf16.msra.mxu0 0
    %4944 = vmatprep.subr.bf16.mxu0 0
    %4945 = vmatpush2.bf16.msra.mxu0 0
    %4946 = vmatprep.subr.bf16.mxu0 0
    %4947 = vmatpush2.bf16.msra.mxu0 0
    %4948 = vmatprep.subr.bf16.mxu0 0
    %4949 = vmatpush2.bf16.msra.mxu0 0
    %4950 = vmatprep.mubr.bf16.mxu0 0
    %4951 = vmatmul.mubr.bf16.gmra.mxu0 %v4757
    %v4952 = vpop.f32.mrf.mxu0
    %v4953 = vadd.f32 0.0, %v4952
    %v4954 = vpop.f32.mrf.mxu0
    %v4955 = vadd.f32 0.0, %v4954
    %v4956 = vpop.f32.mrf.mxu0
    %v4957 = vpop.f32.mrf.mxu0
    %4958 = vdwg.mxu0
    %4959 = vmatprep.subr.bf16.mxu0 0
    %4960 = vmatpush1.bf16.msra.mxu0 %v4893
    %4961 = vmatprep.subr.bf16.mxu0 0
    %4962 = vmatpush1.bf16.msra.mxu0 %v4890
    %4963 = vmatprep.subr.bf16.mxu0 0
    %4964 = vmatpush1.bf16.msra.mxu0 %v4887
    %4965 = vmatprep.subr.bf16.mxu0 0
    %4966 = vmatpush1.bf16.msra.mxu0 %v4884
    %4967 = vmatprep.subr.bf16.mxu0 0
    %4968 = vmatpush1.bf16.msra.mxu0 %v4881
    %4969 = vmatprep.subr.bf16.mxu0 0
    %4970 = vmatpush1.bf16.msra.mxu0 %v4878
    %4971 = vmatprep.subr.bf16.mxu0 0
    %4972 = vmatpush1.bf16.msra.mxu0 %v4875
    %4973 = vmatprep.subr.bf16.mxu0 0
    %4974 = vmatpush1.bf16.msra.mxu0 %v4872
    %4975 = vmatprep.subr.bf16.mxu0 0
    %4976 = vmatpush2.bf16.msra.mxu0 0
    %4977 = vmatprep.subr.bf16.mxu0 0
    %4978 = vmatpush2.bf16.msra.mxu0 0
    %4979 = vmatprep.subr.bf16.mxu0 0
    %4980 = vmatpush2.bf16.msra.mxu0 0
    %4981 = vmatprep.subr.bf16.mxu0 0
    %4982 = vmatpush2.bf16.msra.mxu0 0
    %4983 = vmatprep.subr.bf16.mxu0 0
    %4984 = vmatpush2.bf16.msra.mxu0 0
    %4985 = vmatprep.subr.bf16.mxu0 0
    %4986 = vmatpush2.bf16.msra.mxu0 0
    %4987 = vmatprep.subr.bf16.mxu0 0
    %4988 = vmatpush2.bf16.msra.mxu0 0
    %4989 = vmatprep.subr.bf16.mxu0 0
    %4990 = vmatpush2.bf16.msra.mxu0 0
    %4991 = vmatprep.mubr.bf16.mxu0 0
    %4992 = vmatmul.mubr.bf16.gmra.mxu0 %v4757
    %v4993 = vpop.f32.mrf.mxu0
    %v4994 = vadd.f32 0.0, %v4993
    %v4995 = vpop.f32.mrf.mxu0
    %v4996 = vpop.f32.mrf.mxu0
    %v4997 = vpop.f32.mrf.mxu0
    %4998 = vdwg.mxu0
    %v4999 = vld [vmem:[%s2478] sm:$0xff]
    %v5000 = vld [vmem:[%s2478 + $0x8] sm:$0xff]
    %v5001 = vld [vmem:[%s2478 + $0x10] sm:$0xff]
    %v5002 = vadd.f32 %v4999, %v4953
    %v5003 = vxor.u32 %v5002, 2147483648
    %v5004 = vmul.f32 %v5003, 1.442695
    %v5005 = vpow.pop %v5004
    %v5006 = vadd.f32 %v5005, 1.0
    %v5007 = vrcp.pop %v5006
    %v5008 = vmul.f32 1.0, %v5007
    %v5009 = vadd.f32 %v5000, %v4955
    %v5010 = vxor.u32 %v5009, 2147483648
    %v5011 = vmul.f32 %v5010, 1.442695
    %v5012 = vpow.pop %v5011
    %v5013 = vadd.f32 %v5012, 1.0
    %v5014 = vrcp.pop %v5013
    %v5015 = vmul.f32 1.0, %v5014
    %v5016 = vadd.f32 %v4994, %v2882
    %v5017 = vmul.f32 %v5008, %v5016
    %v5018 = vadd.f32 %v5001, %v5017
    %v5019 = vtanh.pop %v5018
    %v5020 = vsub.f32 %v4754, %v5019
    %v5021 = vmul.f32 %v5015, %v5020
    %v5022 = vadd.f32 %v5019, %v5021
    %s5023 = scalar_lea.vmem [#allocation15], 56
    %5024 = vst [vmem:[%s5023] sm:$0xff] %v5022
    %s5025 = scalar_lea.vmem [#allocation16], 8
    %5026 = vst [vmem:[%s5025] sm:$0xff] %v5022
    // Predicated region
    $region54: #{tpu_custom_call.1} parent=1 // pred_check
      _
    $region55: #{tpu_custom_call.1} parent=1 // pred_check_branch
      %5028 = sbr.rel (0) target = $region57
    $region56: #{tpu_custom_call.1} parent=1 // pred_region
      %s5030 = ssub.s32 1024, 1024
      %5031 = vsyncadd [#allocation6], %s5030
      %s5032 = sshll.u32 [#allocation15], 4
      %s5033 = int_to_ptr.vmem [resolvable:$true] %s5032
      %5038 = dma.vmem_to_hbm [thread:$0]  %s5033, 1024, %s7, [#allocation6], 128, 128, 8
    $region57: #{tpu_custom_call.1} parent=1 // pred_fallthru
      _
    // Predicated region
    $region58: #{tpu_custom_call.1} parent=1 // pred_check
      _
    $region59: #{tpu_custom_call.1} parent=1 // pred_check_branch
      %5040 = sbr.rel (0) target = $region61
    $region60: #{tpu_custom_call.1} parent=1 // pred_region
      %s5042 = ssub.s32 256, 256
      %5043 = vsyncadd [#allocation17], %s5042
      %s5044 = sshll.u32 [#allocation16], 4
      %s5045 = int_to_ptr.vmem [resolvable:$true] %s5044
      %5050 = dma.vmem_to_hbm [thread:$0]  %s5045, 256, %s8, [#allocation17], 128, 128, 8
    $region61: #{tpu_custom_call.1} parent=1 // pred_fallthru
      _
    // Predicated region
    $region62: #{tpu_custom_call.1} parent=1 // pred_check
      _
    $region63: #{tpu_custom_call.1} parent=1 // pred_check_branch
      %5052 = sbr.rel (0) target = $region65
    $region64: #{tpu_custom_call.1} parent=1 // pred_region
      %5053 = dma.done [#allocation6], 1024
    $region65: #{tpu_custom_call.1} parent=1 // pred_fallthru
      _
    // Predicated region
    $region66: #{tpu_custom_call.1} parent=1 // pred_check
      _
    $region67: #{tpu_custom_call.1} parent=1 // pred_check_branch
      %5055 = sbr.rel (0) target = $region69
    $region68: #{tpu_custom_call.1} parent=1 // pred_region
      %5056 = dma.done [#allocation17], 256
    $region69: #{tpu_custom_call.1} parent=1 // pred_fallthru
      _
    %5057 = vsyncpa [#allocation5], 1
    %5058 = vsyncpa [#allocation8], 1
    %5059 = vsyncpa [#allocation11], 1
    %5060 = vsyncpa [#allocation14], 1
    %5061 = vsyncpa [#allocation6], 1
    %5062 = vsyncpa [#allocation17], 1

</llo_original>
